<compile_context>
chip_gen: v7x
topology: tpu7x:2x2x1
jax: 0.10.0
libtpu: 0.0.40
codegen_flags: <defaults>
</compile_context>

<pallas_src>
import jax
import jax.numpy as jnp
from jax.experimental import pallas as pl
from jax.experimental.pallas import tpu as pltpu

# ------------------------- module hyper-parameters -------------------------
B = 2          # batch
C_IN = 7       # nn.Conv2d(in_c=7, ...)
C_OUT = 3
K = 3          # kernel_size=3, padding=1
H = W = 16     # input spatial
SCALE = 8      # Upsample(scale_factor=8, bilinear, align_corners=True)
H_OUT, W_OUT = H * SCALE, W * SCALE      # 128, 128
N_TAPS = C_IN * K * K + 1                # 63 conv taps + 1 "ones" tap for the bias = 64


# --------------------------- fused Pallas kernel ---------------------------
def _prenet_kernel(p_ref, uwb_ref, comb_ref, out_ref):
    """Single invocation (grid=(1,)), all operands fully resident in VMEM.

    p_ref    : [N_TAPS*H, B*W]        = [1024, 32]   bf16  im2col patches (+ ones row for bias),
                                                      row index (tap*H + hi), col index (b*W + wi)
    uwb_ref  : [B*W, B*W_OUT]         = [32, 256]    bf16  kron(I_B, U_w^T)  (W-upsample, batch in lanes)
    comb_ref : [C_OUT*H_OUT, N_TAPS*H] = [384, 1024] bf16  kron(w_aug, U_h)  (conv+bias fused with H-upsample)
    out_ref  : [C_OUT*H_OUT, B*W_OUT] = [384, 256]   f32   row (c*H_OUT + ho), col (b*W_OUT + wo)
    """
    # 1) bilinear upsample along W first -> every later operand is 256 lanes wide (lane-dense).
    pw = jnp.dot(p_ref[...], uwb_ref[...], preferred_element_type=jnp.float32)      # [1024, 256]
    # 2) fused conv(+bias) + bilinear upsample along H in one MXU matmul.
    out_ref[...] = jnp.dot(comb_ref[...], pw.astype(jnp.bfloat16),
                           preferred_element_type=jnp.float32)                       # [384, 256]


def _prenet_pallas(patches2d, uwb, comb):
    rows_out = comb.shape[0]                  # C_OUT * H_OUT = 384
    lanes_out = uwb.shape[1]                  # B * W_OUT = 256
    kdim = patches2d.shape[0]                 # N_TAPS * H = 1024

    flops = 2 * kdim * patches2d.shape[1] * lanes_out + 2 * rows_out * kdim * lanes_out
    bytes_accessed = (patches2d.size * 2 + uwb.size * 2 + comb.size * 2
                      + rows_out * lanes_out * 4)

    return pl.pallas_call(
        _prenet_kernel,
        out_shape=jax.ShapeDtypeStruct((rows_out, lanes_out), jnp.float32),
        grid_spec=pltpu.PrefetchScalarGridSpec(
            num_scalar_prefetch=0,
            grid=(1,),                                       # single step: no per-step overhead
            in_specs=[
                pl.BlockSpec(patches2d.shape, lambda i: (0, 0)),
                pl.BlockSpec(uwb.shape, lambda i: (0, 0)),
                pl.BlockSpec(comb.shape, lambda i: (0, 0)),
            ],
            out_specs=pl.BlockSpec((rows_out, lanes_out), lambda i: (0, 0)),
        ),
        compiler_params=pltpu.CompilerParams(
            dimension_semantics=("arbitrary",),
            vmem_limit_bytes=32 * 1024 * 1024,               # working set ~3 MiB; not VMEM-bound
        ),
        cost_estimate=pl.CostEstimate(
            flops=flops, transcendentals=0, bytes_accessed=bytes_accessed),
    )(patches2d, uwb, comb)


# ------------------------------ helpers -------------------------------------
def _bilinear_matrix(n_in, n_out):
    """U[o, i]: align_corners=True bilinear interpolation weights (out = U @ in)."""
    o = jnp.arange(n_out, dtype=jnp.float32)
    s = o * (n_in - 1) / (n_out - 1)
    i0 = jnp.clip(jnp.floor(s).astype(jnp.int32), 0, n_in - 2)
    frac = s - i0.astype(jnp.float32)
    left = jax.nn.one_hot(i0, n_in, dtype=jnp.float32) * (1.0 - frac)[:, None]
    right = jax.nn.one_hot(i0 + 1, n_in, dtype=jnp.float32) * frac[:, None]
    return left + right                              # [n_out, n_in]


# ------------------------- init-time constant prep ---------------------------
def prenet_prepare(params, h=H, w=W, batch=B):
    """Hoisted weight prep: runs once at init, not per forward call."""
    h_out, w_out = SCALE * h, SCALE * w
    # bias folded into the im2col weight as an extra "ones" tap.
    w_aug = jnp.concatenate(
        [params["w"].reshape(C_OUT, C_IN * K * K), params["b"][:, None]], axis=1)   # [3, 64]
    u_h = _bilinear_matrix(h, h_out)                                                 # [128, 16]
    u_w = _bilinear_matrix(w, w_out)                                                 # [128, 16]
    # conv(+bias) fused with the H-upsample:  comb = kron(w_aug, U_h)  [384, 1024]
    comb = jnp.kron(w_aug, u_h)
    # W-upsample with the batch folded into lanes: kron(I_B, U_w^T)  [B*16, B*128]
    uwb = jnp.kron(jnp.eye(batch, dtype=jnp.float32), u_w.T)
    return {"comb": comb.astype(jnp.bfloat16), "uwb": uwb.astype(jnp.bfloat16)}


# ------------------------------ forward --------------------------------------
def prenet_forward(prep, x):
    """x: [B, C_IN, H, W] (NCHW, matching PyTorch). Returns out_pre: [B, C_OUT, 8H, 8W]."""
    b, c_in, h, w = x.shape
    h_out, w_out = SCALE * h, SCALE * w

    # ---- im2col (3x3, pad=1) via cheap XLA pads/slices; tap order matches OIHW weight flatten ----
    # TODO(synk): for large H*W move tap construction in-kernel (DMA x directly + slices/pltpu.roll)
    # to drop this small HBM round trip; at these shapes the glue is negligible.
    xp = jnp.pad(x, ((0, 0), (0, 0), (1, 1), (1, 1)))
    taps = [xp[:, :, dy:dy + h, dx:dx + w] for dy in range(K) for dx in range(K)]
    patches = jnp.stack(taps, axis=2).reshape(b, c_in * K * K, h, w)                 # [B, 63, H, W]
    patches = jnp.concatenate(
        [patches, jnp.ones((b, 1, h, w), patches.dtype)], axis=1)                    # [B, 64, H, W]
    # lane-dense 2-D layout: rows (tap*H + hi), cols (b*W + wi)  -> [1024, B*16]
    patches2d = jnp.transpose(patches, (1, 2, 0, 3)).reshape(
        N_TAPS * h, b * w).astype(jnp.bfloat16)

    out2d = _prenet_pallas(patches2d, prep["uwb"], prep["comb"])                     # [384, B*128] f32
    # rows (c*H_OUT + ho), cols (b*W_OUT + wo)  ->  [B, C_OUT, H_OUT, W_OUT]
    return jnp.transpose(out2d.reshape(C_OUT, h_out, b, w_out), (2, 0, 1, 3))


# ------------------------------ pure-JAX reference ----------------------------
def prenet_reference(params, x):
    y = jax.lax.conv_general_dilated(
        x, params["w"], window_strides=(1, 1), padding=((1, 1), (1, 1)),
        dimension_numbers=("NCHW", "OIHW", "NCHW")) + params["b"][None, :, None, None]
    b_, c_, h_, w_ = y.shape
    ho, wo = h_ * SCALE, w_ * SCALE
    sy = jnp.arange(ho, dtype=jnp.float32) * (h_ - 1) / (ho - 1)
    sx = jnp.arange(wo, dtype=jnp.float32) * (w_ - 1) / (wo - 1)
    y0 = jnp.clip(jnp.floor(sy).astype(jnp.int32), 0, h_ - 2)
    x0 = jnp.clip(jnp.floor(sx).astype(jnp.int32), 0, w_ - 2)
    fy = (sy - y0.astype(jnp.float32))[None, None, :, None]
    fx = (sx - x0.astype(jnp.float32))[None, None, None, :]
    top = y[:, :, y0, :] * (1.0 - fy) + y[:, :, y0 + 1, :] * fy
    return top[:, :, :, x0] * (1.0 - fx) + top[:, :, :, x0 + 1] * fx


# ------------------------------------ main ------------------------------------
if __name__ == "__main__":
    key = jax.random.PRNGKey(0)
    kw, kb, kx = jax.random.split(key, 3)
    params = {
        "w": 0.1 * jax.random.normal(kw, (C_OUT, C_IN, K, K), jnp.float32),
        "b": 0.1 * jax.random.normal(kb, (C_OUT,), jnp.float32),
    }
    x = jax.random.normal(kx, (B, C_IN, H, W), jnp.float32)

    prep = prenet_prepare(params)                 # init-time constant prep (hoisted out of forward)
    out = jax.jit(prenet_forward)(prep, x)
    jax.block_until_ready(out)

    assert out.shape == (B, C_OUT, H_OUT, W_OUT)

    ref = prenet_reference(params, x)
    err = float(jnp.max(jnp.abs(out - ref)))
    assert err < 1e-1, f"max abs err {err} (bf16 MXU operands, f32 accumulate)"
    print("KERNEL_OK")
</pallas_src>

<mosaic_0001>
module attributes {stable_mosaic.version = 11 : i64} {
  func.func @_prenet_kernel(%arg0: i32, %arg1: memref<1024x32xbf16, #tpu.memory_space<vmem>>, %arg2: memref<32x256xbf16, #tpu.memory_space<vmem>>, %arg3: memref<384x1024xbf16, #tpu.memory_space<vmem>>, %arg4: memref<384x256xf32, #tpu.memory_space<vmem>>) attributes {dimension_semantics = [#tpu.dimension_semantics<arbitrary>], iteration_bounds = array<i64: 1>, scalar_prefetch = 0 : i64, scratch_operands = 0 : i64, tpu.core_type = #tpu.core_type<tc>, window_params = [{pipeline_mode = #tpu.pipeline_mode<synchronous>, transform_indices = @transform_0, window_bounds = array<i64: 1024, 32>}, {pipeline_mode = #tpu.pipeline_mode<synchronous>, transform_indices = @transform_1, window_bounds = array<i64: 32, 256>}, {pipeline_mode = #tpu.pipeline_mode<synchronous>, transform_indices = @transform_2, window_bounds = array<i64: 384, 1024>}, {pipeline_mode = #tpu.pipeline_mode<synchronous>, transform_indices = @transform_3, window_bounds = array<i64: 384, 256>}]} {
    %c0 = arith.constant 0 : index
    %c0_0 = arith.constant 0 : index
    %0 = vector.load %arg1[%c0, %c0_0] : memref<1024x32xbf16, #tpu.memory_space<vmem>>, vector<1024x32xbf16>
    %c0_1 = arith.constant 0 : index
    %c0_2 = arith.constant 0 : index
    %1 = vector.load %arg2[%c0_1, %c0_2] : memref<32x256xbf16, #tpu.memory_space<vmem>>, vector<32x256xbf16>
    %cst = arith.constant dense<0.000000e+00> : vector<1024x256xf32>
    %2 = tpu.matmul %0, %1, %cst {dimension_numbers = #tpu.dot_dimension_numbers<[1], [0], [0], [1], [0, 0, 1, 1], [], []>} : vector<1024x32xbf16>, vector<32x256xbf16>, vector<1024x256xf32> -> vector<1024x256xf32>
    %c0_3 = arith.constant 0 : index
    %c0_4 = arith.constant 0 : index
    %3 = vector.load %arg3[%c0_3, %c0_4] : memref<384x1024xbf16, #tpu.memory_space<vmem>>, vector<384x1024xbf16>
    %4 = arith.truncf %2 : vector<1024x256xf32> to vector<1024x256xbf16>
    %cst_5 = arith.constant dense<0.000000e+00> : vector<384x256xf32>
    %5 = tpu.matmul %3, %4, %cst_5 {dimension_numbers = #tpu.dot_dimension_numbers<[1], [0], [0], [1], [0, 0, 1, 1], [], []>} : vector<384x1024xbf16>, vector<1024x256xbf16>, vector<384x256xf32> -> vector<384x256xf32>
    %c0_6 = arith.constant 0 : index
    %c0_7 = arith.constant 0 : index
    %6 = vector.load %arg4[%c0_6, %c0_7] : memref<384x256xf32, #tpu.memory_space<vmem>>, vector<384x256xf32>
    tpu.vector_store %arg4[%c0_6, %c0_7], %5 {strides = array<i32>} : memref<384x256xf32, #tpu.memory_space<vmem>>, vector<384x256xf32>,
    return
  }
  func.func @transform_0(%arg0: i32) -> (i32, i32) {
    %c0_i32 = arith.constant 0 : i32
    %c0_i32_0 = arith.constant 0 : i32
    %c0_i32_1 = arith.constant 0 : i32
    return %c0_i32, %c0_i32_0 : i32, i32
  }
  func.func @transform_1(%arg0: i32) -> (i32, i32) {
    %c0_i32 = arith.constant 0 : i32
    %c0_i32_0 = arith.constant 0 : i32
    %c0_i32_1 = arith.constant 0 : i32
    return %c0_i32, %c0_i32_0 : i32, i32
  }
  func.func @transform_2(%arg0: i32) -> (i32, i32) {
    %c0_i32 = arith.constant 0 : i32
    %c0_i32_0 = arith.constant 0 : i32
    %c0_i32_1 = arith.constant 0 : i32
    return %c0_i32, %c0_i32_0 : i32, i32
  }
  func.func @transform_3(%arg0: i32) -> (i32, i32) {
    %c0_i32 = arith.constant 0 : i32
    %c0_i32_0 = arith.constant 0 : i32
    %c0_i32_1 = arith.constant 0 : i32
    return %c0_i32, %c0_i32_0 : i32, i32
  }
}

</mosaic_0001>

<llo_original>
// kernel: prenet_forward.1
$region0: #{prenet_forward.1}
  #allocation0 [shape = 'u32[]', space=smem, size = 0x4, offset = 0x4, fixed_abs, tag = 'smem constant byte address 0x4 - core index']
  #allocation1 [shape = 'u32[144,128]{1,0:T(1,128)}', space=vmem, size = 0x12000, scoped, tag = 'internal scratch']
  %s0 = inlined_call_operand.vmem [shape: bf16[1024,32], index: 0, kind: input, shape index: {}]
  %s1 = inlined_call_operand.vmem [shape: bf16[32,256], index: 1, kind: input, shape index: {}]
  %s2 = inlined_call_operand.vmem [shape: bf16[384,1024], index: 2, kind: input, shape index: {}]
  %s3 = inlined_call_operand.vmem [shape: f32[384,256], index: 3, kind: output, shape index: {}]
  %s4 = sld [smem:[#allocation0]]
  $region22: #{prenet_forward.1} parent=0
    _
  %s6 = ssub.s32 1, %s4
  %s7 = scalar_select 0, %s6, %s4
  // Predicated region
  $region2: #{prenet_forward.1} parent=0 // pred_check
    _
  $region3: #{prenet_forward.1} parent=0 // pred_check_branch
    %9 = sbr.rel (0) target = $region5
  $region4: #{prenet_forward.1} parent=0 // pred_region
    _
  $region5: #{prenet_forward.1} parent=0 // pred_fallthru
    _
  // Predicated region
  $region6: #{prenet_forward.1} parent=0 // pred_check
    _
  $region7: #{prenet_forward.1} parent=0 // pred_check_branch
    %11 = sbr.rel (0) target = $region9
  $region8: #{prenet_forward.1} parent=0 // pred_region
    _
  $region9: #{prenet_forward.1} parent=0 // pred_fallthru
    _
  // Predicated region
  $region10: #{prenet_forward.1} parent=0 // pred_check
    _
  $region11: #{prenet_forward.1} parent=0 // pred_check_branch
    %13 = sbr.rel (0) target = $region13
  $region12: #{prenet_forward.1} parent=0 // pred_region
    _
  $region13: #{prenet_forward.1} parent=0 // pred_fallthru
    _
  %v15 = vld [vmem:[%s0] sm:$0xf]
  %v16 = vld [vmem:[%s0 + $0x4] sm:$0xf]
  %v17 = vld [vmem:[%s0 + $0x8] sm:$0xf]
  %v18 = vld [vmem:[%s0 + $0xc] sm:$0xf]
  %v19 = vld [vmem:[%s0 + $0x10] sm:$0xf]
  %v20 = vld [vmem:[%s0 + $0x14] sm:$0xf]
  %v21 = vld [vmem:[%s0 + $0x18] sm:$0xf]
  %v22 = vld [vmem:[%s0 + $0x1c] sm:$0xf]
  %v23 = vld [vmem:[%s0 + $0x20] sm:$0xf]
  %v24 = vld [vmem:[%s0 + $0x24] sm:$0xf]
  %v25 = vld [vmem:[%s0 + $0x28] sm:$0xf]
  %v26 = vld [vmem:[%s0 + $0x2c] sm:$0xf]
  %v27 = vld [vmem:[%s0 + $0x30] sm:$0xf]
  %v28 = vld [vmem:[%s0 + $0x34] sm:$0xf]
  %v29 = vld [vmem:[%s0 + $0x38] sm:$0xf]
  %v30 = vld [vmem:[%s0 + $0x3c] sm:$0xf]
  %v31 = vld [vmem:[%s0 + $0x40] sm:$0xf]
  %v32 = vld [vmem:[%s0 + $0x44] sm:$0xf]
  %v33 = vld [vmem:[%s0 + $0x48] sm:$0xf]
  %v34 = vld [vmem:[%s0 + $0x4c] sm:$0xf]
  %v35 = vld [vmem:[%s0 + $0x50] sm:$0xf]
  %v36 = vld [vmem:[%s0 + $0x54] sm:$0xf]
  %v37 = vld [vmem:[%s0 + $0x58] sm:$0xf]
  %v38 = vld [vmem:[%s0 + $0x5c] sm:$0xf]
  %v39 = vld [vmem:[%s0 + $0x60] sm:$0xf]
  %v40 = vld [vmem:[%s0 + $0x64] sm:$0xf]
  %v41 = vld [vmem:[%s0 + $0x68] sm:$0xf]
  %v42 = vld [vmem:[%s0 + $0x6c] sm:$0xf]
  %v43 = vld [vmem:[%s0 + $0x70] sm:$0xf]
  %v44 = vld [vmem:[%s0 + $0x74] sm:$0xf]
  %v45 = vld [vmem:[%s0 + $0x78] sm:$0xf]
  %v46 = vld [vmem:[%s0 + $0x7c] sm:$0xf]
  %v47 = vld [vmem:[%s0 + $0x80] sm:$0xf]
  %v48 = vld [vmem:[%s0 + $0x84] sm:$0xf]
  %v49 = vld [vmem:[%s0 + $0x88] sm:$0xf]
  %v50 = vld [vmem:[%s0 + $0x8c] sm:$0xf]
  %v51 = vld [vmem:[%s0 + $0x90] sm:$0xf]
  %v52 = vld [vmem:[%s0 + $0x94] sm:$0xf]
  %v53 = vld [vmem:[%s0 + $0x98] sm:$0xf]
  %v54 = vld [vmem:[%s0 + $0x9c] sm:$0xf]
  %v55 = vld [vmem:[%s0 + $0xa0] sm:$0xf]
  %v56 = vld [vmem:[%s0 + $0xa4] sm:$0xf]
  %v57 = vld [vmem:[%s0 + $0xa8] sm:$0xf]
  %v58 = vld [vmem:[%s0 + $0xac] sm:$0xf]
  %v59 = vld [vmem:[%s0 + $0xb0] sm:$0xf]
  %v60 = vld [vmem:[%s0 + $0xb4] sm:$0xf]
  %v61 = vld [vmem:[%s0 + $0xb8] sm:$0xf]
  %v62 = vld [vmem:[%s0 + $0xbc] sm:$0xf]
  %v63 = vld [vmem:[%s0 + $0xc0] sm:$0xf]
  %v64 = vld [vmem:[%s0 + $0xc4] sm:$0xf]
  %v65 = vld [vmem:[%s0 + $0xc8] sm:$0xf]
  %v66 = vld [vmem:[%s0 + $0xcc] sm:$0xf]
  %v67 = vld [vmem:[%s0 + $0xd0] sm:$0xf]
  %v68 = vld [vmem:[%s0 + $0xd4] sm:$0xf]
  %v69 = vld [vmem:[%s0 + $0xd8] sm:$0xf]
  %v70 = vld [vmem:[%s0 + $0xdc] sm:$0xf]
  %v71 = vld [vmem:[%s0 + $0xe0] sm:$0xf]
  %v72 = vld [vmem:[%s0 + $0xe4] sm:$0xf]
  %v73 = vld [vmem:[%s0 + $0xe8] sm:$0xf]
  %v74 = vld [vmem:[%s0 + $0xec] sm:$0xf]
  %v75 = vld [vmem:[%s0 + $0xf0] sm:$0xf]
  %v76 = vld [vmem:[%s0 + $0xf4] sm:$0xf]
  %v77 = vld [vmem:[%s0 + $0xf8] sm:$0xf]
  %v78 = vld [vmem:[%s0 + $0xfc] sm:$0xf]
  %v79 = vld [vmem:[%s0 + $0x100] sm:$0xf]
  %v80 = vld [vmem:[%s0 + $0x104] sm:$0xf]
  %v81 = vld [vmem:[%s0 + $0x108] sm:$0xf]
  %v82 = vld [vmem:[%s0 + $0x10c] sm:$0xf]
  %v83 = vld [vmem:[%s0 + $0x110] sm:$0xf]
  %v84 = vld [vmem:[%s0 + $0x114] sm:$0xf]
  %v85 = vld [vmem:[%s0 + $0x118] sm:$0xf]
  %v86 = vld [vmem:[%s0 + $0x11c] sm:$0xf]
  %v87 = vld [vmem:[%s0 + $0x120] sm:$0xf]
  %v88 = vld [vmem:[%s0 + $0x124] sm:$0xf]
  %v89 = vld [vmem:[%s0 + $0x128] sm:$0xf]
  %v90 = vld [vmem:[%s0 + $0x12c] sm:$0xf]
  %v91 = vld [vmem:[%s0 + $0x130] sm:$0xf]
  %v92 = vld [vmem:[%s0 + $0x134] sm:$0xf]
  %v93 = vld [vmem:[%s0 + $0x138] sm:$0xf]
  %v94 = vld [vmem:[%s0 + $0x13c] sm:$0xf]
  %v95 = vld [vmem:[%s0 + $0x140] sm:$0xf]
  %v96 = vld [vmem:[%s0 + $0x144] sm:$0xf]
  %v97 = vld [vmem:[%s0 + $0x148] sm:$0xf]
  %v98 = vld [vmem:[%s0 + $0x14c] sm:$0xf]
  %v99 = vld [vmem:[%s0 + $0x150] sm:$0xf]
  %v100 = vld [vmem:[%s0 + $0x154] sm:$0xf]
  %v101 = vld [vmem:[%s0 + $0x158] sm:$0xf]
  %v102 = vld [vmem:[%s0 + $0x15c] sm:$0xf]
  %v103 = vld [vmem:[%s0 + $0x160] sm:$0xf]
  %v104 = vld [vmem:[%s0 + $0x164] sm:$0xf]
  %v105 = vld [vmem:[%s0 + $0x168] sm:$0xf]
  %v106 = vld [vmem:[%s0 + $0x16c] sm:$0xf]
  %v107 = vld [vmem:[%s0 + $0x170] sm:$0xf]
  %v108 = vld [vmem:[%s0 + $0x174] sm:$0xf]
  %v109 = vld [vmem:[%s0 + $0x178] sm:$0xf]
  %v110 = vld [vmem:[%s0 + $0x17c] sm:$0xf]
  %v111 = vld [vmem:[%s0 + $0x180] sm:$0xf]
  %v112 = vld [vmem:[%s0 + $0x184] sm:$0xf]
  %v113 = vld [vmem:[%s0 + $0x188] sm:$0xf]
  %v114 = vld [vmem:[%s0 + $0x18c] sm:$0xf]
  %v115 = vld [vmem:[%s0 + $0x190] sm:$0xf]
  %v116 = vld [vmem:[%s0 + $0x194] sm:$0xf]
  %v117 = vld [vmem:[%s0 + $0x198] sm:$0xf]
  %v118 = vld [vmem:[%s0 + $0x19c] sm:$0xf]
  %v119 = vld [vmem:[%s0 + $0x1a0] sm:$0xf]
  %v120 = vld [vmem:[%s0 + $0x1a4] sm:$0xf]
  %v121 = vld [vmem:[%s0 + $0x1a8] sm:$0xf]
  %v122 = vld [vmem:[%s0 + $0x1ac] sm:$0xf]
  %v123 = vld [vmem:[%s0 + $0x1b0] sm:$0xf]
  %v124 = vld [vmem:[%s0 + $0x1b4] sm:$0xf]
  %v125 = vld [vmem:[%s0 + $0x1b8] sm:$0xf]
  %v126 = vld [vmem:[%s0 + $0x1bc] sm:$0xf]
  %v127 = vld [vmem:[%s0 + $0x1c0] sm:$0xf]
  %v128 = vld [vmem:[%s0 + $0x1c4] sm:$0xf]
  %v129 = vld [vmem:[%s0 + $0x1c8] sm:$0xf]
  %v130 = vld [vmem:[%s0 + $0x1cc] sm:$0xf]
  %v131 = vld [vmem:[%s0 + $0x1d0] sm:$0xf]
  %v132 = vld [vmem:[%s0 + $0x1d4] sm:$0xf]
  %v133 = vld [vmem:[%s0 + $0x1d8] sm:$0xf]
  %v134 = vld [vmem:[%s0 + $0x1dc] sm:$0xf]
  %v135 = vld [vmem:[%s0 + $0x1e0] sm:$0xf]
  %v136 = vld [vmem:[%s0 + $0x1e4] sm:$0xf]
  %v137 = vld [vmem:[%s0 + $0x1e8] sm:$0xf]
  %v138 = vld [vmem:[%s0 + $0x1ec] sm:$0xf]
  %v139 = vld [vmem:[%s0 + $0x1f0] sm:$0xf]
  %v140 = vld [vmem:[%s0 + $0x1f4] sm:$0xf]
  %v141 = vld [vmem:[%s0 + $0x1f8] sm:$0xf]
  %v142 = vld [vmem:[%s0 + $0x1fc] sm:$0xf]
  %v143 = vld [vmem:[%s1] sm:$0xff]
  %v144 = vld [vmem:[%s1 + $0x8] sm:$0xff]
  %v145 = vld [vmem:[%s1 + $0x10] sm:$0xff]
  %v146 = vld [vmem:[%s1 + $0x18] sm:$0xff]
  %v275 = vunpack.c.l.b16 %v15
  %v276 = vunpack.c.l.b16 %v16
  %v277 = vunpack.c.l.b16 %v17
  %v278 = vunpack.c.l.b16 %v18
  %v279 = vunpack.c.l.b16 %v19
  %v280 = vunpack.c.l.b16 %v20
  %v281 = vunpack.c.l.b16 %v21
  %v282 = vunpack.c.l.b16 %v22
  %v283 = vunpack.c.l.b16 %v23
  %v284 = vunpack.c.l.b16 %v24
  %v285 = vunpack.c.l.b16 %v25
  %v286 = vunpack.c.l.b16 %v26
  %v287 = vunpack.c.l.b16 %v27
  %v288 = vunpack.c.l.b16 %v28
  %v289 = vunpack.c.l.b16 %v29
  %v290 = vunpack.c.l.b16 %v30
  %v291 = vunpack.c.l.b16 %v31
  %v292 = vunpack.c.l.b16 %v32
  %v293 = vunpack.c.l.b16 %v33
  %v294 = vunpack.c.l.b16 %v34
  %v295 = vunpack.c.l.b16 %v35
  %v296 = vunpack.c.l.b16 %v36
  %v297 = vunpack.c.l.b16 %v37
  %v298 = vunpack.c.l.b16 %v38
  %v299 = vunpack.c.l.b16 %v39
  %v300 = vunpack.c.l.b16 %v40
  %v301 = vunpack.c.l.b16 %v41
  %v302 = vunpack.c.l.b16 %v42
  %v303 = vunpack.c.l.b16 %v43
  %v304 = vunpack.c.l.b16 %v44
  %v305 = vunpack.c.l.b16 %v45
  %v306 = vunpack.c.l.b16 %v46
  %v307 = vunpack.c.l.b16 %v47
  %v308 = vunpack.c.l.b16 %v48
  %v309 = vunpack.c.l.b16 %v49
  %v310 = vunpack.c.l.b16 %v50
  %v311 = vunpack.c.l.b16 %v51
  %v312 = vunpack.c.l.b16 %v52
  %v313 = vunpack.c.l.b16 %v53
  %v314 = vunpack.c.l.b16 %v54
  %v315 = vunpack.c.l.b16 %v55
  %v316 = vunpack.c.l.b16 %v56
  %v317 = vunpack.c.l.b16 %v57
  %v318 = vunpack.c.l.b16 %v58
  %v319 = vunpack.c.l.b16 %v59
  %v320 = vunpack.c.l.b16 %v60
  %v321 = vunpack.c.l.b16 %v61
  %v322 = vunpack.c.l.b16 %v62
  %v323 = vunpack.c.l.b16 %v63
  %v324 = vunpack.c.l.b16 %v64
  %v325 = vunpack.c.l.b16 %v65
  %v326 = vunpack.c.l.b16 %v66
  %v327 = vunpack.c.l.b16 %v67
  %v328 = vunpack.c.l.b16 %v68
  %v329 = vunpack.c.l.b16 %v69
  %v330 = vunpack.c.l.b16 %v70
  %v331 = vunpack.c.l.b16 %v71
  %v332 = vunpack.c.l.b16 %v72
  %v333 = vunpack.c.l.b16 %v73
  %v334 = vunpack.c.l.b16 %v74
  %v335 = vunpack.c.l.b16 %v75
  %v336 = vunpack.c.l.b16 %v76
  %v337 = vunpack.c.l.b16 %v77
  %v338 = vunpack.c.l.b16 %v78
  %v339 = vunpack.c.l.b16 %v79
  %v340 = vunpack.c.l.b16 %v80
  %v341 = vunpack.c.l.b16 %v81
  %v342 = vunpack.c.l.b16 %v82
  %v343 = vunpack.c.l.b16 %v83
  %v344 = vunpack.c.l.b16 %v84
  %v345 = vunpack.c.l.b16 %v85
  %v346 = vunpack.c.l.b16 %v86
  %v347 = vunpack.c.l.b16 %v87
  %v348 = vunpack.c.l.b16 %v88
  %v349 = vunpack.c.l.b16 %v89
  %v350 = vunpack.c.l.b16 %v90
  %v351 = vunpack.c.l.b16 %v91
  %v352 = vunpack.c.l.b16 %v92
  %v353 = vunpack.c.l.b16 %v93
  %v354 = vunpack.c.l.b16 %v94
  %v355 = vunpack.c.l.b16 %v95
  %v356 = vunpack.c.l.b16 %v96
  %v357 = vunpack.c.l.b16 %v97
  %v358 = vunpack.c.l.b16 %v98
  %v359 = vunpack.c.l.b16 %v99
  %v360 = vunpack.c.l.b16 %v100
  %v361 = vunpack.c.l.b16 %v101
  %v362 = vunpack.c.l.b16 %v102
  %v363 = vunpack.c.l.b16 %v103
  %v364 = vunpack.c.l.b16 %v104
  %v365 = vunpack.c.l.b16 %v105
  %v366 = vunpack.c.l.b16 %v106
  %v367 = vunpack.c.l.b16 %v107
  %v368 = vunpack.c.l.b16 %v108
  %v369 = vunpack.c.l.b16 %v109
  %v370 = vunpack.c.l.b16 %v110
  %v371 = vunpack.c.l.b16 %v111
  %v372 = vunpack.c.l.b16 %v112
  %v373 = vunpack.c.l.b16 %v113
  %v374 = vunpack.c.l.b16 %v114
  %v375 = vunpack.c.l.b16 %v115
  %v376 = vunpack.c.l.b16 %v116
  %v377 = vunpack.c.l.b16 %v117
  %v378 = vunpack.c.l.b16 %v118
  %v379 = vunpack.c.l.b16 %v119
  %v380 = vunpack.c.l.b16 %v120
  %v381 = vunpack.c.l.b16 %v121
  %v382 = vunpack.c.l.b16 %v122
  %v383 = vunpack.c.l.b16 %v123
  %v384 = vunpack.c.l.b16 %v124
  %v385 = vunpack.c.l.b16 %v125
  %v386 = vunpack.c.l.b16 %v126
  %v387 = vunpack.c.l.b16 %v127
  %v388 = vunpack.c.l.b16 %v128
  %v389 = vunpack.c.l.b16 %v129
  %v390 = vunpack.c.l.b16 %v130
  %v391 = vunpack.c.l.b16 %v131
  %v392 = vunpack.c.l.b16 %v132
  %v393 = vunpack.c.l.b16 %v133
  %v394 = vunpack.c.l.b16 %v134
  %v395 = vunpack.c.l.b16 %v135
  %v396 = vunpack.c.l.b16 %v136
  %v397 = vunpack.c.l.b16 %v137
  %v398 = vunpack.c.l.b16 %v138
  %v399 = vunpack.c.l.b16 %v139
  %v400 = vunpack.c.l.b16 %v140
  %v401 = vunpack.c.l.b16 %v141
  %v402 = vunpack.c.l.b16 %v142
  %v403 = vpack.c.b16 %v276, %v275
  %v404 = vpack.c.b16 %v278, %v277
  %v405 = vpack.c.b16 %v280, %v279
  %v406 = vpack.c.b16 %v282, %v281
  %v407 = vpack.c.b16 %v284, %v283
  %v408 = vpack.c.b16 %v286, %v285
  %v409 = vpack.c.b16 %v288, %v287
  %v410 = vpack.c.b16 %v290, %v289
  %v411 = vpack.c.b16 %v292, %v291
  %v412 = vpack.c.b16 %v294, %v293
  %v413 = vpack.c.b16 %v296, %v295
  %v414 = vpack.c.b16 %v298, %v297
  %v415 = vpack.c.b16 %v300, %v299
  %v416 = vpack.c.b16 %v302, %v301
  %v417 = vpack.c.b16 %v304, %v303
  %v418 = vpack.c.b16 %v306, %v305
  %v419 = vpack.c.b16 %v308, %v307
  %v420 = vpack.c.b16 %v310, %v309
  %v421 = vpack.c.b16 %v312, %v311
  %v422 = vpack.c.b16 %v314, %v313
  %v423 = vpack.c.b16 %v316, %v315
  %v424 = vpack.c.b16 %v318, %v317
  %v425 = vpack.c.b16 %v320, %v319
  %v426 = vpack.c.b16 %v322, %v321
  %v427 = vpack.c.b16 %v324, %v323
  %v428 = vpack.c.b16 %v326, %v325
  %v429 = vpack.c.b16 %v328, %v327
  %v430 = vpack.c.b16 %v330, %v329
  %v431 = vpack.c.b16 %v332, %v331
  %v432 = vpack.c.b16 %v334, %v333
  %v433 = vpack.c.b16 %v336, %v335
  %v434 = vpack.c.b16 %v338, %v337
  %v435 = vpack.c.b16 %v340, %v339
  %v436 = vpack.c.b16 %v342, %v341
  %v437 = vpack.c.b16 %v344, %v343
  %v438 = vpack.c.b16 %v346, %v345
  %v439 = vpack.c.b16 %v348, %v347
  %v440 = vpack.c.b16 %v350, %v349
  %v441 = vpack.c.b16 %v352, %v351
  %v442 = vpack.c.b16 %v354, %v353
  %v443 = vpack.c.b16 %v356, %v355
  %v444 = vpack.c.b16 %v358, %v357
  %v445 = vpack.c.b16 %v360, %v359
  %v446 = vpack.c.b16 %v362, %v361
  %v447 = vpack.c.b16 %v364, %v363
  %v448 = vpack.c.b16 %v366, %v365
  %v449 = vpack.c.b16 %v368, %v367
  %v450 = vpack.c.b16 %v370, %v369
  %v451 = vpack.c.b16 %v372, %v371
  %v452 = vpack.c.b16 %v374, %v373
  %v453 = vpack.c.b16 %v376, %v375
  %v454 = vpack.c.b16 %v378, %v377
  %v455 = vpack.c.b16 %v380, %v379
  %v456 = vpack.c.b16 %v382, %v381
  %v457 = vpack.c.b16 %v384, %v383
  %v458 = vpack.c.b16 %v386, %v385
  %v459 = vpack.c.b16 %v388, %v387
  %v460 = vpack.c.b16 %v390, %v389
  %v461 = vpack.c.b16 %v392, %v391
  %v462 = vpack.c.b16 %v394, %v393
  %v463 = vpack.c.b16 %v396, %v395
  %v464 = vpack.c.b16 %v398, %v397
  %v465 = vpack.c.b16 %v400, %v399
  %v466 = vpack.c.b16 %v402, %v401
  %v471 = vunpack.c.l.b16 %v143
  %v472 = vunpack.c.h.b16 %v143
  %v473 = vunpack.c.l.b16 %v144
  %v474 = vunpack.c.h.b16 %v144
  %v475 = vunpack.c.l.b16 %v145
  %v476 = vunpack.c.h.b16 %v145
  %v477 = vunpack.c.l.b16 %v146
  %v478 = vunpack.c.h.b16 %v146
  %v479 = vpack.c.b16 %v473, %v471
  %v480 = vpack.c.b16 %v474, %v472
  %v481 = vpack.c.b16 %v477, %v475
  %v482 = vpack.c.b16 %v478, %v476
  %vm487 = vcmask 261120
  %v489 = vsel %vm487, %v403, 0
  %v492 = vsel %vm487, %v404, 0
  %v495 = vsel %vm487, %v405, 0
  %v498 = vsel %vm487, %v406, 0
  %v501 = vsel %vm487, %v407, 0
  %v504 = vsel %vm487, %v408, 0
  %v507 = vsel %vm487, %v409, 0
  %v510 = vsel %vm487, %v410, 0
  %v513 = vsel %vm487, %v411, 0
  %v516 = vsel %vm487, %v412, 0
  %v519 = vsel %vm487, %v413, 0
  %v522 = vsel %vm487, %v414, 0
  %v525 = vsel %vm487, %v415, 0
  %v528 = vsel %vm487, %v416, 0
  %v531 = vsel %vm487, %v417, 0
  %v534 = vsel %vm487, %v418, 0
  %v537 = vsel %vm487, %v419, 0
  %v540 = vsel %vm487, %v420, 0
  %v543 = vsel %vm487, %v421, 0
  %v546 = vsel %vm487, %v422, 0
  %v549 = vsel %vm487, %v423, 0
  %v552 = vsel %vm487, %v424, 0
  %v555 = vsel %vm487, %v425, 0
  %v558 = vsel %vm487, %v426, 0
  %v561 = vsel %vm487, %v427, 0
  %v564 = vsel %vm487, %v428, 0
  %v567 = vsel %vm487, %v429, 0
  %v570 = vsel %vm487, %v430, 0
  %v573 = vsel %vm487, %v431, 0
  %v576 = vsel %vm487, %v432, 0
  %v579 = vsel %vm487, %v433, 0
  %v582 = vsel %vm487, %v434, 0
  %v585 = vsel %vm487, %v435, 0
  %v588 = vsel %vm487, %v436, 0
  %v591 = vsel %vm487, %v437, 0
  %v594 = vsel %vm487, %v438, 0
  %v597 = vsel %vm487, %v439, 0
  %v600 = vsel %vm487, %v440, 0
  %v603 = vsel %vm487, %v441, 0
  %v606 = vsel %vm487, %v442, 0
  %v609 = vsel %vm487, %v443, 0
  %v612 = vsel %vm487, %v444, 0
  %v615 = vsel %vm487, %v445, 0
  %v618 = vsel %vm487, %v446, 0
  %v621 = vsel %vm487, %v447, 0
  %v624 = vsel %vm487, %v448, 0
  %v627 = vsel %vm487, %v449, 0
  %v630 = vsel %vm487, %v450, 0
  %v633 = vsel %vm487, %v451, 0
  %v636 = vsel %vm487, %v452, 0
  %v639 = vsel %vm487, %v453, 0
  %v642 = vsel %vm487, %v454, 0
  %v645 = vsel %vm487, %v455, 0
  %v648 = vsel %vm487, %v456, 0
  %v651 = vsel %vm487, %v457, 0
  %v654 = vsel %vm487, %v458, 0
  %v657 = vsel %vm487, %v459, 0
  %v660 = vsel %vm487, %v460, 0
  %v663 = vsel %vm487, %v461, 0
  %v666 = vsel %vm487, %v462, 0
  %v669 = vsel %vm487, %v463, 0
  %v672 = vsel %vm487, %v464, 0
  %v675 = vsel %vm487, %v465, 0
  %v678 = vsel %vm487, %v466, 0
  %680 = vmatprep.subr.bf16.mxu0 %v480
  %681 = vmatpush1.bf16.msra.mxu0 %v479
  %682 = vmatprep.subr.bf16.mxu0 %v482
  %683 = vmatpush1.bf16.msra.mxu0 %v481
  %684 = vmatprep.subr.bf16.mxu0 0
  %685 = vmatpush1.bf16.msra.mxu0 0
  %686 = vmatprep.subr.bf16.mxu0 0
  %687 = vmatpush1.bf16.msra.mxu0 0
  %688 = vmatprep.subr.bf16.mxu0 0
  %689 = vmatpush1.bf16.msra.mxu0 0
  %690 = vmatprep.subr.bf16.mxu0 0
  %691 = vmatpush1.bf16.msra.mxu0 0
  %692 = vmatprep.subr.bf16.mxu0 0
  %693 = vmatpush1.bf16.msra.mxu0 0
  %694 = vmatprep.subr.bf16.mxu0 0
  %695 = vmatpush1.bf16.msra.mxu0 0
  %696 = vmatprep.subr.bf16.mxu0 0
  %697 = vmatpush1.bf16.msra.mxu0 0
  %698 = vmatprep.subr.bf16.mxu0 0
  %699 = vmatpush1.bf16.msra.mxu0 0
  %700 = vmatprep.subr.bf16.mxu0 0
  %701 = vmatpush1.bf16.msra.mxu0 0
  %702 = vmatprep.subr.bf16.mxu0 0
  %703 = vmatpush1.bf16.msra.mxu0 0
  %704 = vmatprep.subr.bf16.mxu0 0
  %705 = vmatpush1.bf16.msra.mxu0 0
  %706 = vmatprep.subr.bf16.mxu0 0
  %707 = vmatpush1.bf16.msra.mxu0 0
  %708 = vmatprep.subr.bf16.mxu0 0
  %709 = vmatpush1.bf16.msra.mxu0 0
  %710 = vmatprep.subr.bf16.mxu0 0
  %711 = vmatpush1.bf16.msra.mxu0 0
  %712 = vmatprep.mubr.bf16.mxu0 0
  %713 = vmatmul.mubr.bf16.gmra.mrb[0].mxu0 %v489
  %v714 = vpop.f32.mrb[0].mxu0
  %v715 = vadd.f32 0.0, %v714
  %v716 = vpop.f32.mrb[0].mxu0
  %v717 = vadd.f32 0.0, %v716
  %v718 = vpop.f32.mrb[0].mxu0
  %v719 = vadd.f32 0.0, %v718
  %v720 = vpop.f32.mrb[0].mxu0
  %v721 = vadd.f32 0.0, %v720
  %722 = vmatprep.mubr.bf16.mxu0 0
  %723 = vmatmul.mubr.bf16.gmra.mrb[0].mxu0 %v492
  %v724 = vpop.f32.mrb[0].mxu0
  %v725 = vadd.f32 0.0, %v724
  %v726 = vpop.f32.mrb[0].mxu0
  %v727 = vadd.f32 0.0, %v726
  %v728 = vpop.f32.mrb[0].mxu0
  %v729 = vadd.f32 0.0, %v728
  %v730 = vpop.f32.mrb[0].mxu0
  %v731 = vadd.f32 0.0, %v730
  %732 = vmatprep.mubr.bf16.mxu0 0
  %733 = vmatmul.mubr.bf16.gmra.mrb[0].mxu0 %v495
  %v734 = vpop.f32.mrb[0].mxu0
  %v735 = vadd.f32 0.0, %v734
  %v736 = vpop.f32.mrb[0].mxu0
  %v737 = vadd.f32 0.0, %v736
  %v738 = vpop.f32.mrb[0].mxu0
  %v739 = vadd.f32 0.0, %v738
  %v740 = vpop.f32.mrb[0].mxu0
  %v741 = vadd.f32 0.0, %v740
  %742 = vmatprep.mubr.bf16.mxu0 0
  %743 = vmatmul.mubr.bf16.gmra.mrb[0].mxu0 %v498
  %v744 = vpop.f32.mrb[0].mxu0
  %v745 = vadd.f32 0.0, %v744
  %v746 = vpop.f32.mrb[0].mxu0
  %v747 = vadd.f32 0.0, %v746
  %v748 = vpop.f32.mrb[0].mxu0
  %v749 = vadd.f32 0.0, %v748
  %v750 = vpop.f32.mrb[0].mxu0
  %v751 = vadd.f32 0.0, %v750
  %752 = vmatprep.mubr.bf16.mxu0 0
  %753 = vmatmul.mubr.bf16.gmra.mrb[0].mxu0 %v501
  %v754 = vpop.f32.mrb[0].mxu0
  %v755 = vadd.f32 0.0, %v754
  %v756 = vpop.f32.mrb[0].mxu0
  %v757 = vadd.f32 0.0, %v756
  %v758 = vpop.f32.mrb[0].mxu0
  %v759 = vadd.f32 0.0, %v758
  %v760 = vpop.f32.mrb[0].mxu0
  %v761 = vadd.f32 0.0, %v760
  %762 = vmatprep.mubr.bf16.mxu0 0
  %763 = vmatmul.mubr.bf16.gmra.mrb[0].mxu0 %v504
  %v764 = vpop.f32.mrb[0].mxu0
  %v765 = vadd.f32 0.0, %v764
  %v766 = vpop.f32.mrb[0].mxu0
  %v767 = vadd.f32 0.0, %v766
  %v768 = vpop.f32.mrb[0].mxu0
  %v769 = vadd.f32 0.0, %v768
  %v770 = vpop.f32.mrb[0].mxu0
  %v771 = vadd.f32 0.0, %v770
  %772 = vmatprep.mubr.bf16.mxu0 0
  %773 = vmatmul.mubr.bf16.gmra.mrb[0].mxu0 %v507
  %v774 = vpop.f32.mrb[0].mxu0
  %v775 = vadd.f32 0.0, %v774
  %v776 = vpop.f32.mrb[0].mxu0
  %v777 = vadd.f32 0.0, %v776
  %v778 = vpop.f32.mrb[0].mxu0
  %v779 = vadd.f32 0.0, %v778
  %v780 = vpop.f32.mrb[0].mxu0
  %v781 = vadd.f32 0.0, %v780
  %782 = vmatprep.mubr.bf16.mxu0 0
  %783 = vmatmul.mubr.bf16.gmra.mrb[0].mxu0 %v510
  %v784 = vpop.f32.mrb[0].mxu0
  %v785 = vadd.f32 0.0, %v784
  %v786 = vpop.f32.mrb[0].mxu0
  %v787 = vadd.f32 0.0, %v786
  %v788 = vpop.f32.mrb[0].mxu0
  %v789 = vadd.f32 0.0, %v788
  %v790 = vpop.f32.mrb[0].mxu0
  %v791 = vadd.f32 0.0, %v790
  %792 = vmatprep.mubr.bf16.mxu0 0
  %793 = vmatmul.mubr.bf16.gmra.mrb[0].mxu0 %v513
  %v794 = vpop.f32.mrb[0].mxu0
  %v795 = vadd.f32 0.0, %v794
  %v796 = vpop.f32.mrb[0].mxu0
  %v797 = vadd.f32 0.0, %v796
  %v798 = vpop.f32.mrb[0].mxu0
  %v799 = vadd.f32 0.0, %v798
  %v800 = vpop.f32.mrb[0].mxu0
  %v801 = vadd.f32 0.0, %v800
  %802 = vmatprep.mubr.bf16.mxu0 0
  %803 = vmatmul.mubr.bf16.gmra.mrb[0].mxu0 %v516
  %v804 = vpop.f32.mrb[0].mxu0
  %v805 = vadd.f32 0.0, %v804
  %v806 = vpop.f32.mrb[0].mxu0
  %v807 = vadd.f32 0.0, %v806
  %v808 = vpop.f32.mrb[0].mxu0
  %v809 = vadd.f32 0.0, %v808
  %v810 = vpop.f32.mrb[0].mxu0
  %v811 = vadd.f32 0.0, %v810
  %812 = vmatprep.mubr.bf16.mxu0 0
  %813 = vmatmul.mubr.bf16.gmra.mrb[0].mxu0 %v519
  %v814 = vpop.f32.mrb[0].mxu0
  %v815 = vadd.f32 0.0, %v814
  %v816 = vpop.f32.mrb[0].mxu0
  %v817 = vadd.f32 0.0, %v816
  %v818 = vpop.f32.mrb[0].mxu0
  %v819 = vadd.f32 0.0, %v818
  %v820 = vpop.f32.mrb[0].mxu0
  %v821 = vadd.f32 0.0, %v820
  %822 = vmatprep.mubr.bf16.mxu0 0
  %823 = vmatmul.mubr.bf16.gmra.mrb[0].mxu0 %v522
  %v824 = vpop.f32.mrb[0].mxu0
  %v825 = vadd.f32 0.0, %v824
  %v826 = vpop.f32.mrb[0].mxu0
  %v827 = vadd.f32 0.0, %v826
  %v828 = vpop.f32.mrb[0].mxu0
  %v829 = vadd.f32 0.0, %v828
  %v830 = vpop.f32.mrb[0].mxu0
  %v831 = vadd.f32 0.0, %v830
  %832 = vmatprep.mubr.bf16.mxu0 0
  %833 = vmatmul.mubr.bf16.gmra.mrb[0].mxu0 %v525
  %v834 = vpop.f32.mrb[0].mxu0
  %v835 = vadd.f32 0.0, %v834
  %v836 = vpop.f32.mrb[0].mxu0
  %v837 = vadd.f32 0.0, %v836
  %v838 = vpop.f32.mrb[0].mxu0
  %v839 = vadd.f32 0.0, %v838
  %v840 = vpop.f32.mrb[0].mxu0
  %v841 = vadd.f32 0.0, %v840
  %842 = vmatprep.mubr.bf16.mxu0 0
  %843 = vmatmul.mubr.bf16.gmra.mrb[0].mxu0 %v528
  %v844 = vpop.f32.mrb[0].mxu0
  %v845 = vadd.f32 0.0, %v844
  %v846 = vpop.f32.mrb[0].mxu0
  %v847 = vadd.f32 0.0, %v846
  %v848 = vpop.f32.mrb[0].mxu0
  %v849 = vadd.f32 0.0, %v848
  %v850 = vpop.f32.mrb[0].mxu0
  %v851 = vadd.f32 0.0, %v850
  %852 = vmatprep.mubr.bf16.mxu0 0
  %853 = vmatmul.mubr.bf16.gmra.mrb[0].mxu0 %v531
  %v854 = vpop.f32.mrb[0].mxu0
  %v855 = vadd.f32 0.0, %v854
  %v856 = vpop.f32.mrb[0].mxu0
  %v857 = vadd.f32 0.0, %v856
  %v858 = vpop.f32.mrb[0].mxu0
  %v859 = vadd.f32 0.0, %v858
  %v860 = vpop.f32.mrb[0].mxu0
  %v861 = vadd.f32 0.0, %v860
  %862 = vmatprep.mubr.bf16.mxu0 0
  %863 = vmatmul.mubr.bf16.gmra.mrb[0].mxu0 %v534
  %v864 = vpop.f32.mrb[0].mxu0
  %v865 = vadd.f32 0.0, %v864
  %v866 = vpop.f32.mrb[0].mxu0
  %v867 = vadd.f32 0.0, %v866
  %v868 = vpop.f32.mrb[0].mxu0
  %v869 = vadd.f32 0.0, %v868
  %v870 = vpop.f32.mrb[0].mxu0
  %v871 = vadd.f32 0.0, %v870
  %872 = vmatprep.mubr.bf16.mxu0 0
  %873 = vmatmul.mubr.bf16.gmra.mrb[0].mxu0 %v537
  %v874 = vpop.f32.mrb[0].mxu0
  %v875 = vadd.f32 0.0, %v874
  %v876 = vpop.f32.mrb[0].mxu0
  %v877 = vadd.f32 0.0, %v876
  %v878 = vpop.f32.mrb[0].mxu0
  %v879 = vadd.f32 0.0, %v878
  %v880 = vpop.f32.mrb[0].mxu0
  %v881 = vadd.f32 0.0, %v880
  %882 = vmatprep.mubr.bf16.mxu0 0
  %883 = vmatmul.mubr.bf16.gmra.mrb[0].mxu0 %v540
  %v884 = vpop.f32.mrb[0].mxu0
  %v885 = vadd.f32 0.0, %v884
  %v886 = vpop.f32.mrb[0].mxu0
  %v887 = vadd.f32 0.0, %v886
  %v888 = vpop.f32.mrb[0].mxu0
  %v889 = vadd.f32 0.0, %v888
  %v890 = vpop.f32.mrb[0].mxu0
  %v891 = vadd.f32 0.0, %v890
  %892 = vmatprep.mubr.bf16.mxu0 0
  %893 = vmatmul.mubr.bf16.gmra.mrb[0].mxu0 %v543
  %v894 = vpop.f32.mrb[0].mxu0
  %v895 = vadd.f32 0.0, %v894
  %v896 = vpop.f32.mrb[0].mxu0
  %v897 = vadd.f32 0.0, %v896
  %v898 = vpop.f32.mrb[0].mxu0
  %v899 = vadd.f32 0.0, %v898
  %v900 = vpop.f32.mrb[0].mxu0
  %v901 = vadd.f32 0.0, %v900
  %902 = vmatprep.mubr.bf16.mxu0 0
  %903 = vmatmul.mubr.bf16.gmra.mrb[0].mxu0 %v546
  %v904 = vpop.f32.mrb[0].mxu0
  %v905 = vadd.f32 0.0, %v904
  %v906 = vpop.f32.mrb[0].mxu0
  %v907 = vadd.f32 0.0, %v906
  %v908 = vpop.f32.mrb[0].mxu0
  %v909 = vadd.f32 0.0, %v908
  %v910 = vpop.f32.mrb[0].mxu0
  %v911 = vadd.f32 0.0, %v910
  %912 = vmatprep.mubr.bf16.mxu0 0
  %913 = vmatmul.mubr.bf16.gmra.mrb[0].mxu0 %v549
  %v914 = vpop.f32.mrb[0].mxu0
  %v915 = vadd.f32 0.0, %v914
  %v916 = vpop.f32.mrb[0].mxu0
  %v917 = vadd.f32 0.0, %v916
  %v918 = vpop.f32.mrb[0].mxu0
  %v919 = vadd.f32 0.0, %v918
  %v920 = vpop.f32.mrb[0].mxu0
  %v921 = vadd.f32 0.0, %v920
  %922 = vmatprep.mubr.bf16.mxu0 0
  %923 = vmatmul.mubr.bf16.gmra.mrb[0].mxu0 %v552
  %v924 = vpop.f32.mrb[0].mxu0
  %v925 = vadd.f32 0.0, %v924
  %v926 = vpop.f32.mrb[0].mxu0
  %v927 = vadd.f32 0.0, %v926
  %v928 = vpop.f32.mrb[0].mxu0
  %v929 = vadd.f32 0.0, %v928
  %v930 = vpop.f32.mrb[0].mxu0
  %v931 = vadd.f32 0.0, %v930
  %932 = vmatprep.mubr.bf16.mxu0 0
  %933 = vmatmul.mubr.bf16.gmra.mrb[0].mxu0 %v555
  %v934 = vpop.f32.mrb[0].mxu0
  %v935 = vadd.f32 0.0, %v934
  %v936 = vpop.f32.mrb[0].mxu0
  %v937 = vadd.f32 0.0, %v936
  %v938 = vpop.f32.mrb[0].mxu0
  %v939 = vadd.f32 0.0, %v938
  %v940 = vpop.f32.mrb[0].mxu0
  %v941 = vadd.f32 0.0, %v940
  %942 = vmatprep.mubr.bf16.mxu0 0
  %943 = vmatmul.mubr.bf16.gmra.mrb[0].mxu0 %v558
  %v944 = vpop.f32.mrb[0].mxu0
  %v945 = vadd.f32 0.0, %v944
  %v946 = vpop.f32.mrb[0].mxu0
  %v947 = vadd.f32 0.0, %v946
  %v948 = vpop.f32.mrb[0].mxu0
  %v949 = vadd.f32 0.0, %v948
  %v950 = vpop.f32.mrb[0].mxu0
  %v951 = vadd.f32 0.0, %v950
  %952 = vmatprep.mubr.bf16.mxu0 0
  %953 = vmatmul.mubr.bf16.gmra.mrb[0].mxu0 %v561
  %v954 = vpop.f32.mrb[0].mxu0
  %v955 = vadd.f32 0.0, %v954
  %v956 = vpop.f32.mrb[0].mxu0
  %v957 = vadd.f32 0.0, %v956
  %v958 = vpop.f32.mrb[0].mxu0
  %v959 = vadd.f32 0.0, %v958
  %v960 = vpop.f32.mrb[0].mxu0
  %v961 = vadd.f32 0.0, %v960
  %962 = vmatprep.mubr.bf16.mxu0 0
  %963 = vmatmul.mubr.bf16.gmra.mrb[0].mxu0 %v564
  %v964 = vpop.f32.mrb[0].mxu0
  %v965 = vadd.f32 0.0, %v964
  %v966 = vpop.f32.mrb[0].mxu0
  %v967 = vadd.f32 0.0, %v966
  %v968 = vpop.f32.mrb[0].mxu0
  %v969 = vadd.f32 0.0, %v968
  %v970 = vpop.f32.mrb[0].mxu0
  %v971 = vadd.f32 0.0, %v970
  %972 = vmatprep.mubr.bf16.mxu0 0
  %973 = vmatmul.mubr.bf16.gmra.mrb[0].mxu0 %v567
  %v974 = vpop.f32.mrb[0].mxu0
  %v975 = vadd.f32 0.0, %v974
  %v976 = vpop.f32.mrb[0].mxu0
  %v977 = vadd.f32 0.0, %v976
  %v978 = vpop.f32.mrb[0].mxu0
  %v979 = vadd.f32 0.0, %v978
  %v980 = vpop.f32.mrb[0].mxu0
  %v981 = vadd.f32 0.0, %v980
  %982 = vmatprep.mubr.bf16.mxu0 0
  %983 = vmatmul.mubr.bf16.gmra.mrb[0].mxu0 %v570
  %v984 = vpop.f32.mrb[0].mxu0
  %v985 = vadd.f32 0.0, %v984
  %v986 = vpop.f32.mrb[0].mxu0
  %v987 = vadd.f32 0.0, %v986
  %v988 = vpop.f32.mrb[0].mxu0
  %v989 = vadd.f32 0.0, %v988
  %v990 = vpop.f32.mrb[0].mxu0
  %v991 = vadd.f32 0.0, %v990
  %992 = vmatprep.mubr.bf16.mxu0 0
  %993 = vmatmul.mubr.bf16.gmra.mrb[0].mxu0 %v573
  %v994 = vpop.f32.mrb[0].mxu0
  %v995 = vadd.f32 0.0, %v994
  %v996 = vpop.f32.mrb[0].mxu0
  %v997 = vadd.f32 0.0, %v996
  %v998 = vpop.f32.mrb[0].mxu0
  %v999 = vadd.f32 0.0, %v998
  %v1000 = vpop.f32.mrb[0].mxu0
  %v1001 = vadd.f32 0.0, %v1000
  %1002 = vmatprep.mubr.bf16.mxu0 0
  %1003 = vmatmul.mubr.bf16.gmra.mrb[0].mxu0 %v576
  %v1004 = vpop.f32.mrb[0].mxu0
  %v1005 = vadd.f32 0.0, %v1004
  %v1006 = vpop.f32.mrb[0].mxu0
  %v1007 = vadd.f32 0.0, %v1006
  %v1008 = vpop.f32.mrb[0].mxu0
  %v1009 = vadd.f32 0.0, %v1008
  %v1010 = vpop.f32.mrb[0].mxu0
  %v1011 = vadd.f32 0.0, %v1010
  %1012 = vmatprep.mubr.bf16.mxu0 0
  %1013 = vmatmul.mubr.bf16.gmra.mrb[0].mxu0 %v579
  %v1014 = vpop.f32.mrb[0].mxu0
  %v1015 = vadd.f32 0.0, %v1014
  %v1016 = vpop.f32.mrb[0].mxu0
  %v1017 = vadd.f32 0.0, %v1016
  %v1018 = vpop.f32.mrb[0].mxu0
  %v1019 = vadd.f32 0.0, %v1018
  %v1020 = vpop.f32.mrb[0].mxu0
  %v1021 = vadd.f32 0.0, %v1020
  %1022 = vmatprep.mubr.bf16.mxu0 0
  %1023 = vmatmul.mubr.bf16.gmra.mrb[0].mxu0 %v582
  %v1024 = vpop.f32.mrb[0].mxu0
  %v1025 = vadd.f32 0.0, %v1024
  %v1026 = vpop.f32.mrb[0].mxu0
  %v1027 = vadd.f32 0.0, %v1026
  %v1028 = vpop.f32.mrb[0].mxu0
  %v1029 = vadd.f32 0.0, %v1028
  %v1030 = vpop.f32.mrb[0].mxu0
  %v1031 = vadd.f32 0.0, %v1030
  %1032 = vmatprep.mubr.bf16.mxu0 0
  %1033 = vmatmul.mubr.bf16.gmra.mrb[0].mxu0 %v585
  %v1034 = vpop.f32.mrb[0].mxu0
  %v1035 = vadd.f32 0.0, %v1034
  %v1036 = vpop.f32.mrb[0].mxu0
  %v1037 = vadd.f32 0.0, %v1036
  %v1038 = vpop.f32.mrb[0].mxu0
  %v1039 = vadd.f32 0.0, %v1038
  %v1040 = vpop.f32.mrb[0].mxu0
  %v1041 = vadd.f32 0.0, %v1040
  %1042 = vmatprep.mubr.bf16.mxu0 0
  %1043 = vmatmul.mubr.bf16.gmra.mrb[0].mxu0 %v588
  %v1044 = vpop.f32.mrb[0].mxu0
  %v1045 = vadd.f32 0.0, %v1044
  %v1046 = vpop.f32.mrb[0].mxu0
  %v1047 = vadd.f32 0.0, %v1046
  %v1048 = vpop.f32.mrb[0].mxu0
  %v1049 = vadd.f32 0.0, %v1048
  %v1050 = vpop.f32.mrb[0].mxu0
  %v1051 = vadd.f32 0.0, %v1050
  %1052 = vmatprep.mubr.bf16.mxu0 0
  %1053 = vmatmul.mubr.bf16.gmra.mrb[0].mxu0 %v591
  %v1054 = vpop.f32.mrb[0].mxu0
  %v1055 = vadd.f32 0.0, %v1054
  %v1056 = vpop.f32.mrb[0].mxu0
  %v1057 = vadd.f32 0.0, %v1056
  %v1058 = vpop.f32.mrb[0].mxu0
  %v1059 = vadd.f32 0.0, %v1058
  %v1060 = vpop.f32.mrb[0].mxu0
  %v1061 = vadd.f32 0.0, %v1060
  %1062 = vmatprep.mubr.bf16.mxu0 0
  %1063 = vmatmul.mubr.bf16.gmra.mrb[0].mxu0 %v594
  %v1064 = vpop.f32.mrb[0].mxu0
  %v1065 = vadd.f32 0.0, %v1064
  %v1066 = vpop.f32.mrb[0].mxu0
  %v1067 = vadd.f32 0.0, %v1066
  %v1068 = vpop.f32.mrb[0].mxu0
  %v1069 = vadd.f32 0.0, %v1068
  %v1070 = vpop.f32.mrb[0].mxu0
  %v1071 = vadd.f32 0.0, %v1070
  %1072 = vmatprep.mubr.bf16.mxu0 0
  %1073 = vmatmul.mubr.bf16.gmra.mrb[0].mxu0 %v597
  %v1074 = vpop.f32.mrb[0].mxu0
  %v1075 = vadd.f32 0.0, %v1074
  %v1076 = vpop.f32.mrb[0].mxu0
  %v1077 = vadd.f32 0.0, %v1076
  %v1078 = vpop.f32.mrb[0].mxu0
  %v1079 = vadd.f32 0.0, %v1078
  %v1080 = vpop.f32.mrb[0].mxu0
  %v1081 = vadd.f32 0.0, %v1080
  %1082 = vmatprep.mubr.bf16.mxu0 0
  %1083 = vmatmul.mubr.bf16.gmra.mrb[0].mxu0 %v600
  %v1084 = vpop.f32.mrb[0].mxu0
  %v1085 = vadd.f32 0.0, %v1084
  %v1086 = vpop.f32.mrb[0].mxu0
  %v1087 = vadd.f32 0.0, %v1086
  %v1088 = vpop.f32.mrb[0].mxu0
  %v1089 = vadd.f32 0.0, %v1088
  %v1090 = vpop.f32.mrb[0].mxu0
  %v1091 = vadd.f32 0.0, %v1090
  %1092 = vmatprep.mubr.bf16.mxu0 0
  %1093 = vmatmul.mubr.bf16.gmra.mrb[0].mxu0 %v603
  %v1094 = vpop.f32.mrb[0].mxu0
  %v1095 = vadd.f32 0.0, %v1094
  %v1096 = vpop.f32.mrb[0].mxu0
  %v1097 = vadd.f32 0.0, %v1096
  %v1098 = vpop.f32.mrb[0].mxu0
  %v1099 = vadd.f32 0.0, %v1098
  %v1100 = vpop.f32.mrb[0].mxu0
  %v1101 = vadd.f32 0.0, %v1100
  %1102 = vmatprep.mubr.bf16.mxu0 0
  %1103 = vmatmul.mubr.bf16.gmra.mrb[0].mxu0 %v606
  %v1104 = vpop.f32.mrb[0].mxu0
  %v1105 = vadd.f32 0.0, %v1104
  %v1106 = vpop.f32.mrb[0].mxu0
  %v1107 = vadd.f32 0.0, %v1106
  %v1108 = vpop.f32.mrb[0].mxu0
  %v1109 = vadd.f32 0.0, %v1108
  %v1110 = vpop.f32.mrb[0].mxu0
  %v1111 = vadd.f32 0.0, %v1110
  %1112 = vmatprep.mubr.bf16.mxu0 0
  %1113 = vmatmul.mubr.bf16.gmra.mrb[0].mxu0 %v609
  %v1114 = vpop.f32.mrb[0].mxu0
  %v1115 = vadd.f32 0.0, %v1114
  %v1116 = vpop.f32.mrb[0].mxu0
  %v1117 = vadd.f32 0.0, %v1116
  %v1118 = vpop.f32.mrb[0].mxu0
  %v1119 = vadd.f32 0.0, %v1118
  %v1120 = vpop.f32.mrb[0].mxu0
  %v1121 = vadd.f32 0.0, %v1120
  %1122 = vmatprep.mubr.bf16.mxu0 0
  %1123 = vmatmul.mubr.bf16.gmra.mrb[0].mxu0 %v612
  %v1124 = vpop.f32.mrb[0].mxu0
  %v1125 = vadd.f32 0.0, %v1124
  %v1126 = vpop.f32.mrb[0].mxu0
  %v1127 = vadd.f32 0.0, %v1126
  %v1128 = vpop.f32.mrb[0].mxu0
  %v1129 = vadd.f32 0.0, %v1128
  %v1130 = vpop.f32.mrb[0].mxu0
  %v1131 = vadd.f32 0.0, %v1130
  %1132 = vmatprep.mubr.bf16.mxu0 0
  %1133 = vmatmul.mubr.bf16.gmra.mrb[0].mxu0 %v615
  %v1134 = vpop.f32.mrb[0].mxu0
  %v1135 = vadd.f32 0.0, %v1134
  %v1136 = vpop.f32.mrb[0].mxu0
  %v1137 = vadd.f32 0.0, %v1136
  %v1138 = vpop.f32.mrb[0].mxu0
  %v1139 = vadd.f32 0.0, %v1138
  %v1140 = vpop.f32.mrb[0].mxu0
  %v1141 = vadd.f32 0.0, %v1140
  %1142 = vmatprep.mubr.bf16.mxu0 0
  %1143 = vmatmul.mubr.bf16.gmra.mrb[0].mxu0 %v618
  %v1144 = vpop.f32.mrb[0].mxu0
  %v1145 = vadd.f32 0.0, %v1144
  %v1146 = vpop.f32.mrb[0].mxu0
  %v1147 = vadd.f32 0.0, %v1146
  %v1148 = vpop.f32.mrb[0].mxu0
  %v1149 = vadd.f32 0.0, %v1148
  %v1150 = vpop.f32.mrb[0].mxu0
  %v1151 = vadd.f32 0.0, %v1150
  %1152 = vmatprep.mubr.bf16.mxu0 0
  %1153 = vmatmul.mubr.bf16.gmra.mrb[0].mxu0 %v621
  %v1154 = vpop.f32.mrb[0].mxu0
  %v1155 = vadd.f32 0.0, %v1154
  %v1156 = vpop.f32.mrb[0].mxu0
  %v1157 = vadd.f32 0.0, %v1156
  %v1158 = vpop.f32.mrb[0].mxu0
  %v1159 = vadd.f32 0.0, %v1158
  %v1160 = vpop.f32.mrb[0].mxu0
  %v1161 = vadd.f32 0.0, %v1160
  %1162 = vmatprep.mubr.bf16.mxu0 0
  %1163 = vmatmul.mubr.bf16.gmra.mrb[0].mxu0 %v624
  %v1164 = vpop.f32.mrb[0].mxu0
  %v1165 = vadd.f32 0.0, %v1164
  %v1166 = vpop.f32.mrb[0].mxu0
  %v1167 = vadd.f32 0.0, %v1166
  %v1168 = vpop.f32.mrb[0].mxu0
  %v1169 = vadd.f32 0.0, %v1168
  %v1170 = vpop.f32.mrb[0].mxu0
  %v1171 = vadd.f32 0.0, %v1170
  %1172 = vmatprep.mubr.bf16.mxu0 0
  %1173 = vmatmul.mubr.bf16.gmra.mrb[0].mxu0 %v627
  %v1174 = vpop.f32.mrb[0].mxu0
  %v1175 = vadd.f32 0.0, %v1174
  %v1176 = vpop.f32.mrb[0].mxu0
  %v1177 = vadd.f32 0.0, %v1176
  %v1178 = vpop.f32.mrb[0].mxu0
  %v1179 = vadd.f32 0.0, %v1178
  %v1180 = vpop.f32.mrb[0].mxu0
  %v1181 = vadd.f32 0.0, %v1180
  %1182 = vmatprep.mubr.bf16.mxu0 0
  %1183 = vmatmul.mubr.bf16.gmra.mrb[0].mxu0 %v630
  %v1184 = vpop.f32.mrb[0].mxu0
  %v1185 = vadd.f32 0.0, %v1184
  %v1186 = vpop.f32.mrb[0].mxu0
  %v1187 = vadd.f32 0.0, %v1186
  %v1188 = vpop.f32.mrb[0].mxu0
  %v1189 = vadd.f32 0.0, %v1188
  %v1190 = vpop.f32.mrb[0].mxu0
  %v1191 = vadd.f32 0.0, %v1190
  %1192 = vmatprep.mubr.bf16.mxu0 0
  %1193 = vmatmul.mubr.bf16.gmra.mrb[0].mxu0 %v633
  %v1194 = vpop.f32.mrb[0].mxu0
  %v1195 = vadd.f32 0.0, %v1194
  %v1196 = vpop.f32.mrb[0].mxu0
  %v1197 = vadd.f32 0.0, %v1196
  %v1198 = vpop.f32.mrb[0].mxu0
  %v1199 = vadd.f32 0.0, %v1198
  %v1200 = vpop.f32.mrb[0].mxu0
  %v1201 = vadd.f32 0.0, %v1200
  %1202 = vmatprep.mubr.bf16.mxu0 0
  %1203 = vmatmul.mubr.bf16.gmra.mrb[0].mxu0 %v636
  %v1204 = vpop.f32.mrb[0].mxu0
  %v1205 = vadd.f32 0.0, %v1204
  %v1206 = vpop.f32.mrb[0].mxu0
  %v1207 = vadd.f32 0.0, %v1206
  %v1208 = vpop.f32.mrb[0].mxu0
  %v1209 = vadd.f32 0.0, %v1208
  %v1210 = vpop.f32.mrb[0].mxu0
  %v1211 = vadd.f32 0.0, %v1210
  %1212 = vmatprep.mubr.bf16.mxu0 0
  %1213 = vmatmul.mubr.bf16.gmra.mrb[0].mxu0 %v639
  %v1214 = vpop.f32.mrb[0].mxu0
  %v1215 = vadd.f32 0.0, %v1214
  %v1216 = vpop.f32.mrb[0].mxu0
  %v1217 = vadd.f32 0.0, %v1216
  %v1218 = vpop.f32.mrb[0].mxu0
  %v1219 = vadd.f32 0.0, %v1218
  %v1220 = vpop.f32.mrb[0].mxu0
  %v1221 = vadd.f32 0.0, %v1220
  %1222 = vmatprep.mubr.bf16.mxu0 0
  %1223 = vmatmul.mubr.bf16.gmra.mrb[0].mxu0 %v642
  %v1224 = vpop.f32.mrb[0].mxu0
  %v1225 = vadd.f32 0.0, %v1224
  %v1226 = vpop.f32.mrb[0].mxu0
  %v1227 = vadd.f32 0.0, %v1226
  %v1228 = vpop.f32.mrb[0].mxu0
  %v1229 = vadd.f32 0.0, %v1228
  %v1230 = vpop.f32.mrb[0].mxu0
  %v1231 = vadd.f32 0.0, %v1230
  %1232 = vmatprep.mubr.bf16.mxu0 0
  %1233 = vmatmul.mubr.bf16.gmra.mrb[0].mxu0 %v645
  %v1234 = vpop.f32.mrb[0].mxu0
  %v1235 = vadd.f32 0.0, %v1234
  %v1236 = vpop.f32.mrb[0].mxu0
  %v1237 = vadd.f32 0.0, %v1236
  %v1238 = vpop.f32.mrb[0].mxu0
  %v1239 = vadd.f32 0.0, %v1238
  %v1240 = vpop.f32.mrb[0].mxu0
  %v1241 = vadd.f32 0.0, %v1240
  %1242 = vmatprep.mubr.bf16.mxu0 0
  %1243 = vmatmul.mubr.bf16.gmra.mrb[0].mxu0 %v648
  %v1244 = vpop.f32.mrb[0].mxu0
  %v1245 = vadd.f32 0.0, %v1244
  %v1246 = vpop.f32.mrb[0].mxu0
  %v1247 = vadd.f32 0.0, %v1246
  %v1248 = vpop.f32.mrb[0].mxu0
  %v1249 = vadd.f32 0.0, %v1248
  %v1250 = vpop.f32.mrb[0].mxu0
  %v1251 = vadd.f32 0.0, %v1250
  %1252 = vmatprep.mubr.bf16.mxu0 0
  %1253 = vmatmul.mubr.bf16.gmra.mrb[0].mxu0 %v651
  %v1254 = vpop.f32.mrb[0].mxu0
  %v1255 = vadd.f32 0.0, %v1254
  %v1256 = vpop.f32.mrb[0].mxu0
  %v1257 = vadd.f32 0.0, %v1256
  %v1258 = vpop.f32.mrb[0].mxu0
  %v1259 = vadd.f32 0.0, %v1258
  %v1260 = vpop.f32.mrb[0].mxu0
  %v1261 = vadd.f32 0.0, %v1260
  %1262 = vmatprep.mubr.bf16.mxu0 0
  %1263 = vmatmul.mubr.bf16.gmra.mrb[0].mxu0 %v654
  %v1264 = vpop.f32.mrb[0].mxu0
  %v1265 = vadd.f32 0.0, %v1264
  %v1266 = vpop.f32.mrb[0].mxu0
  %v1267 = vadd.f32 0.0, %v1266
  %v1268 = vpop.f32.mrb[0].mxu0
  %v1269 = vadd.f32 0.0, %v1268
  %v1270 = vpop.f32.mrb[0].mxu0
  %v1271 = vadd.f32 0.0, %v1270
  %1272 = vmatprep.mubr.bf16.mxu0 0
  %1273 = vmatmul.mubr.bf16.gmra.mrb[0].mxu0 %v657
  %v1274 = vpop.f32.mrb[0].mxu0
  %v1275 = vadd.f32 0.0, %v1274
  %v1276 = vpop.f32.mrb[0].mxu0
  %v1277 = vadd.f32 0.0, %v1276
  %v1278 = vpop.f32.mrb[0].mxu0
  %v1279 = vadd.f32 0.0, %v1278
  %v1280 = vpop.f32.mrb[0].mxu0
  %v1281 = vadd.f32 0.0, %v1280
  %1282 = vmatprep.mubr.bf16.mxu0 0
  %1283 = vmatmul.mubr.bf16.gmra.mrb[0].mxu0 %v660
  %v1284 = vpop.f32.mrb[0].mxu0
  %v1285 = vadd.f32 0.0, %v1284
  %v1286 = vpop.f32.mrb[0].mxu0
  %v1287 = vadd.f32 0.0, %v1286
  %v1288 = vpop.f32.mrb[0].mxu0
  %v1289 = vadd.f32 0.0, %v1288
  %v1290 = vpop.f32.mrb[0].mxu0
  %v1291 = vadd.f32 0.0, %v1290
  %1292 = vmatprep.mubr.bf16.mxu0 0
  %1293 = vmatmul.mubr.bf16.gmra.mrb[0].mxu0 %v663
  %v1294 = vpop.f32.mrb[0].mxu0
  %v1295 = vadd.f32 0.0, %v1294
  %v1296 = vpop.f32.mrb[0].mxu0
  %v1297 = vadd.f32 0.0, %v1296
  %v1298 = vpop.f32.mrb[0].mxu0
  %v1299 = vadd.f32 0.0, %v1298
  %v1300 = vpop.f32.mrb[0].mxu0
  %v1301 = vadd.f32 0.0, %v1300
  %1302 = vmatprep.mubr.bf16.mxu0 0
  %1303 = vmatmul.mubr.bf16.gmra.mrb[0].mxu0 %v666
  %v1304 = vpop.f32.mrb[0].mxu0
  %v1305 = vadd.f32 0.0, %v1304
  %v1306 = vpop.f32.mrb[0].mxu0
  %v1307 = vadd.f32 0.0, %v1306
  %v1308 = vpop.f32.mrb[0].mxu0
  %v1309 = vadd.f32 0.0, %v1308
  %v1310 = vpop.f32.mrb[0].mxu0
  %v1311 = vadd.f32 0.0, %v1310
  %1312 = vmatprep.mubr.bf16.mxu0 0
  %1313 = vmatmul.mubr.bf16.gmra.mrb[0].mxu0 %v669
  %v1314 = vpop.f32.mrb[0].mxu0
  %v1315 = vadd.f32 0.0, %v1314
  %v1316 = vpop.f32.mrb[0].mxu0
  %v1317 = vadd.f32 0.0, %v1316
  %v1318 = vpop.f32.mrb[0].mxu0
  %v1319 = vadd.f32 0.0, %v1318
  %v1320 = vpop.f32.mrb[0].mxu0
  %v1321 = vadd.f32 0.0, %v1320
  %1322 = vmatprep.mubr.bf16.mxu0 0
  %1323 = vmatmul.mubr.bf16.gmra.mrb[0].mxu0 %v672
  %v1324 = vpop.f32.mrb[0].mxu0
  %v1325 = vadd.f32 0.0, %v1324
  %v1326 = vpop.f32.mrb[0].mxu0
  %v1327 = vadd.f32 0.0, %v1326
  %v1328 = vpop.f32.mrb[0].mxu0
  %v1329 = vadd.f32 0.0, %v1328
  %v1330 = vpop.f32.mrb[0].mxu0
  %v1331 = vadd.f32 0.0, %v1330
  %1332 = vmatprep.mubr.bf16.mxu0 0
  %1333 = vmatmul.mubr.bf16.gmra.mrb[0].mxu0 %v675
  %v1334 = vpop.f32.mrb[0].mxu0
  %v1335 = vadd.f32 0.0, %v1334
  %v1336 = vpop.f32.mrb[0].mxu0
  %v1337 = vadd.f32 0.0, %v1336
  %v1338 = vpop.f32.mrb[0].mxu0
  %v1339 = vadd.f32 0.0, %v1338
  %v1340 = vpop.f32.mrb[0].mxu0
  %v1341 = vadd.f32 0.0, %v1340
  %1342 = vmatprep.mubr.bf16.mxu0 0
  %1343 = vmatmul.mubr.bf16.gmra.mrb[0].mxu0 %v678
  %v1344 = vpop.f32.mrb[0].mxu0
  %v1345 = vadd.f32 0.0, %v1344
  %v1346 = vpop.f32.mrb[0].mxu0
  %v1347 = vadd.f32 0.0, %v1346
  %v1348 = vpop.f32.mrb[0].mxu0
  %v1349 = vadd.f32 0.0, %v1348
  %v1350 = vpop.f32.mrb[0].mxu0
  %v1351 = vadd.f32 0.0, %v1350
  %1352 = vdwg.mxu0
  %v1353 = vld [vmem:[%s2] sm:$0xff]
  %v1354 = vld [vmem:[%s2 + $0x8] sm:$0xff]
  %v1355 = vld [vmem:[%s2 + $0x10] sm:$0xff]
  %v1356 = vld [vmem:[%s2 + $0x18] sm:$0xff]
  %v1357 = vld [vmem:[%s2 + $0x20] sm:$0xff]
  %v1358 = vld [vmem:[%s2 + $0x28] sm:$0xff]
  %v1359 = vld [vmem:[%s2 + $0x30] sm:$0xff]
  %v1360 = vld [vmem:[%s2 + $0x38] sm:$0xff]
  %v1361 = vld [vmem:[%s2 + $0x40] sm:$0xff]
  %v1362 = vld [vmem:[%s2 + $0x48] sm:$0xff]
  %v1363 = vld [vmem:[%s2 + $0x50] sm:$0xff]
  %v1364 = vld [vmem:[%s2 + $0x58] sm:$0xff]
  %v1365 = vld [vmem:[%s2 + $0x60] sm:$0xff]
  %v1366 = vld [vmem:[%s2 + $0x68] sm:$0xff]
  %v1367 = vld [vmem:[%s2 + $0x70] sm:$0xff]
  %v1368 = vld [vmem:[%s2 + $0x78] sm:$0xff]
  %v1369 = vld [vmem:[%s2 + $0x80] sm:$0xff]
  %v1370 = vld [vmem:[%s2 + $0x88] sm:$0xff]
  %v1371 = vld [vmem:[%s2 + $0x90] sm:$0xff]
  %v1372 = vld [vmem:[%s2 + $0x98] sm:$0xff]
  %v1373 = vld [vmem:[%s2 + $0xa0] sm:$0xff]
  %v1374 = vld [vmem:[%s2 + $0xa8] sm:$0xff]
  %v1375 = vld [vmem:[%s2 + $0xb0] sm:$0xff]
  %v1376 = vld [vmem:[%s2 + $0xb8] sm:$0xff]
  %v1377 = vld [vmem:[%s2 + $0xc0] sm:$0xff]
  %v1378 = vld [vmem:[%s2 + $0xc8] sm:$0xff]
  %v1379 = vld [vmem:[%s2 + $0xd0] sm:$0xff]
  %v1380 = vld [vmem:[%s2 + $0xd8] sm:$0xff]
  %v1381 = vld [vmem:[%s2 + $0xe0] sm:$0xff]
  %v1382 = vld [vmem:[%s2 + $0xe8] sm:$0xff]
  %v1383 = vld [vmem:[%s2 + $0xf0] sm:$0xff]
  %v1384 = vld [vmem:[%s2 + $0xf8] sm:$0xff]
  %v1385 = vld [vmem:[%s2 + $0x100] sm:$0xff]
  %v1386 = vld [vmem:[%s2 + $0x108] sm:$0xff]
  %v1387 = vld [vmem:[%s2 + $0x110] sm:$0xff]
  %v1388 = vld [vmem:[%s2 + $0x118] sm:$0xff]
  %v1389 = vld [vmem:[%s2 + $0x120] sm:$0xff]
  %v1390 = vld [vmem:[%s2 + $0x128] sm:$0xff]
  %v1391 = vld [vmem:[%s2 + $0x130] sm:$0xff]
  %v1392 = vld [vmem:[%s2 + $0x138] sm:$0xff]
  %v1393 = vld [vmem:[%s2 + $0x140] sm:$0xff]
  %v1394 = vld [vmem:[%s2 + $0x148] sm:$0xff]
  %v1395 = vld [vmem:[%s2 + $0x150] sm:$0xff]
  %v1396 = vld [vmem:[%s2 + $0x158] sm:$0xff]
  %v1397 = vld [vmem:[%s2 + $0x160] sm:$0xff]
  %v1398 = vld [vmem:[%s2 + $0x168] sm:$0xff]
  %v1399 = vld [vmem:[%s2 + $0x170] sm:$0xff]
  %v1400 = vld [vmem:[%s2 + $0x178] sm:$0xff]
  %v1401 = vld [vmem:[%s2 + $0x180] sm:$0xff]
  %v1402 = vld [vmem:[%s2 + $0x188] sm:$0xff]
  %v1403 = vld [vmem:[%s2 + $0x190] sm:$0xff]
  %v1404 = vld [vmem:[%s2 + $0x198] sm:$0xff]
  %v1405 = vld [vmem:[%s2 + $0x1a0] sm:$0xff]
  %v1406 = vld [vmem:[%s2 + $0x1a8] sm:$0xff]
  %v1407 = vld [vmem:[%s2 + $0x1b0] sm:$0xff]
  %v1408 = vld [vmem:[%s2 + $0x1b8] sm:$0xff]
  %v1409 = vld [vmem:[%s2 + $0x1c0] sm:$0xff]
  %v1410 = vld [vmem:[%s2 + $0x1c8] sm:$0xff]
  %v1411 = vld [vmem:[%s2 + $0x1d0] sm:$0xff]
  %v1412 = vld [vmem:[%s2 + $0x1d8] sm:$0xff]
  %v1413 = vld [vmem:[%s2 + $0x1e0] sm:$0xff]
  %v1414 = vld [vmem:[%s2 + $0x1e8] sm:$0xff]
  %v1415 = vld [vmem:[%s2 + $0x1f0] sm:$0xff]
  %v1416 = vld [vmem:[%s2 + $0x1f8] sm:$0xff]
  %v1417 = vld [vmem:[%s2 + $0x200] sm:$0xff]
  %v1418 = vld [vmem:[%s2 + $0x208] sm:$0xff]
  %v1419 = vld [vmem:[%s2 + $0x210] sm:$0xff]
  %v1420 = vld [vmem:[%s2 + $0x218] sm:$0xff]
  %v1421 = vld [vmem:[%s2 + $0x220] sm:$0xff]
  %v1422 = vld [vmem:[%s2 + $0x228] sm:$0xff]
  %v1423 = vld [vmem:[%s2 + $0x230] sm:$0xff]
  %v1424 = vld [vmem:[%s2 + $0x238] sm:$0xff]
  %v1425 = vld [vmem:[%s2 + $0x240] sm:$0xff]
  %v1426 = vld [vmem:[%s2 + $0x248] sm:$0xff]
  %v1427 = vld [vmem:[%s2 + $0x250] sm:$0xff]
  %v1428 = vld [vmem:[%s2 + $0x258] sm:$0xff]
  %v1429 = vld [vmem:[%s2 + $0x260] sm:$0xff]
  %v1430 = vld [vmem:[%s2 + $0x268] sm:$0xff]
  %v1431 = vld [vmem:[%s2 + $0x270] sm:$0xff]
  %v1432 = vld [vmem:[%s2 + $0x278] sm:$0xff]
  %v1433 = vld [vmem:[%s2 + $0x280] sm:$0xff]
  %v1434 = vld [vmem:[%s2 + $0x288] sm:$0xff]
  %v1435 = vld [vmem:[%s2 + $0x290] sm:$0xff]
  %v1436 = vld [vmem:[%s2 + $0x298] sm:$0xff]
  %v1437 = vld [vmem:[%s2 + $0x2a0] sm:$0xff]
  %v1438 = vld [vmem:[%s2 + $0x2a8] sm:$0xff]
  %v1439 = vld [vmem:[%s2 + $0x2b0] sm:$0xff]
  %v1440 = vld [vmem:[%s2 + $0x2b8] sm:$0xff]
  %v1441 = vld [vmem:[%s2 + $0x2c0] sm:$0xff]
  %v1442 = vld [vmem:[%s2 + $0x2c8] sm:$0xff]
  %v1443 = vld [vmem:[%s2 + $0x2d0] sm:$0xff]
  %v1444 = vld [vmem:[%s2 + $0x2d8] sm:$0xff]
  %v1445 = vld [vmem:[%s2 + $0x2e0] sm:$0xff]
  %v1446 = vld [vmem:[%s2 + $0x2e8] sm:$0xff]
  %v1447 = vld [vmem:[%s2 + $0x2f0] sm:$0xff]
  %v1448 = vld [vmem:[%s2 + $0x2f8] sm:$0xff]
  %v1449 = vld [vmem:[%s2 + $0x300] sm:$0xff]
  %v1450 = vld [vmem:[%s2 + $0x308] sm:$0xff]
  %v1451 = vld [vmem:[%s2 + $0x310] sm:$0xff]
  %v1452 = vld [vmem:[%s2 + $0x318] sm:$0xff]
  %v1453 = vld [vmem:[%s2 + $0x320] sm:$0xff]
  %v1454 = vld [vmem:[%s2 + $0x328] sm:$0xff]
  %v1455 = vld [vmem:[%s2 + $0x330] sm:$0xff]
  %v1456 = vld [vmem:[%s2 + $0x338] sm:$0xff]
  %v1457 = vld [vmem:[%s2 + $0x340] sm:$0xff]
  %v1458 = vld [vmem:[%s2 + $0x348] sm:$0xff]
  %v1459 = vld [vmem:[%s2 + $0x350] sm:$0xff]
  %v1460 = vld [vmem:[%s2 + $0x358] sm:$0xff]
  %v1461 = vld [vmem:[%s2 + $0x360] sm:$0xff]
  %v1462 = vld [vmem:[%s2 + $0x368] sm:$0xff]
  %v1463 = vld [vmem:[%s2 + $0x370] sm:$0xff]
  %v1464 = vld [vmem:[%s2 + $0x378] sm:$0xff]
  %v1465 = vld [vmem:[%s2 + $0x380] sm:$0xff]
  %v1466 = vld [vmem:[%s2 + $0x388] sm:$0xff]
  %v1467 = vld [vmem:[%s2 + $0x390] sm:$0xff]
  %v1468 = vld [vmem:[%s2 + $0x398] sm:$0xff]
  %v1469 = vld [vmem:[%s2 + $0x3a0] sm:$0xff]
  %v1470 = vld [vmem:[%s2 + $0x3a8] sm:$0xff]
  %v1471 = vld [vmem:[%s2 + $0x3b0] sm:$0xff]
  %v1472 = vld [vmem:[%s2 + $0x3b8] sm:$0xff]
  %v1473 = vld [vmem:[%s2 + $0x3c0] sm:$0xff]
  %v1474 = vld [vmem:[%s2 + $0x3c8] sm:$0xff]
  %v1475 = vld [vmem:[%s2 + $0x3d0] sm:$0xff]
  %v1476 = vld [vmem:[%s2 + $0x3d8] sm:$0xff]
  %v1477 = vld [vmem:[%s2 + $0x3e0] sm:$0xff]
  %v1478 = vld [vmem:[%s2 + $0x3e8] sm:$0xff]
  %v1479 = vld [vmem:[%s2 + $0x3f0] sm:$0xff]
  %v1480 = vld [vmem:[%s2 + $0x3f8] sm:$0xff]
  %v1481 = vld [vmem:[%s2 + $0x400] sm:$0xff]
  %v1482 = vld [vmem:[%s2 + $0x408] sm:$0xff]
  %v1483 = vld [vmem:[%s2 + $0x410] sm:$0xff]
  %v1484 = vld [vmem:[%s2 + $0x418] sm:$0xff]
  %v1485 = vld [vmem:[%s2 + $0x420] sm:$0xff]
  %v1486 = vld [vmem:[%s2 + $0x428] sm:$0xff]
  %v1487 = vld [vmem:[%s2 + $0x430] sm:$0xff]
  %v1488 = vld [vmem:[%s2 + $0x438] sm:$0xff]
  %v1489 = vld [vmem:[%s2 + $0x440] sm:$0xff]
  %v1490 = vld [vmem:[%s2 + $0x448] sm:$0xff]
  %v1491 = vld [vmem:[%s2 + $0x450] sm:$0xff]
  %v1492 = vld [vmem:[%s2 + $0x458] sm:$0xff]
  %v1493 = vld [vmem:[%s2 + $0x460] sm:$0xff]
  %v1494 = vld [vmem:[%s2 + $0x468] sm:$0xff]
  %v1495 = vld [vmem:[%s2 + $0x470] sm:$0xff]
  %v1496 = vld [vmem:[%s2 + $0x478] sm:$0xff]
  %v1497 = vld [vmem:[%s2 + $0x480] sm:$0xff]
  %v1498 = vld [vmem:[%s2 + $0x488] sm:$0xff]
  %v1499 = vld [vmem:[%s2 + $0x490] sm:$0xff]
  %v1500 = vld [vmem:[%s2 + $0x498] sm:$0xff]
  %v1501 = vld [vmem:[%s2 + $0x4a0] sm:$0xff]
  %v1502 = vld [vmem:[%s2 + $0x4a8] sm:$0xff]
  %v1503 = vld [vmem:[%s2 + $0x4b0] sm:$0xff]
  %v1504 = vld [vmem:[%s2 + $0x4b8] sm:$0xff]
  %v1505 = vld [vmem:[%s2 + $0x4c0] sm:$0xff]
  %v1506 = vld [vmem:[%s2 + $0x4c8] sm:$0xff]
  %v1507 = vld [vmem:[%s2 + $0x4d0] sm:$0xff]
  %v1508 = vld [vmem:[%s2 + $0x4d8] sm:$0xff]
  %v1509 = vld [vmem:[%s2 + $0x4e0] sm:$0xff]
  %v1510 = vld [vmem:[%s2 + $0x4e8] sm:$0xff]
  %v1511 = vld [vmem:[%s2 + $0x4f0] sm:$0xff]
  %v1512 = vld [vmem:[%s2 + $0x4f8] sm:$0xff]
  %v1513 = vld [vmem:[%s2 + $0x500] sm:$0xff]
  %v1514 = vld [vmem:[%s2 + $0x508] sm:$0xff]
  %v1515 = vld [vmem:[%s2 + $0x510] sm:$0xff]
  %v1516 = vld [vmem:[%s2 + $0x518] sm:$0xff]
  %v1517 = vld [vmem:[%s2 + $0x520] sm:$0xff]
  %v1518 = vld [vmem:[%s2 + $0x528] sm:$0xff]
  %v1519 = vld [vmem:[%s2 + $0x530] sm:$0xff]
  %v1520 = vld [vmem:[%s2 + $0x538] sm:$0xff]
  %v1521 = vld [vmem:[%s2 + $0x540] sm:$0xff]
  %v1522 = vld [vmem:[%s2 + $0x548] sm:$0xff]
  %v1523 = vld [vmem:[%s2 + $0x550] sm:$0xff]
  %v1524 = vld [vmem:[%s2 + $0x558] sm:$0xff]
  %v1525 = vld [vmem:[%s2 + $0x560] sm:$0xff]
  %v1526 = vld [vmem:[%s2 + $0x568] sm:$0xff]
  %v1527 = vld [vmem:[%s2 + $0x570] sm:$0xff]
  %v1528 = vld [vmem:[%s2 + $0x578] sm:$0xff]
  %v1529 = vld [vmem:[%s2 + $0x580] sm:$0xff]
  %v1530 = vld [vmem:[%s2 + $0x588] sm:$0xff]
  %v1531 = vld [vmem:[%s2 + $0x590] sm:$0xff]
  %v1532 = vld [vmem:[%s2 + $0x598] sm:$0xff]
  %v1533 = vld [vmem:[%s2 + $0x5a0] sm:$0xff]
  %v1534 = vld [vmem:[%s2 + $0x5a8] sm:$0xff]
  %v1535 = vld [vmem:[%s2 + $0x5b0] sm:$0xff]
  %v1536 = vld [vmem:[%s2 + $0x5b8] sm:$0xff]
  %v1537 = vld [vmem:[%s2 + $0x5c0] sm:$0xff]
  %v1538 = vld [vmem:[%s2 + $0x5c8] sm:$0xff]
  %v1539 = vld [vmem:[%s2 + $0x5d0] sm:$0xff]
  %v1540 = vld [vmem:[%s2 + $0x5d8] sm:$0xff]
  %v1541 = vld [vmem:[%s2 + $0x5e0] sm:$0xff]
  %v1542 = vld [vmem:[%s2 + $0x5e8] sm:$0xff]
  %v1543 = vld [vmem:[%s2 + $0x5f0] sm:$0xff]
  %v1544 = vld [vmem:[%s2 + $0x5f8] sm:$0xff]
  %v1545 = vpack.c.bf16 %v719, %v715
  %v1546 = vpack.c.bf16 %v721, %v717
  %v1547 = vpack.c.bf16 %v729, %v725
  %v1548 = vpack.c.bf16 %v731, %v727
  %v1549 = vpack.c.bf16 %v739, %v735
  %v1550 = vpack.c.bf16 %v741, %v737
  %v1551 = vpack.c.bf16 %v749, %v745
  %v1552 = vpack.c.bf16 %v751, %v747
  %v1553 = vpack.c.bf16 %v759, %v755
  %v1554 = vpack.c.bf16 %v761, %v757
  %v1555 = vpack.c.bf16 %v769, %v765
  %v1556 = vpack.c.bf16 %v771, %v767
  %v1557 = vpack.c.bf16 %v779, %v775
  %v1558 = vpack.c.bf16 %v781, %v777
  %v1559 = vpack.c.bf16 %v789, %v785
  %v1560 = vpack.c.bf16 %v791, %v787
  %v1561 = vpack.c.bf16 %v799, %v795
  %v1562 = vpack.c.bf16 %v801, %v797
  %v1563 = vpack.c.bf16 %v809, %v805
  %v1564 = vpack.c.bf16 %v811, %v807
  %v1565 = vpack.c.bf16 %v819, %v815
  %v1566 = vpack.c.bf16 %v821, %v817
  %v1567 = vpack.c.bf16 %v829, %v825
  %v1568 = vpack.c.bf16 %v831, %v827
  %v1569 = vpack.c.bf16 %v839, %v835
  %v1570 = vpack.c.bf16 %v841, %v837
  %v1571 = vpack.c.bf16 %v849, %v845
  %v1572 = vpack.c.bf16 %v851, %v847
  %v1573 = vpack.c.bf16 %v859, %v855
  %v1574 = vpack.c.bf16 %v861, %v857
  %v1575 = vpack.c.bf16 %v869, %v865
  %v1576 = vpack.c.bf16 %v871, %v867
  %v1577 = vpack.c.bf16 %v879, %v875
  %v1578 = vpack.c.bf16 %v881, %v877
  %v1579 = vpack.c.bf16 %v889, %v885
  %v1580 = vpack.c.bf16 %v891, %v887
  %v1581 = vpack.c.bf16 %v899, %v895
  %v1582 = vpack.c.bf16 %v901, %v897
  %v1583 = vpack.c.bf16 %v909, %v905
  %v1584 = vpack.c.bf16 %v911, %v907
  %v1585 = vpack.c.bf16 %v919, %v915
  %v1586 = vpack.c.bf16 %v921, %v917
  %v1587 = vpack.c.bf16 %v929, %v925
  %v1588 = vpack.c.bf16 %v931, %v927
  %v1589 = vpack.c.bf16 %v939, %v935
  %v1590 = vpack.c.bf16 %v941, %v937
  %v1591 = vpack.c.bf16 %v949, %v945
  %v1592 = vpack.c.bf16 %v951, %v947
  %v1593 = vpack.c.bf16 %v959, %v955
  %v1594 = vpack.c.bf16 %v961, %v957
  %v1595 = vpack.c.bf16 %v969, %v965
  %v1596 = vpack.c.bf16 %v971, %v967
  %v1597 = vpack.c.bf16 %v979, %v975
  %v1598 = vpack.c.bf16 %v981, %v977
  %v1599 = vpack.c.bf16 %v989, %v985
  %v1600 = vpack.c.bf16 %v991, %v987
  %v1601 = vpack.c.bf16 %v999, %v995
  %v1602 = vpack.c.bf16 %v1001, %v997
  %v1603 = vpack.c.bf16 %v1009, %v1005
  %v1604 = vpack.c.bf16 %v1011, %v1007
  %v1605 = vpack.c.bf16 %v1019, %v1015
  %v1606 = vpack.c.bf16 %v1021, %v1017
  %v1607 = vpack.c.bf16 %v1029, %v1025
  %v1608 = vpack.c.bf16 %v1031, %v1027
  %v1609 = vpack.c.bf16 %v1039, %v1035
  %v1610 = vpack.c.bf16 %v1041, %v1037
  %v1611 = vpack.c.bf16 %v1049, %v1045
  %v1612 = vpack.c.bf16 %v1051, %v1047
  %v1613 = vpack.c.bf16 %v1059, %v1055
  %v1614 = vpack.c.bf16 %v1061, %v1057
  %v1615 = vpack.c.bf16 %v1069, %v1065
  %v1616 = vpack.c.bf16 %v1071, %v1067
  %v1617 = vpack.c.bf16 %v1079, %v1075
  %v1618 = vpack.c.bf16 %v1081, %v1077
  %v1619 = vpack.c.bf16 %v1089, %v1085
  %v1620 = vpack.c.bf16 %v1091, %v1087
  %v1621 = vpack.c.bf16 %v1099, %v1095
  %v1622 = vpack.c.bf16 %v1101, %v1097
  %v1623 = vpack.c.bf16 %v1109, %v1105
  %v1624 = vpack.c.bf16 %v1111, %v1107
  %v1625 = vpack.c.bf16 %v1119, %v1115
  %v1626 = vpack.c.bf16 %v1121, %v1117
  %v1627 = vpack.c.bf16 %v1129, %v1125
  %v1628 = vpack.c.bf16 %v1131, %v1127
  %v1629 = vpack.c.bf16 %v1139, %v1135
  %v1630 = vpack.c.bf16 %v1141, %v1137
  %v1631 = vpack.c.bf16 %v1149, %v1145
  %v1632 = vpack.c.bf16 %v1151, %v1147
  %v1633 = vpack.c.bf16 %v1159, %v1155
  %v1634 = vpack.c.bf16 %v1161, %v1157
  %v1635 = vpack.c.bf16 %v1169, %v1165
  %v1636 = vpack.c.bf16 %v1171, %v1167
  %v1637 = vpack.c.bf16 %v1179, %v1175
  %v1638 = vpack.c.bf16 %v1181, %v1177
  %v1639 = vpack.c.bf16 %v1189, %v1185
  %v1640 = vpack.c.bf16 %v1191, %v1187
  %v1641 = vpack.c.bf16 %v1199, %v1195
  %v1642 = vpack.c.bf16 %v1201, %v1197
  %v1643 = vpack.c.bf16 %v1209, %v1205
  %v1644 = vpack.c.bf16 %v1211, %v1207
  %v1645 = vpack.c.bf16 %v1219, %v1215
  %v1646 = vpack.c.bf16 %v1221, %v1217
  %v1647 = vpack.c.bf16 %v1229, %v1225
  %v1648 = vpack.c.bf16 %v1231, %v1227
  %v1649 = vpack.c.bf16 %v1239, %v1235
  %v1650 = vpack.c.bf16 %v1241, %v1237
  %v1651 = vpack.c.bf16 %v1249, %v1245
  %v1652 = vpack.c.bf16 %v1251, %v1247
  %v1653 = vpack.c.bf16 %v1259, %v1255
  %v1654 = vpack.c.bf16 %v1261, %v1257
  %v1655 = vpack.c.bf16 %v1269, %v1265
  %v1656 = vpack.c.bf16 %v1271, %v1267
  %v1657 = vpack.c.bf16 %v1279, %v1275
  %v1658 = vpack.c.bf16 %v1281, %v1277
  %v1659 = vpack.c.bf16 %v1289, %v1285
  %v1660 = vpack.c.bf16 %v1291, %v1287
  %v1661 = vpack.c.bf16 %v1299, %v1295
  %v1662 = vpack.c.bf16 %v1301, %v1297
  %v1663 = vpack.c.bf16 %v1309, %v1305
  %v1664 = vpack.c.bf16 %v1311, %v1307
  %v1665 = vpack.c.bf16 %v1319, %v1315
  %v1666 = vpack.c.bf16 %v1321, %v1317
  %v1667 = vpack.c.bf16 %v1329, %v1325
  %v1668 = vpack.c.bf16 %v1331, %v1327
  %v1669 = vpack.c.bf16 %v1339, %v1335
  %v1670 = vpack.c.bf16 %v1341, %v1337
  %v1671 = vpack.c.bf16 %v1349, %v1345
  %v1672 = vpack.c.bf16 %v1351, %v1347
  %v1865 = vunpack.c.l.b16 %v1353
  %v1866 = vunpack.c.h.b16 %v1353
  %v1867 = vunpack.c.l.b16 %v1354
  %v1868 = vunpack.c.h.b16 %v1354
  %v1869 = vunpack.c.l.b16 %v1355
  %v1870 = vunpack.c.h.b16 %v1355
  %v1871 = vunpack.c.l.b16 %v1356
  %v1872 = vunpack.c.h.b16 %v1356
  %v1873 = vunpack.c.l.b16 %v1357
  %v1874 = vunpack.c.h.b16 %v1357
  %v1875 = vunpack.c.l.b16 %v1358
  %v1876 = vunpack.c.h.b16 %v1358
  %v1877 = vunpack.c.l.b16 %v1359
  %v1878 = vunpack.c.h.b16 %v1359
  %v1879 = vunpack.c.l.b16 %v1360
  %v1880 = vunpack.c.h.b16 %v1360
  %v1881 = vunpack.c.l.b16 %v1361
  %v1882 = vunpack.c.h.b16 %v1361
  %v1883 = vunpack.c.l.b16 %v1362
  %v1884 = vunpack.c.h.b16 %v1362
  %v1885 = vunpack.c.l.b16 %v1363
  %v1886 = vunpack.c.h.b16 %v1363
  %v1887 = vunpack.c.l.b16 %v1364
  %v1888 = vunpack.c.h.b16 %v1364
  %v1889 = vunpack.c.l.b16 %v1365
  %v1890 = vunpack.c.h.b16 %v1365
  %v1891 = vunpack.c.l.b16 %v1366
  %v1892 = vunpack.c.h.b16 %v1366
  %v1893 = vunpack.c.l.b16 %v1367
  %v1894 = vunpack.c.h.b16 %v1367
  %v1895 = vunpack.c.l.b16 %v1368
  %v1896 = vunpack.c.h.b16 %v1368
  %v1897 = vunpack.c.l.b16 %v1369
  %v1898 = vunpack.c.h.b16 %v1369
  %v1899 = vunpack.c.l.b16 %v1370
  %v1900 = vunpack.c.h.b16 %v1370
  %v1901 = vunpack.c.l.b16 %v1371
  %v1902 = vunpack.c.h.b16 %v1371
  %v1903 = vunpack.c.l.b16 %v1372
  %v1904 = vunpack.c.h.b16 %v1372
  %v1905 = vunpack.c.l.b16 %v1373
  %v1906 = vunpack.c.h.b16 %v1373
  %v1907 = vunpack.c.l.b16 %v1374
  %v1908 = vunpack.c.h.b16 %v1374
  %v1909 = vunpack.c.l.b16 %v1375
  %v1910 = vunpack.c.h.b16 %v1375
  %v1911 = vunpack.c.l.b16 %v1376
  %v1912 = vunpack.c.h.b16 %v1376
  %v1913 = vunpack.c.l.b16 %v1377
  %v1914 = vunpack.c.h.b16 %v1377
  %v1915 = vunpack.c.l.b16 %v1378
  %v1916 = vunpack.c.h.b16 %v1378
  %v1917 = vunpack.c.l.b16 %v1379
  %v1918 = vunpack.c.h.b16 %v1379
  %v1919 = vunpack.c.l.b16 %v1380
  %v1920 = vunpack.c.h.b16 %v1380
  %v1921 = vunpack.c.l.b16 %v1381
  %v1922 = vunpack.c.h.b16 %v1381
  %v1923 = vunpack.c.l.b16 %v1382
  %v1924 = vunpack.c.h.b16 %v1382
  %v1925 = vunpack.c.l.b16 %v1383
  %v1926 = vunpack.c.h.b16 %v1383
  %v1927 = vunpack.c.l.b16 %v1384
  %v1928 = vunpack.c.h.b16 %v1384
  %v1929 = vunpack.c.l.b16 %v1385
  %v1930 = vunpack.c.h.b16 %v1385
  %v1931 = vunpack.c.l.b16 %v1386
  %v1932 = vunpack.c.h.b16 %v1386
  %v1933 = vunpack.c.l.b16 %v1387
  %v1934 = vunpack.c.h.b16 %v1387
  %v1935 = vunpack.c.l.b16 %v1388
  %v1936 = vunpack.c.h.b16 %v1388
  %v1937 = vunpack.c.l.b16 %v1389
  %v1938 = vunpack.c.h.b16 %v1389
  %v1939 = vunpack.c.l.b16 %v1390
  %v1940 = vunpack.c.h.b16 %v1390
  %v1941 = vunpack.c.l.b16 %v1391
  %v1942 = vunpack.c.h.b16 %v1391
  %v1943 = vunpack.c.l.b16 %v1392
  %v1944 = vunpack.c.h.b16 %v1392
  %v1945 = vunpack.c.l.b16 %v1393
  %v1946 = vunpack.c.h.b16 %v1393
  %v1947 = vunpack.c.l.b16 %v1394
  %v1948 = vunpack.c.h.b16 %v1394
  %v1949 = vunpack.c.l.b16 %v1395
  %v1950 = vunpack.c.h.b16 %v1395
  %v1951 = vunpack.c.l.b16 %v1396
  %v1952 = vunpack.c.h.b16 %v1396
  %v1953 = vunpack.c.l.b16 %v1397
  %v1954 = vunpack.c.h.b16 %v1397
  %v1955 = vunpack.c.l.b16 %v1398
  %v1956 = vunpack.c.h.b16 %v1398
  %v1957 = vunpack.c.l.b16 %v1399
  %v1958 = vunpack.c.h.b16 %v1399
  %v1959 = vunpack.c.l.b16 %v1400
  %v1960 = vunpack.c.h.b16 %v1400
  %v1961 = vunpack.c.l.b16 %v1401
  %v1962 = vunpack.c.h.b16 %v1401
  %v1963 = vunpack.c.l.b16 %v1402
  %v1964 = vunpack.c.h.b16 %v1402
  %v1965 = vunpack.c.l.b16 %v1403
  %v1966 = vunpack.c.h.b16 %v1403
  %v1967 = vunpack.c.l.b16 %v1404
  %v1968 = vunpack.c.h.b16 %v1404
  %v1969 = vunpack.c.l.b16 %v1405
  %v1970 = vunpack.c.h.b16 %v1405
  %v1971 = vunpack.c.l.b16 %v1406
  %v1972 = vunpack.c.h.b16 %v1406
  %v1973 = vunpack.c.l.b16 %v1407
  %v1974 = vunpack.c.h.b16 %v1407
  %v1975 = vunpack.c.l.b16 %v1408
  %v1976 = vunpack.c.h.b16 %v1408
  %v1977 = vunpack.c.l.b16 %v1409
  %v1978 = vunpack.c.h.b16 %v1409
  %v1979 = vunpack.c.l.b16 %v1410
  %v1980 = vunpack.c.h.b16 %v1410
  %v1981 = vunpack.c.l.b16 %v1411
  %v1982 = vunpack.c.h.b16 %v1411
  %v1983 = vunpack.c.l.b16 %v1412
  %v1984 = vunpack.c.h.b16 %v1412
  %v1985 = vunpack.c.l.b16 %v1413
  %v1986 = vunpack.c.h.b16 %v1413
  %v1987 = vunpack.c.l.b16 %v1414
  %v1988 = vunpack.c.h.b16 %v1414
  %v1989 = vunpack.c.l.b16 %v1415
  %v1990 = vunpack.c.h.b16 %v1415
  %v1991 = vunpack.c.l.b16 %v1416
  %v1992 = vunpack.c.h.b16 %v1416
  %v1993 = vunpack.c.l.b16 %v1417
  %v1994 = vunpack.c.h.b16 %v1417
  %v1995 = vunpack.c.l.b16 %v1418
  %v1996 = vunpack.c.h.b16 %v1418
  %v1997 = vunpack.c.l.b16 %v1419
  %v1998 = vunpack.c.h.b16 %v1419
  %v1999 = vunpack.c.l.b16 %v1420
  %v2000 = vunpack.c.h.b16 %v1420
  %v2001 = vunpack.c.l.b16 %v1421
  %v2002 = vunpack.c.h.b16 %v1421
  %v2003 = vunpack.c.l.b16 %v1422
  %v2004 = vunpack.c.h.b16 %v1422
  %v2005 = vunpack.c.l.b16 %v1423
  %v2006 = vunpack.c.h.b16 %v1423
  %v2007 = vunpack.c.l.b16 %v1424
  %v2008 = vunpack.c.h.b16 %v1424
  %v2009 = vunpack.c.l.b16 %v1425
  %v2010 = vunpack.c.h.b16 %v1425
  %v2011 = vunpack.c.l.b16 %v1426
  %v2012 = vunpack.c.h.b16 %v1426
  %v2013 = vunpack.c.l.b16 %v1427
  %v2014 = vunpack.c.h.b16 %v1427
  %v2015 = vunpack.c.l.b16 %v1428
  %v2016 = vunpack.c.h.b16 %v1428
  %v2017 = vunpack.c.l.b16 %v1429
  %v2018 = vunpack.c.h.b16 %v1429
  %v2019 = vunpack.c.l.b16 %v1430
  %v2020 = vunpack.c.h.b16 %v1430
  %v2021 = vunpack.c.l.b16 %v1431
  %v2022 = vunpack.c.h.b16 %v1431
  %v2023 = vunpack.c.l.b16 %v1432
  %v2024 = vunpack.c.h.b16 %v1432
  %v2025 = vunpack.c.l.b16 %v1433
  %v2026 = vunpack.c.h.b16 %v1433
  %v2027 = vunpack.c.l.b16 %v1434
  %v2028 = vunpack.c.h.b16 %v1434
  %v2029 = vunpack.c.l.b16 %v1435
  %v2030 = vunpack.c.h.b16 %v1435
  %v2031 = vunpack.c.l.b16 %v1436
  %v2032 = vunpack.c.h.b16 %v1436
  %v2033 = vunpack.c.l.b16 %v1437
  %v2034 = vunpack.c.h.b16 %v1437
  %v2035 = vunpack.c.l.b16 %v1438
  %v2036 = vunpack.c.h.b16 %v1438
  %v2037 = vunpack.c.l.b16 %v1439
  %v2038 = vunpack.c.h.b16 %v1439
  %v2039 = vunpack.c.l.b16 %v1440
  %v2040 = vunpack.c.h.b16 %v1440
  %v2041 = vunpack.c.l.b16 %v1441
  %v2042 = vunpack.c.h.b16 %v1441
  %v2043 = vunpack.c.l.b16 %v1442
  %v2044 = vunpack.c.h.b16 %v1442
  %v2045 = vunpack.c.l.b16 %v1443
  %v2046 = vunpack.c.h.b16 %v1443
  %v2047 = vunpack.c.l.b16 %v1444
  %v2048 = vunpack.c.h.b16 %v1444
  %v2049 = vunpack.c.l.b16 %v1445
  %v2050 = vunpack.c.h.b16 %v1445
  %v2051 = vunpack.c.l.b16 %v1446
  %v2052 = vunpack.c.h.b16 %v1446
  %v2053 = vunpack.c.l.b16 %v1447
  %v2054 = vunpack.c.h.b16 %v1447
  %v2055 = vunpack.c.l.b16 %v1448
  %v2056 = vunpack.c.h.b16 %v1448
  %v2057 = vunpack.c.l.b16 %v1449
  %v2058 = vunpack.c.h.b16 %v1449
  %v2059 = vunpack.c.l.b16 %v1450
  %v2060 = vunpack.c.h.b16 %v1450
  %v2061 = vunpack.c.l.b16 %v1451
  %v2062 = vunpack.c.h.b16 %v1451
  %v2063 = vunpack.c.l.b16 %v1452
  %v2064 = vunpack.c.h.b16 %v1452
  %v2065 = vunpack.c.l.b16 %v1453
  %v2066 = vunpack.c.h.b16 %v1453
  %v2067 = vunpack.c.l.b16 %v1454
  %v2068 = vunpack.c.h.b16 %v1454
  %v2069 = vunpack.c.l.b16 %v1455
  %v2070 = vunpack.c.h.b16 %v1455
  %v2071 = vunpack.c.l.b16 %v1456
  %v2072 = vunpack.c.h.b16 %v1456
  %v2073 = vunpack.c.l.b16 %v1457
  %v2074 = vunpack.c.h.b16 %v1457
  %v2075 = vunpack.c.l.b16 %v1458
  %v2076 = vunpack.c.h.b16 %v1458
  %v2077 = vunpack.c.l.b16 %v1459
  %v2078 = vunpack.c.h.b16 %v1459
  %v2079 = vunpack.c.l.b16 %v1460
  %v2080 = vunpack.c.h.b16 %v1460
  %v2081 = vunpack.c.l.b16 %v1461
  %v2082 = vunpack.c.h.b16 %v1461
  %v2083 = vunpack.c.l.b16 %v1462
  %v2084 = vunpack.c.h.b16 %v1462
  %v2085 = vunpack.c.l.b16 %v1463
  %v2086 = vunpack.c.h.b16 %v1463
  %v2087 = vunpack.c.l.b16 %v1464
  %v2088 = vunpack.c.h.b16 %v1464
  %v2089 = vunpack.c.l.b16 %v1465
  %v2090 = vunpack.c.h.b16 %v1465
  %v2091 = vunpack.c.l.b16 %v1466
  %v2092 = vunpack.c.h.b16 %v1466
  %v2093 = vunpack.c.l.b16 %v1467
  %v2094 = vunpack.c.h.b16 %v1467
  %v2095 = vunpack.c.l.b16 %v1468
  %v2096 = vunpack.c.h.b16 %v1468
  %v2097 = vunpack.c.l.b16 %v1469
  %v2098 = vunpack.c.h.b16 %v1469
  %v2099 = vunpack.c.l.b16 %v1470
  %v2100 = vunpack.c.h.b16 %v1470
  %v2101 = vunpack.c.l.b16 %v1471
  %v2102 = vunpack.c.h.b16 %v1471
  %v2103 = vunpack.c.l.b16 %v1472
  %v2104 = vunpack.c.h.b16 %v1472
  %v2105 = vunpack.c.l.b16 %v1473
  %v2106 = vunpack.c.h.b16 %v1473
  %v2107 = vunpack.c.l.b16 %v1474
  %v2108 = vunpack.c.h.b16 %v1474
  %v2109 = vunpack.c.l.b16 %v1475
  %v2110 = vunpack.c.h.b16 %v1475
  %v2111 = vunpack.c.l.b16 %v1476
  %v2112 = vunpack.c.h.b16 %v1476
  %v2113 = vunpack.c.l.b16 %v1477
  %v2114 = vunpack.c.h.b16 %v1477
  %v2115 = vunpack.c.l.b16 %v1478
  %v2116 = vunpack.c.h.b16 %v1478
  %v2117 = vunpack.c.l.b16 %v1479
  %v2118 = vunpack.c.h.b16 %v1479
  %v2119 = vunpack.c.l.b16 %v1480
  %v2120 = vunpack.c.h.b16 %v1480
  %v2121 = vunpack.c.l.b16 %v1481
  %v2122 = vunpack.c.h.b16 %v1481
  %v2123 = vunpack.c.l.b16 %v1482
  %v2124 = vunpack.c.h.b16 %v1482
  %v2125 = vunpack.c.l.b16 %v1483
  %v2126 = vunpack.c.h.b16 %v1483
  %v2127 = vunpack.c.l.b16 %v1484
  %v2128 = vunpack.c.h.b16 %v1484
  %v2129 = vunpack.c.l.b16 %v1485
  %v2130 = vunpack.c.h.b16 %v1485
  %v2131 = vunpack.c.l.b16 %v1486
  %v2132 = vunpack.c.h.b16 %v1486
  %v2133 = vunpack.c.l.b16 %v1487
  %v2134 = vunpack.c.h.b16 %v1487
  %v2135 = vunpack.c.l.b16 %v1488
  %v2136 = vunpack.c.h.b16 %v1488
  %v2137 = vunpack.c.l.b16 %v1489
  %v2138 = vunpack.c.h.b16 %v1489
  %v2139 = vunpack.c.l.b16 %v1490
  %v2140 = vunpack.c.h.b16 %v1490
  %v2141 = vunpack.c.l.b16 %v1491
  %v2142 = vunpack.c.h.b16 %v1491
  %v2143 = vunpack.c.l.b16 %v1492
  %v2144 = vunpack.c.h.b16 %v1492
  %v2145 = vunpack.c.l.b16 %v1493
  %v2146 = vunpack.c.h.b16 %v1493
  %v2147 = vunpack.c.l.b16 %v1494
  %v2148 = vunpack.c.h.b16 %v1494
  %v2149 = vunpack.c.l.b16 %v1495
  %v2150 = vunpack.c.h.b16 %v1495
  %v2151 = vunpack.c.l.b16 %v1496
  %v2152 = vunpack.c.h.b16 %v1496
  %v2153 = vunpack.c.l.b16 %v1497
  %v2154 = vunpack.c.h.b16 %v1497
  %v2155 = vunpack.c.l.b16 %v1498
  %v2156 = vunpack.c.h.b16 %v1498
  %v2157 = vunpack.c.l.b16 %v1499
  %v2158 = vunpack.c.h.b16 %v1499
  %v2159 = vunpack.c.l.b16 %v1500
  %v2160 = vunpack.c.h.b16 %v1500
  %v2161 = vunpack.c.l.b16 %v1501
  %v2162 = vunpack.c.h.b16 %v1501
  %v2163 = vunpack.c.l.b16 %v1502
  %v2164 = vunpack.c.h.b16 %v1502
  %v2165 = vunpack.c.l.b16 %v1503
  %v2166 = vunpack.c.h.b16 %v1503
  %v2167 = vunpack.c.l.b16 %v1504
  %v2168 = vunpack.c.h.b16 %v1504
  %v2169 = vunpack.c.l.b16 %v1505
  %v2170 = vunpack.c.h.b16 %v1505
  %v2171 = vunpack.c.l.b16 %v1506
  %v2172 = vunpack.c.h.b16 %v1506
  %v2173 = vunpack.c.l.b16 %v1507
  %v2174 = vunpack.c.h.b16 %v1507
  %v2175 = vunpack.c.l.b16 %v1508
  %v2176 = vunpack.c.h.b16 %v1508
  %v2177 = vunpack.c.l.b16 %v1509
  %v2178 = vunpack.c.h.b16 %v1509
  %v2179 = vunpack.c.l.b16 %v1510
  %v2180 = vunpack.c.h.b16 %v1510
  %v2181 = vunpack.c.l.b16 %v1511
  %v2182 = vunpack.c.h.b16 %v1511
  %v2183 = vunpack.c.l.b16 %v1512
  %v2184 = vunpack.c.h.b16 %v1512
  %v2185 = vunpack.c.l.b16 %v1513
  %v2186 = vunpack.c.h.b16 %v1513
  %v2187 = vunpack.c.l.b16 %v1514
  %v2188 = vunpack.c.h.b16 %v1514
  %v2189 = vunpack.c.l.b16 %v1515
  %v2190 = vunpack.c.h.b16 %v1515
  %v2191 = vunpack.c.l.b16 %v1516
  %v2192 = vunpack.c.h.b16 %v1516
  %v2193 = vunpack.c.l.b16 %v1517
  %v2194 = vunpack.c.h.b16 %v1517
  %v2195 = vunpack.c.l.b16 %v1518
  %v2196 = vunpack.c.h.b16 %v1518
  %v2197 = vunpack.c.l.b16 %v1519
  %v2198 = vunpack.c.h.b16 %v1519
  %v2199 = vunpack.c.l.b16 %v1520
  %v2200 = vunpack.c.h.b16 %v1520
  %v2201 = vunpack.c.l.b16 %v1521
  %v2202 = vunpack.c.h.b16 %v1521
  %v2203 = vunpack.c.l.b16 %v1522
  %v2204 = vunpack.c.h.b16 %v1522
  %v2205 = vunpack.c.l.b16 %v1523
  %v2206 = vunpack.c.h.b16 %v1523
  %v2207 = vunpack.c.l.b16 %v1524
  %v2208 = vunpack.c.h.b16 %v1524
  %v2209 = vunpack.c.l.b16 %v1525
  %v2210 = vunpack.c.h.b16 %v1525
  %v2211 = vunpack.c.l.b16 %v1526
  %v2212 = vunpack.c.h.b16 %v1526
  %v2213 = vunpack.c.l.b16 %v1527
  %v2214 = vunpack.c.h.b16 %v1527
  %v2215 = vunpack.c.l.b16 %v1528
  %v2216 = vunpack.c.h.b16 %v1528
  %v2217 = vunpack.c.l.b16 %v1529
  %v2218 = vunpack.c.h.b16 %v1529
  %v2219 = vunpack.c.l.b16 %v1530
  %v2220 = vunpack.c.h.b16 %v1530
  %v2221 = vunpack.c.l.b16 %v1531
  %v2222 = vunpack.c.h.b16 %v1531
  %v2223 = vunpack.c.l.b16 %v1532
  %v2224 = vunpack.c.h.b16 %v1532
  %v2225 = vunpack.c.l.b16 %v1533
  %v2226 = vunpack.c.h.b16 %v1533
  %v2227 = vunpack.c.l.b16 %v1534
  %v2228 = vunpack.c.h.b16 %v1534
  %v2229 = vunpack.c.l.b16 %v1535
  %v2230 = vunpack.c.h.b16 %v1535
  %v2231 = vunpack.c.l.b16 %v1536
  %v2232 = vunpack.c.h.b16 %v1536
  %v2233 = vunpack.c.l.b16 %v1537
  %v2234 = vunpack.c.h.b16 %v1537
  %v2235 = vunpack.c.l.b16 %v1538
  %v2236 = vunpack.c.h.b16 %v1538
  %v2237 = vunpack.c.l.b16 %v1539
  %v2238 = vunpack.c.h.b16 %v1539
  %v2239 = vunpack.c.l.b16 %v1540
  %v2240 = vunpack.c.h.b16 %v1540
  %v2241 = vunpack.c.l.b16 %v1541
  %v2242 = vunpack.c.h.b16 %v1541
  %v2243 = vunpack.c.l.b16 %v1542
  %v2244 = vunpack.c.h.b16 %v1542
  %v2245 = vunpack.c.l.b16 %v1543
  %v2246 = vunpack.c.h.b16 %v1543
  %v2247 = vunpack.c.l.b16 %v1544
  %v2248 = vunpack.c.h.b16 %v1544
  %v2249 = vpack.c.b16 %v1873, %v1865
  %v2250 = vpack.c.b16 %v1874, %v1866
  %v2251 = vpack.c.b16 %v1875, %v1867
  %v2252 = vpack.c.b16 %v1876, %v1868
  %v2253 = vpack.c.b16 %v1877, %v1869
  %v2254 = vpack.c.b16 %v1878, %v1870
  %v2255 = vpack.c.b16 %v1879, %v1871
  %v2256 = vpack.c.b16 %v1880, %v1872
  %v2257 = vpack.c.b16 %v1889, %v1881
  %v2258 = vpack.c.b16 %v1890, %v1882
  %v2259 = vpack.c.b16 %v1891, %v1883
  %v2260 = vpack.c.b16 %v1892, %v1884
  %v2261 = vpack.c.b16 %v1893, %v1885
  %v2262 = vpack.c.b16 %v1894, %v1886
  %v2263 = vpack.c.b16 %v1895, %v1887
  %v2264 = vpack.c.b16 %v1896, %v1888
  %v2265 = vpack.c.b16 %v1905, %v1897
  %v2266 = vpack.c.b16 %v1906, %v1898
  %v2267 = vpack.c.b16 %v1907, %v1899
  %v2268 = vpack.c.b16 %v1908, %v1900
  %v2269 = vpack.c.b16 %v1909, %v1901
  %v2270 = vpack.c.b16 %v1910, %v1902
  %v2271 = vpack.c.b16 %v1911, %v1903
  %v2272 = vpack.c.b16 %v1912, %v1904
  %v2273 = vpack.c.b16 %v1921, %v1913
  %v2274 = vpack.c.b16 %v1922, %v1914
  %v2275 = vpack.c.b16 %v1923, %v1915
  %v2276 = vpack.c.b16 %v1924, %v1916
  %v2277 = vpack.c.b16 %v1925, %v1917
  %v2278 = vpack.c.b16 %v1926, %v1918
  %v2279 = vpack.c.b16 %v1927, %v1919
  %v2280 = vpack.c.b16 %v1928, %v1920
  %v2281 = vpack.c.b16 %v1937, %v1929
  %v2282 = vpack.c.b16 %v1938, %v1930
  %v2283 = vpack.c.b16 %v1939, %v1931
  %v2284 = vpack.c.b16 %v1940, %v1932
  %v2285 = vpack.c.b16 %v1941, %v1933
  %v2286 = vpack.c.b16 %v1942, %v1934
  %v2287 = vpack.c.b16 %v1943, %v1935
  %v2288 = vpack.c.b16 %v1944, %v1936
  %v2289 = vpack.c.b16 %v1953, %v1945
  %v2290 = vpack.c.b16 %v1954, %v1946
  %v2291 = vpack.c.b16 %v1955, %v1947
  %v2292 = vpack.c.b16 %v1956, %v1948
  %v2293 = vpack.c.b16 %v1957, %v1949
  %v2294 = vpack.c.b16 %v1958, %v1950
  %v2295 = vpack.c.b16 %v1959, %v1951
  %v2296 = vpack.c.b16 %v1960, %v1952
  %v2297 = vpack.c.b16 %v1969, %v1961
  %v2298 = vpack.c.b16 %v1970, %v1962
  %v2299 = vpack.c.b16 %v1971, %v1963
  %v2300 = vpack.c.b16 %v1972, %v1964
  %v2301 = vpack.c.b16 %v1973, %v1965
  %v2302 = vpack.c.b16 %v1974, %v1966
  %v2303 = vpack.c.b16 %v1975, %v1967
  %v2304 = vpack.c.b16 %v1976, %v1968
  %v2305 = vpack.c.b16 %v1985, %v1977
  %v2306 = vpack.c.b16 %v1986, %v1978
  %v2307 = vpack.c.b16 %v1987, %v1979
  %v2308 = vpack.c.b16 %v1988, %v1980
  %v2309 = vpack.c.b16 %v1989, %v1981
  %v2310 = vpack.c.b16 %v1990, %v1982
  %v2311 = vpack.c.b16 %v1991, %v1983
  %v2312 = vpack.c.b16 %v1992, %v1984
  %v2313 = vpack.c.b16 %v2001, %v1993
  %v2314 = vpack.c.b16 %v2002, %v1994
  %v2315 = vpack.c.b16 %v2003, %v1995
  %v2316 = vpack.c.b16 %v2004, %v1996
  %v2317 = vpack.c.b16 %v2005, %v1997
  %v2318 = vpack.c.b16 %v2006, %v1998
  %v2319 = vpack.c.b16 %v2007, %v1999
  %v2320 = vpack.c.b16 %v2008, %v2000
  %v2321 = vpack.c.b16 %v2017, %v2009
  %v2322 = vpack.c.b16 %v2018, %v2010
  %v2323 = vpack.c.b16 %v2019, %v2011
  %v2324 = vpack.c.b16 %v2020, %v2012
  %v2325 = vpack.c.b16 %v2021, %v2013
  %v2326 = vpack.c.b16 %v2022, %v2014
  %v2327 = vpack.c.b16 %v2023, %v2015
  %v2328 = vpack.c.b16 %v2024, %v2016
  %v2329 = vpack.c.b16 %v2033, %v2025
  %v2330 = vpack.c.b16 %v2034, %v2026
  %v2331 = vpack.c.b16 %v2035, %v2027
  %v2332 = vpack.c.b16 %v2036, %v2028
  %v2333 = vpack.c.b16 %v2037, %v2029
  %v2334 = vpack.c.b16 %v2038, %v2030
  %v2335 = vpack.c.b16 %v2039, %v2031
  %v2336 = vpack.c.b16 %v2040, %v2032
  %v2337 = vpack.c.b16 %v2049, %v2041
  %v2338 = vpack.c.b16 %v2050, %v2042
  %v2339 = vpack.c.b16 %v2051, %v2043
  %v2340 = vpack.c.b16 %v2052, %v2044
  %v2341 = vpack.c.b16 %v2053, %v2045
  %v2342 = vpack.c.b16 %v2054, %v2046
  %v2343 = vpack.c.b16 %v2055, %v2047
  %v2344 = vpack.c.b16 %v2056, %v2048
  %v2345 = vpack.c.b16 %v2065, %v2057
  %v2346 = vpack.c.b16 %v2066, %v2058
  %v2347 = vpack.c.b16 %v2067, %v2059
  %v2348 = vpack.c.b16 %v2068, %v2060
  %v2349 = vpack.c.b16 %v2069, %v2061
  %v2350 = vpack.c.b16 %v2070, %v2062
  %v2351 = vpack.c.b16 %v2071, %v2063
  %v2352 = vpack.c.b16 %v2072, %v2064
  %v2353 = vpack.c.b16 %v2081, %v2073
  %v2354 = vpack.c.b16 %v2082, %v2074
  %v2355 = vpack.c.b16 %v2083, %v2075
  %v2356 = vpack.c.b16 %v2084, %v2076
  %v2357 = vpack.c.b16 %v2085, %v2077
  %v2358 = vpack.c.b16 %v2086, %v2078
  %v2359 = vpack.c.b16 %v2087, %v2079
  %v2360 = vpack.c.b16 %v2088, %v2080
  %v2361 = vpack.c.b16 %v2097, %v2089
  %v2362 = vpack.c.b16 %v2098, %v2090
  %v2363 = vpack.c.b16 %v2099, %v2091
  %v2364 = vpack.c.b16 %v2100, %v2092
  %v2365 = vpack.c.b16 %v2101, %v2093
  %v2366 = vpack.c.b16 %v2102, %v2094
  %v2367 = vpack.c.b16 %v2103, %v2095
  %v2368 = vpack.c.b16 %v2104, %v2096
  %v2369 = vpack.c.b16 %v2113, %v2105
  %v2370 = vpack.c.b16 %v2114, %v2106
  %v2371 = vpack.c.b16 %v2115, %v2107
  %v2372 = vpack.c.b16 %v2116, %v2108
  %v2373 = vpack.c.b16 %v2117, %v2109
  %v2374 = vpack.c.b16 %v2118, %v2110
  %v2375 = vpack.c.b16 %v2119, %v2111
  %v2376 = vpack.c.b16 %v2120, %v2112
  %v2377 = vpack.c.b16 %v2129, %v2121
  %v2378 = vpack.c.b16 %v2130, %v2122
  %v2379 = vpack.c.b16 %v2131, %v2123
  %v2380 = vpack.c.b16 %v2132, %v2124
  %v2381 = vpack.c.b16 %v2133, %v2125
  %v2382 = vpack.c.b16 %v2134, %v2126
  %v2383 = vpack.c.b16 %v2135, %v2127
  %v2384 = vpack.c.b16 %v2136, %v2128
  %v2385 = vpack.c.b16 %v2145, %v2137
  %v2386 = vpack.c.b16 %v2146, %v2138
  %v2387 = vpack.c.b16 %v2147, %v2139
  %v2388 = vpack.c.b16 %v2148, %v2140
  %v2389 = vpack.c.b16 %v2149, %v2141
  %v2390 = vpack.c.b16 %v2150, %v2142
  %v2391 = vpack.c.b16 %v2151, %v2143
  %v2392 = vpack.c.b16 %v2152, %v2144
  %v2393 = vpack.c.b16 %v2161, %v2153
  %v2394 = vpack.c.b16 %v2162, %v2154
  %v2395 = vpack.c.b16 %v2163, %v2155
  %v2396 = vpack.c.b16 %v2164, %v2156
  %v2397 = vpack.c.b16 %v2165, %v2157
  %v2398 = vpack.c.b16 %v2166, %v2158
  %v2399 = vpack.c.b16 %v2167, %v2159
  %v2400 = vpack.c.b16 %v2168, %v2160
  %v2401 = vpack.c.b16 %v2177, %v2169
  %v2402 = vpack.c.b16 %v2178, %v2170
  %v2403 = vpack.c.b16 %v2179, %v2171
  %v2404 = vpack.c.b16 %v2180, %v2172
  %v2405 = vpack.c.b16 %v2181, %v2173
  %v2406 = vpack.c.b16 %v2182, %v2174
  %v2407 = vpack.c.b16 %v2183, %v2175
  %v2408 = vpack.c.b16 %v2184, %v2176
  %v2409 = vpack.c.b16 %v2193, %v2185
  %v2410 = vpack.c.b16 %v2194, %v2186
  %v2411 = vpack.c.b16 %v2195, %v2187
  %v2412 = vpack.c.b16 %v2196, %v2188
  %v2413 = vpack.c.b16 %v2197, %v2189
  %v2414 = vpack.c.b16 %v2198, %v2190
  %v2415 = vpack.c.b16 %v2199, %v2191
  %v2416 = vpack.c.b16 %v2200, %v2192
  %v2417 = vpack.c.b16 %v2209, %v2201
  %v2418 = vpack.c.b16 %v2210, %v2202
  %v2419 = vpack.c.b16 %v2211, %v2203
  %v2420 = vpack.c.b16 %v2212, %v2204
  %v2421 = vpack.c.b16 %v2213, %v2205
  %v2422 = vpack.c.b16 %v2214, %v2206
  %v2423 = vpack.c.b16 %v2215, %v2207
  %v2424 = vpack.c.b16 %v2216, %v2208
  %v2425 = vpack.c.b16 %v2225, %v2217
  %v2426 = vpack.c.b16 %v2226, %v2218
  %v2427 = vpack.c.b16 %v2227, %v2219
  %v2428 = vpack.c.b16 %v2228, %v2220
  %v2429 = vpack.c.b16 %v2229, %v2221
  %v2430 = vpack.c.b16 %v2230, %v2222
  %v2431 = vpack.c.b16 %v2231, %v2223
  %v2432 = vpack.c.b16 %v2232, %v2224
  %v2433 = vpack.c.b16 %v2241, %v2233
  %v2434 = vpack.c.b16 %v2242, %v2234
  %v2435 = vpack.c.b16 %v2243, %v2235
  %v2436 = vpack.c.b16 %v2244, %v2236
  %v2437 = vpack.c.b16 %v2245, %v2237
  %v2438 = vpack.c.b16 %v2246, %v2238
  %v2439 = vpack.c.b16 %v2247, %v2239
  %v2440 = vpack.c.b16 %v2248, %v2240
  %2633 = vmatprep.subr.bf16.mxu0 %v1546
  %2634 = vmatpush1.bf16.msra.mxu0 %v1545
  %2635 = vmatprep.subr.bf16.mxu0 %v1548
  %2636 = vmatpush1.bf16.msra.mxu0 %v1547
  %2637 = vmatprep.subr.bf16.mxu0 %v1550
  %2638 = vmatpush1.bf16.msra.mxu0 %v1549
  %2639 = vmatprep.subr.bf16.mxu0 %v1552
  %2640 = vmatpush1.bf16.msra.mxu0 %v1551
  %2641 = vmatprep.subr.bf16.mxu0 %v1554
  %2642 = vmatpush1.bf16.msra.mxu0 %v1553
  %2643 = vmatprep.subr.bf16.mxu0 %v1556
  %2644 = vmatpush1.bf16.msra.mxu0 %v1555
  %2645 = vmatprep.subr.bf16.mxu0 %v1558
  %2646 = vmatpush1.bf16.msra.mxu0 %v1557
  %2647 = vmatprep.subr.bf16.mxu0 %v1560
  %2648 = vmatpush1.bf16.msra.mxu0 %v1559
  %2649 = vmatprep.subr.bf16.mxu0 %v1562
  %2650 = vmatpush1.bf16.msra.mxu0 %v1561
  %2651 = vmatprep.subr.bf16.mxu0 %v1564
  %2652 = vmatpush1.bf16.msra.mxu0 %v1563
  %2653 = vmatprep.subr.bf16.mxu0 %v1566
  %2654 = vmatpush1.bf16.msra.mxu0 %v1565
  %2655 = vmatprep.subr.bf16.mxu0 %v1568
  %2656 = vmatpush1.bf16.msra.mxu0 %v1567
  %2657 = vmatprep.subr.bf16.mxu0 %v1570
  %2658 = vmatpush1.bf16.msra.mxu0 %v1569
  %2659 = vmatprep.subr.bf16.mxu0 %v1572
  %2660 = vmatpush1.bf16.msra.mxu0 %v1571
  %2661 = vmatprep.subr.bf16.mxu0 %v1574
  %2662 = vmatpush1.bf16.msra.mxu0 %v1573
  %2663 = vmatprep.subr.bf16.mxu0 %v1576
  %2664 = vmatpush1.bf16.msra.mxu0 %v1575
  %2665 = vmatprep.mubr.bf16.mxu0 %v2250
  %2666 = vmatmul.mubr.bf16.gmra.mrb[0].mxu0 %v2249
  %v2667 = vpop.f32.mrb[0].mxu0
  %v2668 = vadd.f32 0.0, %v2667
  %v2669 = vpop.f32.mrb[0].mxu0
  %v2670 = vadd.f32 0.0, %v2669
  %v2671 = vpop.f32.mrb[0].mxu0
  %v2672 = vadd.f32 0.0, %v2671
  %v2673 = vpop.f32.mrb[0].mxu0
  %v2674 = vadd.f32 0.0, %v2673
  %2675 = vmatprep.mubr.bf16.mxu0 %v2258
  %2676 = vmatmul.mubr.bf16.gmra.mrb[0].mxu0 %v2257
  %v2677 = vpop.f32.mrb[0].mxu0
  %v2678 = vadd.f32 0.0, %v2677
  %v2679 = vpop.f32.mrb[0].mxu0
  %v2680 = vadd.f32 0.0, %v2679
  %v2681 = vpop.f32.mrb[0].mxu0
  %v2682 = vadd.f32 0.0, %v2681
  %v2683 = vpop.f32.mrb[0].mxu0
  %v2684 = vadd.f32 0.0, %v2683
  %2685 = vmatprep.mubr.bf16.mxu0 %v2266
  %2686 = vmatmul.mubr.bf16.gmra.mrb[0].mxu0 %v2265
  %v2687 = vpop.f32.mrb[0].mxu0
  %v2688 = vadd.f32 0.0, %v2687
  %v2689 = vpop.f32.mrb[0].mxu0
  %v2690 = vadd.f32 0.0, %v2689
  %v2691 = vpop.f32.mrb[0].mxu0
  %v2692 = vadd.f32 0.0, %v2691
  %v2693 = vpop.f32.mrb[0].mxu0
  %v2694 = vadd.f32 0.0, %v2693
  %2695 = vmatprep.mubr.bf16.mxu0 %v2274
  %2696 = vmatmul.mubr.bf16.gmra.mrb[0].mxu0 %v2273
  %v2697 = vpop.f32.mrb[0].mxu0
  %v2698 = vadd.f32 0.0, %v2697
  %v2699 = vpop.f32.mrb[0].mxu0
  %v2700 = vadd.f32 0.0, %v2699
  %v2701 = vpop.f32.mrb[0].mxu0
  %v2702 = vadd.f32 0.0, %v2701
  %v2703 = vpop.f32.mrb[0].mxu0
  %v2704 = vadd.f32 0.0, %v2703
  %2705 = vmatprep.mubr.bf16.mxu0 %v2282
  %2706 = vmatmul.mubr.bf16.gmra.mrb[0].mxu0 %v2281
  %v2707 = vpop.f32.mrb[0].mxu0
  %v2708 = vadd.f32 0.0, %v2707
  %v2709 = vpop.f32.mrb[0].mxu0
  %v2710 = vadd.f32 0.0, %v2709
  %v2711 = vpop.f32.mrb[0].mxu0
  %v2712 = vadd.f32 0.0, %v2711
  %v2713 = vpop.f32.mrb[0].mxu0
  %v2714 = vadd.f32 0.0, %v2713
  %2715 = vmatprep.mubr.bf16.mxu0 %v2290
  %2716 = vmatmul.mubr.bf16.gmra.mrb[0].mxu0 %v2289
  %v2717 = vpop.f32.mrb[0].mxu0
  %v2718 = vadd.f32 0.0, %v2717
  %v2719 = vpop.f32.mrb[0].mxu0
  %v2720 = vadd.f32 0.0, %v2719
  %v2721 = vpop.f32.mrb[0].mxu0
  %v2722 = vadd.f32 0.0, %v2721
  %v2723 = vpop.f32.mrb[0].mxu0
  %v2724 = vadd.f32 0.0, %v2723
  %2725 = vmatprep.mubr.bf16.mxu0 %v2298
  %2726 = vmatmul.mubr.bf16.gmra.mrb[0].mxu0 %v2297
  %v2727 = vpop.f32.mrb[0].mxu0
  %v2728 = vadd.f32 0.0, %v2727
  %v2729 = vpop.f32.mrb[0].mxu0
  %v2730 = vadd.f32 0.0, %v2729
  %v2731 = vpop.f32.mrb[0].mxu0
  %v2732 = vadd.f32 0.0, %v2731
  %v2733 = vpop.f32.mrb[0].mxu0
  %v2734 = vadd.f32 0.0, %v2733
  %2735 = vmatprep.mubr.bf16.mxu0 %v2306
  %2736 = vmatmul.mubr.bf16.gmra.mrb[0].mxu0 %v2305
  %v2737 = vpop.f32.mrb[0].mxu0
  %v2738 = vadd.f32 0.0, %v2737
  %v2739 = vpop.f32.mrb[0].mxu0
  %v2740 = vadd.f32 0.0, %v2739
  %v2741 = vpop.f32.mrb[0].mxu0
  %v2742 = vadd.f32 0.0, %v2741
  %v2743 = vpop.f32.mrb[0].mxu0
  %v2744 = vadd.f32 0.0, %v2743
  %2745 = vmatprep.mubr.bf16.mxu0 %v2314
  %2746 = vmatmul.mubr.bf16.gmra.mrb[0].mxu0 %v2313
  %v2747 = vpop.f32.mrb[0].mxu0
  %v2748 = vadd.f32 0.0, %v2747
  %v2749 = vpop.f32.mrb[0].mxu0
  %v2750 = vadd.f32 0.0, %v2749
  %v2751 = vpop.f32.mrb[0].mxu0
  %v2752 = vadd.f32 0.0, %v2751
  %v2753 = vpop.f32.mrb[0].mxu0
  %v2754 = vadd.f32 0.0, %v2753
  %2755 = vmatprep.mubr.bf16.mxu0 %v2322
  %2756 = vmatmul.mubr.bf16.gmra.mrb[0].mxu0 %v2321
  %v2757 = vpop.f32.mrb[0].mxu0
  %v2758 = vadd.f32 0.0, %v2757
  %v2759 = vpop.f32.mrb[0].mxu0
  %v2760 = vadd.f32 0.0, %v2759
  %v2761 = vpop.f32.mrb[0].mxu0
  %v2762 = vadd.f32 0.0, %v2761
  %v2763 = vpop.f32.mrb[0].mxu0
  %v2764 = vadd.f32 0.0, %v2763
  %2765 = vmatprep.mubr.bf16.mxu0 %v2330
  %2766 = vmatmul.mubr.bf16.gmra.mrb[0].mxu0 %v2329
  %v2767 = vpop.f32.mrb[0].mxu0
  %v2768 = vadd.f32 0.0, %v2767
  %v2769 = vpop.f32.mrb[0].mxu0
  %v2770 = vadd.f32 0.0, %v2769
  %v2771 = vpop.f32.mrb[0].mxu0
  %v2772 = vadd.f32 0.0, %v2771
  %v2773 = vpop.f32.mrb[0].mxu0
  %v2774 = vadd.f32 0.0, %v2773
  %2775 = vmatprep.mubr.bf16.mxu0 %v2338
  %2776 = vmatmul.mubr.bf16.gmra.mrb[0].mxu0 %v2337
  %v2777 = vpop.f32.mrb[0].mxu0
  %v2778 = vadd.f32 0.0, %v2777
  %v2779 = vpop.f32.mrb[0].mxu0
  %v2780 = vadd.f32 0.0, %v2779
  %v2781 = vpop.f32.mrb[0].mxu0
  %v2782 = vadd.f32 0.0, %v2781
  %v2783 = vpop.f32.mrb[0].mxu0
  %v2784 = vadd.f32 0.0, %v2783
  %2785 = vmatprep.mubr.bf16.mxu0 %v2346
  %2786 = vmatmul.mubr.bf16.gmra.mrb[0].mxu0 %v2345
  %v2787 = vpop.f32.mrb[0].mxu0
  %v2788 = vadd.f32 0.0, %v2787
  %v2789 = vpop.f32.mrb[0].mxu0
  %v2790 = vadd.f32 0.0, %v2789
  %v2791 = vpop.f32.mrb[0].mxu0
  %v2792 = vadd.f32 0.0, %v2791
  %v2793 = vpop.f32.mrb[0].mxu0
  %v2794 = vadd.f32 0.0, %v2793
  %2795 = vmatprep.mubr.bf16.mxu0 %v2354
  %2796 = vmatmul.mubr.bf16.gmra.mrb[0].mxu0 %v2353
  %v2797 = vpop.f32.mrb[0].mxu0
  %v2798 = vadd.f32 0.0, %v2797
  %v2799 = vpop.f32.mrb[0].mxu0
  %v2800 = vadd.f32 0.0, %v2799
  %v2801 = vpop.f32.mrb[0].mxu0
  %v2802 = vadd.f32 0.0, %v2801
  %v2803 = vpop.f32.mrb[0].mxu0
  %v2804 = vadd.f32 0.0, %v2803
  %2805 = vmatprep.mubr.bf16.mxu0 %v2362
  %2806 = vmatmul.mubr.bf16.gmra.mrb[0].mxu0 %v2361
  %v2807 = vpop.f32.mrb[0].mxu0
  %v2808 = vadd.f32 0.0, %v2807
  %v2809 = vpop.f32.mrb[0].mxu0
  %v2810 = vadd.f32 0.0, %v2809
  %v2811 = vpop.f32.mrb[0].mxu0
  %v2812 = vadd.f32 0.0, %v2811
  %v2813 = vpop.f32.mrb[0].mxu0
  %v2814 = vadd.f32 0.0, %v2813
  %2815 = vmatprep.mubr.bf16.mxu0 %v2370
  %2816 = vmatmul.mubr.bf16.gmra.mrb[0].mxu0 %v2369
  %v2817 = vpop.f32.mrb[0].mxu0
  %v2818 = vadd.f32 0.0, %v2817
  %v2819 = vpop.f32.mrb[0].mxu0
  %v2820 = vadd.f32 0.0, %v2819
  %v2821 = vpop.f32.mrb[0].mxu0
  %v2822 = vadd.f32 0.0, %v2821
  %v2823 = vpop.f32.mrb[0].mxu0
  %v2824 = vadd.f32 0.0, %v2823
  %2825 = vmatprep.mubr.bf16.mxu0 %v2378
  %2826 = vmatmul.mubr.bf16.gmra.mrb[0].mxu0 %v2377
  %v2827 = vpop.f32.mrb[0].mxu0
  %v2828 = vadd.f32 0.0, %v2827
  %v2829 = vpop.f32.mrb[0].mxu0
  %v2830 = vadd.f32 0.0, %v2829
  %v2831 = vpop.f32.mrb[0].mxu0
  %v2832 = vadd.f32 0.0, %v2831
  %v2833 = vpop.f32.mrb[0].mxu0
  %v2834 = vadd.f32 0.0, %v2833
  %2835 = vmatprep.mubr.bf16.mxu0 %v2386
  %2836 = vmatmul.mubr.bf16.gmra.mrb[0].mxu0 %v2385
  %v2837 = vpop.f32.mrb[0].mxu0
  %v2838 = vadd.f32 0.0, %v2837
  %v2839 = vpop.f32.mrb[0].mxu0
  %v2840 = vadd.f32 0.0, %v2839
  %v2841 = vpop.f32.mrb[0].mxu0
  %v2842 = vadd.f32 0.0, %v2841
  %v2843 = vpop.f32.mrb[0].mxu0
  %v2844 = vadd.f32 0.0, %v2843
  %2845 = vmatprep.mubr.bf16.mxu0 %v2394
  %2846 = vmatmul.mubr.bf16.gmra.mrb[0].mxu0 %v2393
  %v2847 = vpop.f32.mrb[0].mxu0
  %v2848 = vadd.f32 0.0, %v2847
  %v2849 = vpop.f32.mrb[0].mxu0
  %v2850 = vadd.f32 0.0, %v2849
  %v2851 = vpop.f32.mrb[0].mxu0
  %v2852 = vadd.f32 0.0, %v2851
  %v2853 = vpop.f32.mrb[0].mxu0
  %v2854 = vadd.f32 0.0, %v2853
  %2855 = vmatprep.mubr.bf16.mxu0 %v2402
  %2856 = vmatmul.mubr.bf16.gmra.mrb[0].mxu0 %v2401
  %v2857 = vpop.f32.mrb[0].mxu0
  %v2858 = vadd.f32 0.0, %v2857
  %v2859 = vpop.f32.mrb[0].mxu0
  %v2860 = vadd.f32 0.0, %v2859
  %v2861 = vpop.f32.mrb[0].mxu0
  %v2862 = vadd.f32 0.0, %v2861
  %v2863 = vpop.f32.mrb[0].mxu0
  %v2864 = vadd.f32 0.0, %v2863
  %2865 = vmatprep.mubr.bf16.mxu0 %v2410
  %2866 = vmatmul.mubr.bf16.gmra.mrb[0].mxu0 %v2409
  %v2867 = vpop.f32.mrb[0].mxu0
  %v2868 = vadd.f32 0.0, %v2867
  %v2869 = vpop.f32.mrb[0].mxu0
  %v2870 = vadd.f32 0.0, %v2869
  %v2871 = vpop.f32.mrb[0].mxu0
  %v2872 = vadd.f32 0.0, %v2871
  %v2873 = vpop.f32.mrb[0].mxu0
  %v2874 = vadd.f32 0.0, %v2873
  %2875 = vmatprep.mubr.bf16.mxu0 %v2418
  %2876 = vmatmul.mubr.bf16.gmra.mrb[0].mxu0 %v2417
  %v2877 = vpop.f32.mrb[0].mxu0
  %v2878 = vadd.f32 0.0, %v2877
  %v2879 = vpop.f32.mrb[0].mxu0
  %v2880 = vadd.f32 0.0, %v2879
  %v2881 = vpop.f32.mrb[0].mxu0
  %v2882 = vadd.f32 0.0, %v2881
  %v2883 = vpop.f32.mrb[0].mxu0
  %v2884 = vadd.f32 0.0, %v2883
  %2885 = vmatprep.mubr.bf16.mxu0 %v2426
  %2886 = vmatmul.mubr.bf16.gmra.mrb[0].mxu0 %v2425
  %v2887 = vpop.f32.mrb[0].mxu0
  %v2888 = vadd.f32 0.0, %v2887
  %v2889 = vpop.f32.mrb[0].mxu0
  %v2890 = vadd.f32 0.0, %v2889
  %v2891 = vpop.f32.mrb[0].mxu0
  %v2892 = vadd.f32 0.0, %v2891
  %v2893 = vpop.f32.mrb[0].mxu0
  %v2894 = vadd.f32 0.0, %v2893
  %2895 = vmatprep.mubr.bf16.mxu0 %v2434
  %2896 = vmatmul.mubr.bf16.gmra.mrb[0].mxu0 %v2433
  %v2897 = vpop.f32.mrb[0].mxu0
  %v2898 = vadd.f32 0.0, %v2897
  %v2899 = vpop.f32.mrb[0].mxu0
  %v2900 = vadd.f32 0.0, %v2899
  %v2901 = vpop.f32.mrb[0].mxu0
  %v2902 = vadd.f32 0.0, %v2901
  %v2903 = vpop.f32.mrb[0].mxu0
  %v2904 = vadd.f32 0.0, %v2903
  %2905 = vdwg.mxu0
  %2906 = vmatprep.subr.bf16.mxu0 %v1578
  %2907 = vmatpush1.bf16.msra.mxu0 %v1577
  %2908 = vmatprep.subr.bf16.mxu0 %v1580
  %2909 = vmatpush1.bf16.msra.mxu0 %v1579
  %2910 = vmatprep.subr.bf16.mxu0 %v1582
  %2911 = vmatpush1.bf16.msra.mxu0 %v1581
  %2912 = vmatprep.subr.bf16.mxu0 %v1584
  %2913 = vmatpush1.bf16.msra.mxu0 %v1583
  %2914 = vmatprep.subr.bf16.mxu0 %v1586
  %2915 = vmatpush1.bf16.msra.mxu0 %v1585
  %2916 = vmatprep.subr.bf16.mxu0 %v1588
  %2917 = vmatpush1.bf16.msra.mxu0 %v1587
  %2918 = vmatprep.subr.bf16.mxu0 %v1590
  %2919 = vmatpush1.bf16.msra.mxu0 %v1589
  %2920 = vmatprep.subr.bf16.mxu0 %v1592
  %2921 = vmatpush1.bf16.msra.mxu0 %v1591
  %2922 = vmatprep.subr.bf16.mxu0 %v1594
  %2923 = vmatpush1.bf16.msra.mxu0 %v1593
  %2924 = vmatprep.subr.bf16.mxu0 %v1596
  %2925 = vmatpush1.bf16.msra.mxu0 %v1595
  %2926 = vmatprep.subr.bf16.mxu0 %v1598
  %2927 = vmatpush1.bf16.msra.mxu0 %v1597
  %2928 = vmatprep.subr.bf16.mxu0 %v1600
  %2929 = vmatpush1.bf16.msra.mxu0 %v1599
  %2930 = vmatprep.subr.bf16.mxu0 %v1602
  %2931 = vmatpush1.bf16.msra.mxu0 %v1601
  %2932 = vmatprep.subr.bf16.mxu0 %v1604
  %2933 = vmatpush1.bf16.msra.mxu0 %v1603
  %2934 = vmatprep.subr.bf16.mxu0 %v1606
  %2935 = vmatpush1.bf16.msra.mxu0 %v1605
  %2936 = vmatprep.subr.bf16.mxu0 %v1608
  %2937 = vmatpush1.bf16.msra.mxu0 %v1607
  %2938 = vmatprep.mubr.bf16.mxu0 %v2252
  %2939 = vmatmul.mubr.bf16.gmra.mrb[0].mxu0 %v2251
  %v2940 = vpop.f32.mrb[0].mxu0
  %v2941 = vadd.f32 %v2668, %v2940
  %v2942 = vpop.f32.mrb[0].mxu0
  %v2943 = vadd.f32 %v2670, %v2942
  %v2944 = vpop.f32.mrb[0].mxu0
  %v2945 = vadd.f32 %v2672, %v2944
  %v2946 = vpop.f32.mrb[0].mxu0
  %v2947 = vadd.f32 %v2674, %v2946
  %2948 = vmatprep.mubr.bf16.mxu0 %v2260
  %2949 = vmatmul.mubr.bf16.gmra.mrb[0].mxu0 %v2259
  %v2950 = vpop.f32.mrb[0].mxu0
  %v2951 = vadd.f32 %v2678, %v2950
  %v2952 = vpop.f32.mrb[0].mxu0
  %v2953 = vadd.f32 %v2680, %v2952
  %v2954 = vpop.f32.mrb[0].mxu0
  %v2955 = vadd.f32 %v2682, %v2954
  %v2956 = vpop.f32.mrb[0].mxu0
  %v2957 = vadd.f32 %v2684, %v2956
  %2958 = vmatprep.mubr.bf16.mxu0 %v2268
  %2959 = vmatmul.mubr.bf16.gmra.mrb[0].mxu0 %v2267
  %v2960 = vpop.f32.mrb[0].mxu0
  %v2961 = vadd.f32 %v2688, %v2960
  %v2962 = vpop.f32.mrb[0].mxu0
  %v2963 = vadd.f32 %v2690, %v2962
  %v2964 = vpop.f32.mrb[0].mxu0
  %v2965 = vadd.f32 %v2692, %v2964
  %v2966 = vpop.f32.mrb[0].mxu0
  %v2967 = vadd.f32 %v2694, %v2966
  %2968 = vmatprep.mubr.bf16.mxu0 %v2276
  %2969 = vmatmul.mubr.bf16.gmra.mrb[0].mxu0 %v2275
  %v2970 = vpop.f32.mrb[0].mxu0
  %v2971 = vadd.f32 %v2698, %v2970
  %v2972 = vpop.f32.mrb[0].mxu0
  %v2973 = vadd.f32 %v2700, %v2972
  %v2974 = vpop.f32.mrb[0].mxu0
  %v2975 = vadd.f32 %v2702, %v2974
  %v2976 = vpop.f32.mrb[0].mxu0
  %v2977 = vadd.f32 %v2704, %v2976
  %2978 = vmatprep.mubr.bf16.mxu0 %v2284
  %2979 = vmatmul.mubr.bf16.gmra.mrb[0].mxu0 %v2283
  %v2980 = vpop.f32.mrb[0].mxu0
  %v2981 = vadd.f32 %v2708, %v2980
  %v2982 = vpop.f32.mrb[0].mxu0
  %v2983 = vadd.f32 %v2710, %v2982
  %v2984 = vpop.f32.mrb[0].mxu0
  %v2985 = vadd.f32 %v2712, %v2984
  %v2986 = vpop.f32.mrb[0].mxu0
  %v2987 = vadd.f32 %v2714, %v2986
  %2988 = vmatprep.mubr.bf16.mxu0 %v2292
  %2989 = vmatmul.mubr.bf16.gmra.mrb[0].mxu0 %v2291
  %v2990 = vpop.f32.mrb[0].mxu0
  %v2991 = vadd.f32 %v2718, %v2990
  %v2992 = vpop.f32.mrb[0].mxu0
  %v2993 = vadd.f32 %v2720, %v2992
  %v2994 = vpop.f32.mrb[0].mxu0
  %v2995 = vadd.f32 %v2722, %v2994
  %v2996 = vpop.f32.mrb[0].mxu0
  %v2997 = vadd.f32 %v2724, %v2996
  %2998 = vmatprep.mubr.bf16.mxu0 %v2300
  %2999 = vmatmul.mubr.bf16.gmra.mrb[0].mxu0 %v2299
  %v3000 = vpop.f32.mrb[0].mxu0
  %v3001 = vadd.f32 %v2728, %v3000
  %v3002 = vpop.f32.mrb[0].mxu0
  %v3003 = vadd.f32 %v2730, %v3002
  %v3004 = vpop.f32.mrb[0].mxu0
  %v3005 = vadd.f32 %v2732, %v3004
  %v3006 = vpop.f32.mrb[0].mxu0
  %v3007 = vadd.f32 %v2734, %v3006
  %3008 = vmatprep.mubr.bf16.mxu0 %v2308
  %3009 = vmatmul.mubr.bf16.gmra.mrb[0].mxu0 %v2307
  %v3010 = vpop.f32.mrb[0].mxu0
  %v3011 = vadd.f32 %v2738, %v3010
  %v3012 = vpop.f32.mrb[0].mxu0
  %v3013 = vadd.f32 %v2740, %v3012
  %v3014 = vpop.f32.mrb[0].mxu0
  %v3015 = vadd.f32 %v2742, %v3014
  %v3016 = vpop.f32.mrb[0].mxu0
  %v3017 = vadd.f32 %v2744, %v3016
  %3018 = vmatprep.mubr.bf16.mxu0 %v2316
  %3019 = vmatmul.mubr.bf16.gmra.mrb[0].mxu0 %v2315
  %v3020 = vpop.f32.mrb[0].mxu0
  %v3021 = vadd.f32 %v2748, %v3020
  %v3022 = vpop.f32.mrb[0].mxu0
  %v3023 = vadd.f32 %v2750, %v3022
  %v3024 = vpop.f32.mrb[0].mxu0
  %v3025 = vadd.f32 %v2752, %v3024
  %v3026 = vpop.f32.mrb[0].mxu0
  %v3027 = vadd.f32 %v2754, %v3026
  %3028 = vmatprep.mubr.bf16.mxu0 %v2324
  %3029 = vmatmul.mubr.bf16.gmra.mrb[0].mxu0 %v2323
  %v3030 = vpop.f32.mrb[0].mxu0
  %v3031 = vadd.f32 %v2758, %v3030
  %v3032 = vpop.f32.mrb[0].mxu0
  %v3033 = vadd.f32 %v2760, %v3032
  %v3034 = vpop.f32.mrb[0].mxu0
  %v3035 = vadd.f32 %v2762, %v3034
  %v3036 = vpop.f32.mrb[0].mxu0
  %v3037 = vadd.f32 %v2764, %v3036
  %3038 = vmatprep.mubr.bf16.mxu0 %v2332
  %3039 = vmatmul.mubr.bf16.gmra.mrb[0].mxu0 %v2331
  %v3040 = vpop.f32.mrb[0].mxu0
  %v3041 = vadd.f32 %v2768, %v3040
  %v3042 = vpop.f32.mrb[0].mxu0
  %v3043 = vadd.f32 %v2770, %v3042
  %v3044 = vpop.f32.mrb[0].mxu0
  %v3045 = vadd.f32 %v2772, %v3044
  %v3046 = vpop.f32.mrb[0].mxu0
  %v3047 = vadd.f32 %v2774, %v3046
  %3048 = vmatprep.mubr.bf16.mxu0 %v2340
  %3049 = vmatmul.mubr.bf16.gmra.mrb[0].mxu0 %v2339
  %v3050 = vpop.f32.mrb[0].mxu0
  %v3051 = vadd.f32 %v2778, %v3050
  %v3052 = vpop.f32.mrb[0].mxu0
  %v3053 = vadd.f32 %v2780, %v3052
  %v3054 = vpop.f32.mrb[0].mxu0
  %v3055 = vadd.f32 %v2782, %v3054
  %v3056 = vpop.f32.mrb[0].mxu0
  %v3057 = vadd.f32 %v2784, %v3056
  %3058 = vmatprep.mubr.bf16.mxu0 %v2348
  %3059 = vmatmul.mubr.bf16.gmra.mrb[0].mxu0 %v2347
  %v3060 = vpop.f32.mrb[0].mxu0
  %v3061 = vadd.f32 %v2788, %v3060
  %v3062 = vpop.f32.mrb[0].mxu0
  %v3063 = vadd.f32 %v2790, %v3062
  %v3064 = vpop.f32.mrb[0].mxu0
  %v3065 = vadd.f32 %v2792, %v3064
  %v3066 = vpop.f32.mrb[0].mxu0
  %v3067 = vadd.f32 %v2794, %v3066
  %3068 = vmatprep.mubr.bf16.mxu0 %v2356
  %3069 = vmatmul.mubr.bf16.gmra.mrb[0].mxu0 %v2355
  %v3070 = vpop.f32.mrb[0].mxu0
  %v3071 = vadd.f32 %v2798, %v3070
  %v3072 = vpop.f32.mrb[0].mxu0
  %v3073 = vadd.f32 %v2800, %v3072
  %v3074 = vpop.f32.mrb[0].mxu0
  %v3075 = vadd.f32 %v2802, %v3074
  %v3076 = vpop.f32.mrb[0].mxu0
  %v3077 = vadd.f32 %v2804, %v3076
  %3078 = vmatprep.mubr.bf16.mxu0 %v2364
  %3079 = vmatmul.mubr.bf16.gmra.mrb[0].mxu0 %v2363
  %v3080 = vpop.f32.mrb[0].mxu0
  %v3081 = vadd.f32 %v2808, %v3080
  %v3082 = vpop.f32.mrb[0].mxu0
  %v3083 = vadd.f32 %v2810, %v3082
  %v3084 = vpop.f32.mrb[0].mxu0
  %v3085 = vadd.f32 %v2812, %v3084
  %v3086 = vpop.f32.mrb[0].mxu0
  %v3087 = vadd.f32 %v2814, %v3086
  %3088 = vmatprep.mubr.bf16.mxu0 %v2372
  %3089 = vmatmul.mubr.bf16.gmra.mrb[0].mxu0 %v2371
  %v3090 = vpop.f32.mrb[0].mxu0
  %v3091 = vadd.f32 %v2818, %v3090
  %v3092 = vpop.f32.mrb[0].mxu0
  %v3093 = vadd.f32 %v2820, %v3092
  %v3094 = vpop.f32.mrb[0].mxu0
  %v3095 = vadd.f32 %v2822, %v3094
  %v3096 = vpop.f32.mrb[0].mxu0
  %v3097 = vadd.f32 %v2824, %v3096
  %3098 = vmatprep.mubr.bf16.mxu0 %v2380
  %3099 = vmatmul.mubr.bf16.gmra.mrb[0].mxu0 %v2379
  %v3100 = vpop.f32.mrb[0].mxu0
  %v3101 = vadd.f32 %v2828, %v3100
  %v3102 = vpop.f32.mrb[0].mxu0
  %v3103 = vadd.f32 %v2830, %v3102
  %v3104 = vpop.f32.mrb[0].mxu0
  %v3105 = vadd.f32 %v2832, %v3104
  %v3106 = vpop.f32.mrb[0].mxu0
  %v3107 = vadd.f32 %v2834, %v3106
  %3108 = vmatprep.mubr.bf16.mxu0 %v2388
  %3109 = vmatmul.mubr.bf16.gmra.mrb[0].mxu0 %v2387
  %v3110 = vpop.f32.mrb[0].mxu0
  %v3111 = vadd.f32 %v2838, %v3110
  %v3112 = vpop.f32.mrb[0].mxu0
  %v3113 = vadd.f32 %v2840, %v3112
  %v3114 = vpop.f32.mrb[0].mxu0
  %v3115 = vadd.f32 %v2842, %v3114
  %v3116 = vpop.f32.mrb[0].mxu0
  %v3117 = vadd.f32 %v2844, %v3116
  %3118 = vmatprep.mubr.bf16.mxu0 %v2396
  %3119 = vmatmul.mubr.bf16.gmra.mrb[0].mxu0 %v2395
  %v3120 = vpop.f32.mrb[0].mxu0
  %v3121 = vadd.f32 %v2848, %v3120
  %v3122 = vpop.f32.mrb[0].mxu0
  %v3123 = vadd.f32 %v2850, %v3122
  %v3124 = vpop.f32.mrb[0].mxu0
  %v3125 = vadd.f32 %v2852, %v3124
  %v3126 = vpop.f32.mrb[0].mxu0
  %v3127 = vadd.f32 %v2854, %v3126
  %3128 = vmatprep.mubr.bf16.mxu0 %v2404
  %3129 = vmatmul.mubr.bf16.gmra.mrb[0].mxu0 %v2403
  %v3130 = vpop.f32.mrb[0].mxu0
  %v3131 = vadd.f32 %v2858, %v3130
  %v3132 = vpop.f32.mrb[0].mxu0
  %v3133 = vadd.f32 %v2860, %v3132
  %v3134 = vpop.f32.mrb[0].mxu0
  %v3135 = vadd.f32 %v2862, %v3134
  %v3136 = vpop.f32.mrb[0].mxu0
  %v3137 = vadd.f32 %v2864, %v3136
  %3138 = vmatprep.mubr.bf16.mxu0 %v2412
  %3139 = vmatmul.mubr.bf16.gmra.mrb[0].mxu0 %v2411
  %v3140 = vpop.f32.mrb[0].mxu0
  %v3141 = vadd.f32 %v2868, %v3140
  %v3142 = vpop.f32.mrb[0].mxu0
  %v3143 = vadd.f32 %v2870, %v3142
  %v3144 = vpop.f32.mrb[0].mxu0
  %v3145 = vadd.f32 %v2872, %v3144
  %v3146 = vpop.f32.mrb[0].mxu0
  %v3147 = vadd.f32 %v2874, %v3146
  %3148 = vmatprep.mubr.bf16.mxu0 %v2420
  %3149 = vmatmul.mubr.bf16.gmra.mrb[0].mxu0 %v2419
  %v3150 = vpop.f32.mrb[0].mxu0
  %v3151 = vadd.f32 %v2878, %v3150
  %v3152 = vpop.f32.mrb[0].mxu0
  %v3153 = vadd.f32 %v2880, %v3152
  %v3154 = vpop.f32.mrb[0].mxu0
  %v3155 = vadd.f32 %v2882, %v3154
  %v3156 = vpop.f32.mrb[0].mxu0
  %v3157 = vadd.f32 %v2884, %v3156
  %3158 = vmatprep.mubr.bf16.mxu0 %v2428
  %3159 = vmatmul.mubr.bf16.gmra.mrb[0].mxu0 %v2427
  %v3160 = vpop.f32.mrb[0].mxu0
  %v3161 = vadd.f32 %v2888, %v3160
  %v3162 = vpop.f32.mrb[0].mxu0
  %v3163 = vadd.f32 %v2890, %v3162
  %v3164 = vpop.f32.mrb[0].mxu0
  %v3165 = vadd.f32 %v2892, %v3164
  %v3166 = vpop.f32.mrb[0].mxu0
  %v3167 = vadd.f32 %v2894, %v3166
  %3168 = vmatprep.mubr.bf16.mxu0 %v2436
  %3169 = vmatmul.mubr.bf16.gmra.mrb[0].mxu0 %v2435
  %v3170 = vpop.f32.mrb[0].mxu0
  %v3171 = vadd.f32 %v2898, %v3170
  %v3172 = vpop.f32.mrb[0].mxu0
  %v3173 = vadd.f32 %v2900, %v3172
  %v3174 = vpop.f32.mrb[0].mxu0
  %v3175 = vadd.f32 %v2902, %v3174
  %v3176 = vpop.f32.mrb[0].mxu0
  %v3177 = vadd.f32 %v2904, %v3176
  %3178 = vdwg.mxu0
  %3179 = vmatprep.subr.bf16.mxu0 %v1610
  %3180 = vmatpush1.bf16.msra.mxu0 %v1609
  %3181 = vmatprep.subr.bf16.mxu0 %v1612
  %3182 = vmatpush1.bf16.msra.mxu0 %v1611
  %3183 = vmatprep.subr.bf16.mxu0 %v1614
  %3184 = vmatpush1.bf16.msra.mxu0 %v1613
  %3185 = vmatprep.subr.bf16.mxu0 %v1616
  %3186 = vmatpush1.bf16.msra.mxu0 %v1615
  %3187 = vmatprep.subr.bf16.mxu0 %v1618
  %3188 = vmatpush1.bf16.msra.mxu0 %v1617
  %3189 = vmatprep.subr.bf16.mxu0 %v1620
  %3190 = vmatpush1.bf16.msra.mxu0 %v1619
  %3191 = vmatprep.subr.bf16.mxu0 %v1622
  %3192 = vmatpush1.bf16.msra.mxu0 %v1621
  %3193 = vmatprep.subr.bf16.mxu0 %v1624
  %3194 = vmatpush1.bf16.msra.mxu0 %v1623
  %3195 = vmatprep.subr.bf16.mxu0 %v1626
  %3196 = vmatpush1.bf16.msra.mxu0 %v1625
  %3197 = vmatprep.subr.bf16.mxu0 %v1628
  %3198 = vmatpush1.bf16.msra.mxu0 %v1627
  %3199 = vmatprep.subr.bf16.mxu0 %v1630
  %3200 = vmatpush1.bf16.msra.mxu0 %v1629
  %3201 = vmatprep.subr.bf16.mxu0 %v1632
  %3202 = vmatpush1.bf16.msra.mxu0 %v1631
  %3203 = vmatprep.subr.bf16.mxu0 %v1634
  %3204 = vmatpush1.bf16.msra.mxu0 %v1633
  %3205 = vmatprep.subr.bf16.mxu0 %v1636
  %3206 = vmatpush1.bf16.msra.mxu0 %v1635
  %3207 = vmatprep.subr.bf16.mxu0 %v1638
  %3208 = vmatpush1.bf16.msra.mxu0 %v1637
  %3209 = vmatprep.subr.bf16.mxu0 %v1640
  %3210 = vmatpush1.bf16.msra.mxu0 %v1639
  %3211 = vmatprep.mubr.bf16.mxu0 %v2254
  %3212 = vmatmul.mubr.bf16.gmra.mrb[0].mxu0 %v2253
  %v3213 = vpop.f32.mrb[0].mxu0
  %v3214 = vadd.f32 %v2941, %v3213
  %v3215 = vpop.f32.mrb[0].mxu0
  %v3216 = vadd.f32 %v2943, %v3215
  %v3217 = vpop.f32.mrb[0].mxu0
  %v3218 = vadd.f32 %v2945, %v3217
  %v3219 = vpop.f32.mrb[0].mxu0
  %v3220 = vadd.f32 %v2947, %v3219
  %3221 = vmatprep.mubr.bf16.mxu0 %v2262
  %3222 = vmatmul.mubr.bf16.gmra.mrb[0].mxu0 %v2261
  %v3223 = vpop.f32.mrb[0].mxu0
  %v3224 = vadd.f32 %v2951, %v3223
  %v3225 = vpop.f32.mrb[0].mxu0
  %v3226 = vadd.f32 %v2953, %v3225
  %v3227 = vpop.f32.mrb[0].mxu0
  %v3228 = vadd.f32 %v2955, %v3227
  %v3229 = vpop.f32.mrb[0].mxu0
  %v3230 = vadd.f32 %v2957, %v3229
  %3231 = vmatprep.mubr.bf16.mxu0 %v2270
  %3232 = vmatmul.mubr.bf16.gmra.mrb[0].mxu0 %v2269
  %v3233 = vpop.f32.mrb[0].mxu0
  %v3234 = vadd.f32 %v2961, %v3233
  %v3235 = vpop.f32.mrb[0].mxu0
  %v3236 = vadd.f32 %v2963, %v3235
  %v3237 = vpop.f32.mrb[0].mxu0
  %v3238 = vadd.f32 %v2965, %v3237
  %v3239 = vpop.f32.mrb[0].mxu0
  %v3240 = vadd.f32 %v2967, %v3239
  %3241 = vmatprep.mubr.bf16.mxu0 %v2278
  %3242 = vmatmul.mubr.bf16.gmra.mrb[0].mxu0 %v2277
  %v3243 = vpop.f32.mrb[0].mxu0
  %v3244 = vadd.f32 %v2971, %v3243
  %v3245 = vpop.f32.mrb[0].mxu0
  %v3246 = vadd.f32 %v2973, %v3245
  %v3247 = vpop.f32.mrb[0].mxu0
  %v3248 = vadd.f32 %v2975, %v3247
  %v3249 = vpop.f32.mrb[0].mxu0
  %v3250 = vadd.f32 %v2977, %v3249
  %3251 = vmatprep.mubr.bf16.mxu0 %v2286
  %3252 = vmatmul.mubr.bf16.gmra.mrb[0].mxu0 %v2285
  %v3253 = vpop.f32.mrb[0].mxu0
  %v3254 = vadd.f32 %v2981, %v3253
  %v3255 = vpop.f32.mrb[0].mxu0
  %v3256 = vadd.f32 %v2983, %v3255
  %v3257 = vpop.f32.mrb[0].mxu0
  %v3258 = vadd.f32 %v2985, %v3257
  %v3259 = vpop.f32.mrb[0].mxu0
  %v3260 = vadd.f32 %v2987, %v3259
  %3261 = vmatprep.mubr.bf16.mxu0 %v2294
  %3262 = vmatmul.mubr.bf16.gmra.mrb[0].mxu0 %v2293
  %v3263 = vpop.f32.mrb[0].mxu0
  %v3264 = vadd.f32 %v2991, %v3263
  %v3265 = vpop.f32.mrb[0].mxu0
  %v3266 = vadd.f32 %v2993, %v3265
  %v3267 = vpop.f32.mrb[0].mxu0
  %v3268 = vadd.f32 %v2995, %v3267
  %v3269 = vpop.f32.mrb[0].mxu0
  %v3270 = vadd.f32 %v2997, %v3269
  %3271 = vmatprep.mubr.bf16.mxu0 %v2302
  %3272 = vmatmul.mubr.bf16.gmra.mrb[0].mxu0 %v2301
  %v3273 = vpop.f32.mrb[0].mxu0
  %v3274 = vadd.f32 %v3001, %v3273
  %v3275 = vpop.f32.mrb[0].mxu0
  %v3276 = vadd.f32 %v3003, %v3275
  %v3277 = vpop.f32.mrb[0].mxu0
  %v3278 = vadd.f32 %v3005, %v3277
  %v3279 = vpop.f32.mrb[0].mxu0
  %v3280 = vadd.f32 %v3007, %v3279
  %3281 = vmatprep.mubr.bf16.mxu0 %v2310
  %3282 = vmatmul.mubr.bf16.gmra.mrb[0].mxu0 %v2309
  %v3283 = vpop.f32.mrb[0].mxu0
  %v3284 = vadd.f32 %v3011, %v3283
  %v3285 = vpop.f32.mrb[0].mxu0
  %v3286 = vadd.f32 %v3013, %v3285
  %v3287 = vpop.f32.mrb[0].mxu0
  %v3288 = vadd.f32 %v3015, %v3287
  %v3289 = vpop.f32.mrb[0].mxu0
  %v3290 = vadd.f32 %v3017, %v3289
  %3291 = vmatprep.mubr.bf16.mxu0 %v2318
  %3292 = vmatmul.mubr.bf16.gmra.mrb[0].mxu0 %v2317
  %v3293 = vpop.f32.mrb[0].mxu0
  %v3294 = vadd.f32 %v3021, %v3293
  %v3295 = vpop.f32.mrb[0].mxu0
  %v3296 = vadd.f32 %v3023, %v3295
  %v3297 = vpop.f32.mrb[0].mxu0
  %v3298 = vadd.f32 %v3025, %v3297
  %v3299 = vpop.f32.mrb[0].mxu0
  %v3300 = vadd.f32 %v3027, %v3299
  %3301 = vmatprep.mubr.bf16.mxu0 %v2326
  %3302 = vmatmul.mubr.bf16.gmra.mrb[0].mxu0 %v2325
  %v3303 = vpop.f32.mrb[0].mxu0
  %v3304 = vadd.f32 %v3031, %v3303
  %v3305 = vpop.f32.mrb[0].mxu0
  %v3306 = vadd.f32 %v3033, %v3305
  %v3307 = vpop.f32.mrb[0].mxu0
  %v3308 = vadd.f32 %v3035, %v3307
  %v3309 = vpop.f32.mrb[0].mxu0
  %v3310 = vadd.f32 %v3037, %v3309
  %3311 = vmatprep.mubr.bf16.mxu0 %v2334
  %3312 = vmatmul.mubr.bf16.gmra.mrb[0].mxu0 %v2333
  %v3313 = vpop.f32.mrb[0].mxu0
  %v3314 = vadd.f32 %v3041, %v3313
  %v3315 = vpop.f32.mrb[0].mxu0
  %v3316 = vadd.f32 %v3043, %v3315
  %v3317 = vpop.f32.mrb[0].mxu0
  %v3318 = vadd.f32 %v3045, %v3317
  %v3319 = vpop.f32.mrb[0].mxu0
  %v3320 = vadd.f32 %v3047, %v3319
  %3321 = vmatprep.mubr.bf16.mxu0 %v2342
  %3322 = vmatmul.mubr.bf16.gmra.mrb[0].mxu0 %v2341
  %v3323 = vpop.f32.mrb[0].mxu0
  %v3324 = vadd.f32 %v3051, %v3323
  %v3325 = vpop.f32.mrb[0].mxu0
  %v3326 = vadd.f32 %v3053, %v3325
  %v3327 = vpop.f32.mrb[0].mxu0
  %v3328 = vadd.f32 %v3055, %v3327
  %v3329 = vpop.f32.mrb[0].mxu0
  %v3330 = vadd.f32 %v3057, %v3329
  %3331 = vmatprep.mubr.bf16.mxu0 %v2350
  %3332 = vmatmul.mubr.bf16.gmra.mrb[0].mxu0 %v2349
  %v3333 = vpop.f32.mrb[0].mxu0
  %v3334 = vadd.f32 %v3061, %v3333
  %v3335 = vpop.f32.mrb[0].mxu0
  %v3336 = vadd.f32 %v3063, %v3335
  %v3337 = vpop.f32.mrb[0].mxu0
  %v3338 = vadd.f32 %v3065, %v3337
  %v3339 = vpop.f32.mrb[0].mxu0
  %v3340 = vadd.f32 %v3067, %v3339
  %3341 = vmatprep.mubr.bf16.mxu0 %v2358
  %3342 = vmatmul.mubr.bf16.gmra.mrb[0].mxu0 %v2357
  %v3343 = vpop.f32.mrb[0].mxu0
  %v3344 = vadd.f32 %v3071, %v3343
  %v3345 = vpop.f32.mrb[0].mxu0
  %v3346 = vadd.f32 %v3073, %v3345
  %v3347 = vpop.f32.mrb[0].mxu0
  %v3348 = vadd.f32 %v3075, %v3347
  %v3349 = vpop.f32.mrb[0].mxu0
  %v3350 = vadd.f32 %v3077, %v3349
  %3351 = vmatprep.mubr.bf16.mxu0 %v2366
  %3352 = vmatmul.mubr.bf16.gmra.mrb[0].mxu0 %v2365
  %v3353 = vpop.f32.mrb[0].mxu0
  %v3354 = vadd.f32 %v3081, %v3353
  %v3355 = vpop.f32.mrb[0].mxu0
  %v3356 = vadd.f32 %v3083, %v3355
  %v3357 = vpop.f32.mrb[0].mxu0
  %v3358 = vadd.f32 %v3085, %v3357
  %v3359 = vpop.f32.mrb[0].mxu0
  %v3360 = vadd.f32 %v3087, %v3359
  %3361 = vmatprep.mubr.bf16.mxu0 %v2374
  %3362 = vmatmul.mubr.bf16.gmra.mrb[0].mxu0 %v2373
  %v3363 = vpop.f32.mrb[0].mxu0
  %v3364 = vadd.f32 %v3091, %v3363
  %v3365 = vpop.f32.mrb[0].mxu0
  %v3366 = vadd.f32 %v3093, %v3365
  %v3367 = vpop.f32.mrb[0].mxu0
  %v3368 = vadd.f32 %v3095, %v3367
  %v3369 = vpop.f32.mrb[0].mxu0
  %v3370 = vadd.f32 %v3097, %v3369
  %3371 = vmatprep.mubr.bf16.mxu0 %v2382
  %3372 = vmatmul.mubr.bf16.gmra.mrb[0].mxu0 %v2381
  %v3373 = vpop.f32.mrb[0].mxu0
  %v3374 = vadd.f32 %v3101, %v3373
  %v3375 = vpop.f32.mrb[0].mxu0
  %v3376 = vadd.f32 %v3103, %v3375
  %v3377 = vpop.f32.mrb[0].mxu0
  %v3378 = vadd.f32 %v3105, %v3377
  %v3379 = vpop.f32.mrb[0].mxu0
  %v3380 = vadd.f32 %v3107, %v3379
  %3381 = vmatprep.mubr.bf16.mxu0 %v2390
  %3382 = vmatmul.mubr.bf16.gmra.mrb[0].mxu0 %v2389
  %v3383 = vpop.f32.mrb[0].mxu0
  %v3384 = vadd.f32 %v3111, %v3383
  %v3385 = vpop.f32.mrb[0].mxu0
  %v3386 = vadd.f32 %v3113, %v3385
  %v3387 = vpop.f32.mrb[0].mxu0
  %v3388 = vadd.f32 %v3115, %v3387
  %v3389 = vpop.f32.mrb[0].mxu0
  %v3390 = vadd.f32 %v3117, %v3389
  %3391 = vmatprep.mubr.bf16.mxu0 %v2398
  %3392 = vmatmul.mubr.bf16.gmra.mrb[0].mxu0 %v2397
  %v3393 = vpop.f32.mrb[0].mxu0
  %v3394 = vadd.f32 %v3121, %v3393
  %v3395 = vpop.f32.mrb[0].mxu0
  %v3396 = vadd.f32 %v3123, %v3395
  %v3397 = vpop.f32.mrb[0].mxu0
  %v3398 = vadd.f32 %v3125, %v3397
  %v3399 = vpop.f32.mrb[0].mxu0
  %v3400 = vadd.f32 %v3127, %v3399
  %3401 = vmatprep.mubr.bf16.mxu0 %v2406
  %3402 = vmatmul.mubr.bf16.gmra.mrb[0].mxu0 %v2405
  %v3403 = vpop.f32.mrb[0].mxu0
  %v3404 = vadd.f32 %v3131, %v3403
  %v3405 = vpop.f32.mrb[0].mxu0
  %v3406 = vadd.f32 %v3133, %v3405
  %v3407 = vpop.f32.mrb[0].mxu0
  %v3408 = vadd.f32 %v3135, %v3407
  %v3409 = vpop.f32.mrb[0].mxu0
  %v3410 = vadd.f32 %v3137, %v3409
  %3411 = vmatprep.mubr.bf16.mxu0 %v2414
  %3412 = vmatmul.mubr.bf16.gmra.mrb[0].mxu0 %v2413
  %v3413 = vpop.f32.mrb[0].mxu0
  %v3414 = vadd.f32 %v3141, %v3413
  %v3415 = vpop.f32.mrb[0].mxu0
  %v3416 = vadd.f32 %v3143, %v3415
  %v3417 = vpop.f32.mrb[0].mxu0
  %v3418 = vadd.f32 %v3145, %v3417
  %v3419 = vpop.f32.mrb[0].mxu0
  %v3420 = vadd.f32 %v3147, %v3419
  %3421 = vmatprep.mubr.bf16.mxu0 %v2422
  %3422 = vmatmul.mubr.bf16.gmra.mrb[0].mxu0 %v2421
  %v3423 = vpop.f32.mrb[0].mxu0
  %v3424 = vadd.f32 %v3151, %v3423
  %v3425 = vpop.f32.mrb[0].mxu0
  %v3426 = vadd.f32 %v3153, %v3425
  %v3427 = vpop.f32.mrb[0].mxu0
  %v3428 = vadd.f32 %v3155, %v3427
  %v3429 = vpop.f32.mrb[0].mxu0
  %v3430 = vadd.f32 %v3157, %v3429
  %3431 = vmatprep.mubr.bf16.mxu0 %v2430
  %3432 = vmatmul.mubr.bf16.gmra.mrb[0].mxu0 %v2429
  %v3433 = vpop.f32.mrb[0].mxu0
  %v3434 = vadd.f32 %v3161, %v3433
  %v3435 = vpop.f32.mrb[0].mxu0
  %v3436 = vadd.f32 %v3163, %v3435
  %v3437 = vpop.f32.mrb[0].mxu0
  %v3438 = vadd.f32 %v3165, %v3437
  %v3439 = vpop.f32.mrb[0].mxu0
  %v3440 = vadd.f32 %v3167, %v3439
  %3441 = vmatprep.mubr.bf16.mxu0 %v2438
  %3442 = vmatmul.mubr.bf16.gmra.mrb[0].mxu0 %v2437
  %v3443 = vpop.f32.mrb[0].mxu0
  %v3444 = vadd.f32 %v3171, %v3443
  %v3445 = vpop.f32.mrb[0].mxu0
  %v3446 = vadd.f32 %v3173, %v3445
  %v3447 = vpop.f32.mrb[0].mxu0
  %v3448 = vadd.f32 %v3175, %v3447
  %v3449 = vpop.f32.mrb[0].mxu0
  %v3450 = vadd.f32 %v3177, %v3449
  %3451 = vdwg.mxu0
  %3452 = vmatprep.subr.bf16.mxu0 %v1642
  %3453 = vmatpush1.bf16.msra.mxu0 %v1641
  %3454 = vmatprep.subr.bf16.mxu0 %v1644
  %3455 = vmatpush1.bf16.msra.mxu0 %v1643
  %3456 = vmatprep.subr.bf16.mxu0 %v1646
  %3457 = vmatpush1.bf16.msra.mxu0 %v1645
  %3458 = vmatprep.subr.bf16.mxu0 %v1648
  %3459 = vmatpush1.bf16.msra.mxu0 %v1647
  %3460 = vmatprep.subr.bf16.mxu0 %v1650
  %3461 = vmatpush1.bf16.msra.mxu0 %v1649
  %3462 = vmatprep.subr.bf16.mxu0 %v1652
  %3463 = vmatpush1.bf16.msra.mxu0 %v1651
  %3464 = vmatprep.subr.bf16.mxu0 %v1654
  %3465 = vmatpush1.bf16.msra.mxu0 %v1653
  %3466 = vmatprep.subr.bf16.mxu0 %v1656
  %3467 = vmatpush1.bf16.msra.mxu0 %v1655
  %3468 = vmatprep.subr.bf16.mxu0 %v1658
  %3469 = vmatpush1.bf16.msra.mxu0 %v1657
  %3470 = vmatprep.subr.bf16.mxu0 %v1660
  %3471 = vmatpush1.bf16.msra.mxu0 %v1659
  %3472 = vmatprep.subr.bf16.mxu0 %v1662
  %3473 = vmatpush1.bf16.msra.mxu0 %v1661
  %3474 = vmatprep.subr.bf16.mxu0 %v1664
  %3475 = vmatpush1.bf16.msra.mxu0 %v1663
  %3476 = vmatprep.subr.bf16.mxu0 %v1666
  %3477 = vmatpush1.bf16.msra.mxu0 %v1665
  %3478 = vmatprep.subr.bf16.mxu0 %v1668
  %3479 = vmatpush1.bf16.msra.mxu0 %v1667
  %3480 = vmatprep.subr.bf16.mxu0 %v1670
  %3481 = vmatpush1.bf16.msra.mxu0 %v1669
  %3482 = vmatprep.subr.bf16.mxu0 %v1672
  %3483 = vmatpush1.bf16.msra.mxu0 %v1671
  %3484 = vmatprep.mubr.bf16.mxu0 %v2256
  %3485 = vmatmul.mubr.bf16.gmra.mrb[0].mxu0 %v2255
  %v3486 = vpop.f32.mrb[0].mxu0
  %v3487 = vadd.f32 %v3214, %v3486
  %v3488 = vpop.f32.mrb[0].mxu0
  %v3489 = vadd.f32 %v3216, %v3488
  %v3490 = vpop.f32.mrb[0].mxu0
  %v3491 = vadd.f32 %v3218, %v3490
  %v3492 = vpop.f32.mrb[0].mxu0
  %v3493 = vadd.f32 %v3220, %v3492
  %3494 = vmatprep.mubr.bf16.mxu0 %v2264
  %3495 = vmatmul.mubr.bf16.gmra.mrb[0].mxu0 %v2263
  %v3496 = vpop.f32.mrb[0].mxu0
  %v3497 = vadd.f32 %v3224, %v3496
  %v3498 = vpop.f32.mrb[0].mxu0
  %v3499 = vadd.f32 %v3226, %v3498
  %v3500 = vpop.f32.mrb[0].mxu0
  %v3501 = vadd.f32 %v3228, %v3500
  %v3502 = vpop.f32.mrb[0].mxu0
  %v3503 = vadd.f32 %v3230, %v3502
  %3504 = vmatprep.mubr.bf16.mxu0 %v2272
  %3505 = vmatmul.mubr.bf16.gmra.mrb[0].mxu0 %v2271
  %v3506 = vpop.f32.mrb[0].mxu0
  %v3507 = vadd.f32 %v3234, %v3506
  %v3508 = vpop.f32.mrb[0].mxu0
  %v3509 = vadd.f32 %v3236, %v3508
  %v3510 = vpop.f32.mrb[0].mxu0
  %v3511 = vadd.f32 %v3238, %v3510
  %v3512 = vpop.f32.mrb[0].mxu0
  %v3513 = vadd.f32 %v3240, %v3512
  %3514 = vmatprep.mubr.bf16.mxu0 %v2280
  %3515 = vmatmul.mubr.bf16.gmra.mrb[0].mxu0 %v2279
  %v3516 = vpop.f32.mrb[0].mxu0
  %v3517 = vadd.f32 %v3244, %v3516
  %v3518 = vpop.f32.mrb[0].mxu0
  %v3519 = vadd.f32 %v3246, %v3518
  %v3520 = vpop.f32.mrb[0].mxu0
  %v3521 = vadd.f32 %v3248, %v3520
  %v3522 = vpop.f32.mrb[0].mxu0
  %v3523 = vadd.f32 %v3250, %v3522
  %3524 = vmatprep.mubr.bf16.mxu0 %v2288
  %3525 = vmatmul.mubr.bf16.gmra.mrb[0].mxu0 %v2287
  %v3526 = vpop.f32.mrb[0].mxu0
  %v3527 = vadd.f32 %v3254, %v3526
  %v3528 = vpop.f32.mrb[0].mxu0
  %v3529 = vadd.f32 %v3256, %v3528
  %v3530 = vpop.f32.mrb[0].mxu0
  %v3531 = vadd.f32 %v3258, %v3530
  %v3532 = vpop.f32.mrb[0].mxu0
  %v3533 = vadd.f32 %v3260, %v3532
  %3534 = vmatprep.mubr.bf16.mxu0 %v2296
  %3535 = vmatmul.mubr.bf16.gmra.mrb[0].mxu0 %v2295
  %v3536 = vpop.f32.mrb[0].mxu0
  %v3537 = vadd.f32 %v3264, %v3536
  %v3538 = vpop.f32.mrb[0].mxu0
  %v3539 = vadd.f32 %v3266, %v3538
  %v3540 = vpop.f32.mrb[0].mxu0
  %v3541 = vadd.f32 %v3268, %v3540
  %v3542 = vpop.f32.mrb[0].mxu0
  %v3543 = vadd.f32 %v3270, %v3542
  %3544 = vmatprep.mubr.bf16.mxu0 %v2304
  %3545 = vmatmul.mubr.bf16.gmra.mrb[0].mxu0 %v2303
  %v3546 = vpop.f32.mrb[0].mxu0
  %v3547 = vadd.f32 %v3274, %v3546
  %v3548 = vpop.f32.mrb[0].mxu0
  %v3549 = vadd.f32 %v3276, %v3548
  %v3550 = vpop.f32.mrb[0].mxu0
  %v3551 = vadd.f32 %v3278, %v3550
  %v3552 = vpop.f32.mrb[0].mxu0
  %v3553 = vadd.f32 %v3280, %v3552
  %3554 = vmatprep.mubr.bf16.mxu0 %v2312
  %3555 = vmatmul.mubr.bf16.gmra.mrb[0].mxu0 %v2311
  %v3556 = vpop.f32.mrb[0].mxu0
  %v3557 = vadd.f32 %v3284, %v3556
  %v3558 = vpop.f32.mrb[0].mxu0
  %v3559 = vadd.f32 %v3286, %v3558
  %v3560 = vpop.f32.mrb[0].mxu0
  %v3561 = vadd.f32 %v3288, %v3560
  %v3562 = vpop.f32.mrb[0].mxu0
  %v3563 = vadd.f32 %v3290, %v3562
  %3564 = vmatprep.mubr.bf16.mxu0 %v2320
  %3565 = vmatmul.mubr.bf16.gmra.mrb[0].mxu0 %v2319
  %v3566 = vpop.f32.mrb[0].mxu0
  %v3567 = vadd.f32 %v3294, %v3566
  %v3568 = vpop.f32.mrb[0].mxu0
  %v3569 = vadd.f32 %v3296, %v3568
  %v3570 = vpop.f32.mrb[0].mxu0
  %v3571 = vadd.f32 %v3298, %v3570
  %v3572 = vpop.f32.mrb[0].mxu0
  %v3573 = vadd.f32 %v3300, %v3572
  %3574 = vmatprep.mubr.bf16.mxu0 %v2328
  %3575 = vmatmul.mubr.bf16.gmra.mrb[0].mxu0 %v2327
  %v3576 = vpop.f32.mrb[0].mxu0
  %v3577 = vadd.f32 %v3304, %v3576
  %v3578 = vpop.f32.mrb[0].mxu0
  %v3579 = vadd.f32 %v3306, %v3578
  %v3580 = vpop.f32.mrb[0].mxu0
  %v3581 = vadd.f32 %v3308, %v3580
  %v3582 = vpop.f32.mrb[0].mxu0
  %v3583 = vadd.f32 %v3310, %v3582
  %3584 = vmatprep.mubr.bf16.mxu0 %v2336
  %3585 = vmatmul.mubr.bf16.gmra.mrb[0].mxu0 %v2335
  %v3586 = vpop.f32.mrb[0].mxu0
  %v3587 = vadd.f32 %v3314, %v3586
  %v3588 = vpop.f32.mrb[0].mxu0
  %v3589 = vadd.f32 %v3316, %v3588
  %v3590 = vpop.f32.mrb[0].mxu0
  %v3591 = vadd.f32 %v3318, %v3590
  %v3592 = vpop.f32.mrb[0].mxu0
  %v3593 = vadd.f32 %v3320, %v3592
  %3594 = vmatprep.mubr.bf16.mxu0 %v2344
  %3595 = vmatmul.mubr.bf16.gmra.mrb[0].mxu0 %v2343
  %v3596 = vpop.f32.mrb[0].mxu0
  %v3597 = vadd.f32 %v3324, %v3596
  %v3598 = vpop.f32.mrb[0].mxu0
  %v3599 = vadd.f32 %v3326, %v3598
  %v3600 = vpop.f32.mrb[0].mxu0
  %v3601 = vadd.f32 %v3328, %v3600
  %v3602 = vpop.f32.mrb[0].mxu0
  %v3603 = vadd.f32 %v3330, %v3602
  %3604 = vmatprep.mubr.bf16.mxu0 %v2352
  %3605 = vmatmul.mubr.bf16.gmra.mrb[0].mxu0 %v2351
  %v3606 = vpop.f32.mrb[0].mxu0
  %v3607 = vadd.f32 %v3334, %v3606
  %v3608 = vpop.f32.mrb[0].mxu0
  %v3609 = vadd.f32 %v3336, %v3608
  %v3610 = vpop.f32.mrb[0].mxu0
  %v3611 = vadd.f32 %v3338, %v3610
  %v3612 = vpop.f32.mrb[0].mxu0
  %v3613 = vadd.f32 %v3340, %v3612
  %3614 = vmatprep.mubr.bf16.mxu0 %v2360
  %3615 = vmatmul.mubr.bf16.gmra.mrb[0].mxu0 %v2359
  %v3616 = vpop.f32.mrb[0].mxu0
  %v3617 = vadd.f32 %v3344, %v3616
  %v3618 = vpop.f32.mrb[0].mxu0
  %v3619 = vadd.f32 %v3346, %v3618
  %v3620 = vpop.f32.mrb[0].mxu0
  %v3621 = vadd.f32 %v3348, %v3620
  %v3622 = vpop.f32.mrb[0].mxu0
  %v3623 = vadd.f32 %v3350, %v3622
  %3624 = vmatprep.mubr.bf16.mxu0 %v2368
  %3625 = vmatmul.mubr.bf16.gmra.mrb[0].mxu0 %v2367
  %v3626 = vpop.f32.mrb[0].mxu0
  %v3627 = vadd.f32 %v3354, %v3626
  %v3628 = vpop.f32.mrb[0].mxu0
  %v3629 = vadd.f32 %v3356, %v3628
  %v3630 = vpop.f32.mrb[0].mxu0
  %v3631 = vadd.f32 %v3358, %v3630
  %v3632 = vpop.f32.mrb[0].mxu0
  %v3633 = vadd.f32 %v3360, %v3632
  %3634 = vmatprep.mubr.bf16.mxu0 %v2376
  %3635 = vmatmul.mubr.bf16.gmra.mrb[0].mxu0 %v2375
  %v3636 = vpop.f32.mrb[0].mxu0
  %v3637 = vadd.f32 %v3364, %v3636
  %v3638 = vpop.f32.mrb[0].mxu0
  %v3639 = vadd.f32 %v3366, %v3638
  %v3640 = vpop.f32.mrb[0].mxu0
  %v3641 = vadd.f32 %v3368, %v3640
  %v3642 = vpop.f32.mrb[0].mxu0
  %v3643 = vadd.f32 %v3370, %v3642
  %3644 = vmatprep.mubr.bf16.mxu0 %v2384
  %3645 = vmatmul.mubr.bf16.gmra.mrb[0].mxu0 %v2383
  %v3646 = vpop.f32.mrb[0].mxu0
  %v3647 = vadd.f32 %v3374, %v3646
  %v3648 = vpop.f32.mrb[0].mxu0
  %v3649 = vadd.f32 %v3376, %v3648
  %v3650 = vpop.f32.mrb[0].mxu0
  %v3651 = vadd.f32 %v3378, %v3650
  %v3652 = vpop.f32.mrb[0].mxu0
  %v3653 = vadd.f32 %v3380, %v3652
  %3654 = vmatprep.mubr.bf16.mxu0 %v2392
  %3655 = vmatmul.mubr.bf16.gmra.mrb[0].mxu0 %v2391
  %v3656 = vpop.f32.mrb[0].mxu0
  %v3657 = vadd.f32 %v3384, %v3656
  %v3658 = vpop.f32.mrb[0].mxu0
  %v3659 = vadd.f32 %v3386, %v3658
  %v3660 = vpop.f32.mrb[0].mxu0
  %v3661 = vadd.f32 %v3388, %v3660
  %v3662 = vpop.f32.mrb[0].mxu0
  %v3663 = vadd.f32 %v3390, %v3662
  %3664 = vmatprep.mubr.bf16.mxu0 %v2400
  %3665 = vmatmul.mubr.bf16.gmra.mrb[0].mxu0 %v2399
  %v3666 = vpop.f32.mrb[0].mxu0
  %v3667 = vadd.f32 %v3394, %v3666
  %v3668 = vpop.f32.mrb[0].mxu0
  %v3669 = vadd.f32 %v3396, %v3668
  %v3670 = vpop.f32.mrb[0].mxu0
  %v3671 = vadd.f32 %v3398, %v3670
  %v3672 = vpop.f32.mrb[0].mxu0
  %v3673 = vadd.f32 %v3400, %v3672
  %3674 = vmatprep.mubr.bf16.mxu0 %v2408
  %3675 = vmatmul.mubr.bf16.gmra.mrb[0].mxu0 %v2407
  %v3676 = vpop.f32.mrb[0].mxu0
  %v3677 = vadd.f32 %v3404, %v3676
  %v3678 = vpop.f32.mrb[0].mxu0
  %v3679 = vadd.f32 %v3406, %v3678
  %v3680 = vpop.f32.mrb[0].mxu0
  %v3681 = vadd.f32 %v3408, %v3680
  %v3682 = vpop.f32.mrb[0].mxu0
  %v3683 = vadd.f32 %v3410, %v3682
  %3684 = vmatprep.mubr.bf16.mxu0 %v2416
  %3685 = vmatmul.mubr.bf16.gmra.mrb[0].mxu0 %v2415
  %v3686 = vpop.f32.mrb[0].mxu0
  %v3687 = vadd.f32 %v3414, %v3686
  %v3688 = vpop.f32.mrb[0].mxu0
  %v3689 = vadd.f32 %v3416, %v3688
  %v3690 = vpop.f32.mrb[0].mxu0
  %v3691 = vadd.f32 %v3418, %v3690
  %v3692 = vpop.f32.mrb[0].mxu0
  %v3693 = vadd.f32 %v3420, %v3692
  %3694 = vmatprep.mubr.bf16.mxu0 %v2424
  %3695 = vmatmul.mubr.bf16.gmra.mrb[0].mxu0 %v2423
  %v3696 = vpop.f32.mrb[0].mxu0
  %v3697 = vadd.f32 %v3424, %v3696
  %v3698 = vpop.f32.mrb[0].mxu0
  %v3699 = vadd.f32 %v3426, %v3698
  %v3700 = vpop.f32.mrb[0].mxu0
  %v3701 = vadd.f32 %v3428, %v3700
  %v3702 = vpop.f32.mrb[0].mxu0
  %v3703 = vadd.f32 %v3430, %v3702
  %3704 = vmatprep.mubr.bf16.mxu0 %v2432
  %3705 = vmatmul.mubr.bf16.gmra.mrb[0].mxu0 %v2431
  %v3706 = vpop.f32.mrb[0].mxu0
  %v3707 = vadd.f32 %v3434, %v3706
  %v3708 = vpop.f32.mrb[0].mxu0
  %v3709 = vadd.f32 %v3436, %v3708
  %v3710 = vpop.f32.mrb[0].mxu0
  %v3711 = vadd.f32 %v3438, %v3710
  %v3712 = vpop.f32.mrb[0].mxu0
  %v3713 = vadd.f32 %v3440, %v3712
  %3714 = vmatprep.mubr.bf16.mxu0 %v2440
  %3715 = vmatmul.mubr.bf16.gmra.mrb[0].mxu0 %v2439
  %v3716 = vpop.f32.mrb[0].mxu0
  %v3717 = vadd.f32 %v3444, %v3716
  %v3718 = vpop.f32.mrb[0].mxu0
  %v3719 = vadd.f32 %v3446, %v3718
  %v3720 = vpop.f32.mrb[0].mxu0
  %v3721 = vadd.f32 %v3448, %v3720
  %v3722 = vpop.f32.mrb[0].mxu0
  %v3723 = vadd.f32 %v3450, %v3722
  %3724 = vdwg.mxu0
  %3725 = vst [vmem:[%s3] sm:$0xff] %v3487
  %3726 = vst [vmem:[%s3 + $0x8] sm:$0xff] %v3489
  %3727 = vst [vmem:[%s3 + $0x10] sm:$0xff] %v3491
  %3728 = vst [vmem:[%s3 + $0x18] sm:$0xff] %v3493
  %3729 = vst [vmem:[%s3 + $0x20] sm:$0xff] %v3497
  %3730 = vst [vmem:[%s3 + $0x28] sm:$0xff] %v3499
  %3731 = vst [vmem:[%s3 + $0x30] sm:$0xff] %v3501
  %3732 = vst [vmem:[%s3 + $0x38] sm:$0xff] %v3503
  %3733 = vst [vmem:[%s3 + $0x40] sm:$0xff] %v3507
  %3734 = vst [vmem:[%s3 + $0x48] sm:$0xff] %v3509
  %3735 = vst [vmem:[%s3 + $0x50] sm:$0xff] %v3511
  %3736 = vst [vmem:[%s3 + $0x58] sm:$0xff] %v3513
  %3737 = vst [vmem:[%s3 + $0x60] sm:$0xff] %v3517
  %3738 = vst [vmem:[%s3 + $0x68] sm:$0xff] %v3519
  %3739 = vst [vmem:[%s3 + $0x70] sm:$0xff] %v3521
  %3740 = vst [vmem:[%s3 + $0x78] sm:$0xff] %v3523
  %3741 = vst [vmem:[%s3 + $0x80] sm:$0xff] %v3527
  %3742 = vst [vmem:[%s3 + $0x88] sm:$0xff] %v3529
  %3743 = vst [vmem:[%s3 + $0x90] sm:$0xff] %v3531
  %3744 = vst [vmem:[%s3 + $0x98] sm:$0xff] %v3533
  %3745 = vst [vmem:[%s3 + $0xa0] sm:$0xff] %v3537
  %3746 = vst [vmem:[%s3 + $0xa8] sm:$0xff] %v3539
  %3747 = vst [vmem:[%s3 + $0xb0] sm:$0xff] %v3541
  %3748 = vst [vmem:[%s3 + $0xb8] sm:$0xff] %v3543
  %3749 = vst [vmem:[%s3 + $0xc0] sm:$0xff] %v3547
  %3750 = vst [vmem:[%s3 + $0xc8] sm:$0xff] %v3549
  %3751 = vst [vmem:[%s3 + $0xd0] sm:$0xff] %v3551
  %3752 = vst [vmem:[%s3 + $0xd8] sm:$0xff] %v3553
  %3753 = vst [vmem:[%s3 + $0xe0] sm:$0xff] %v3557
  %3754 = vst [vmem:[%s3 + $0xe8] sm:$0xff] %v3559
  %3755 = vst [vmem:[%s3 + $0xf0] sm:$0xff] %v3561
  %3756 = vst [vmem:[%s3 + $0xf8] sm:$0xff] %v3563
  %3757 = vst [vmem:[%s3 + $0x100] sm:$0xff] %v3567
  %3758 = vst [vmem:[%s3 + $0x108] sm:$0xff] %v3569
  %3759 = vst [vmem:[%s3 + $0x110] sm:$0xff] %v3571
  %3760 = vst [vmem:[%s3 + $0x118] sm:$0xff] %v3573
  %3761 = vst [vmem:[%s3 + $0x120] sm:$0xff] %v3577
  %3762 = vst [vmem:[%s3 + $0x128] sm:$0xff] %v3579
  %3763 = vst [vmem:[%s3 + $0x130] sm:$0xff] %v3581
  %3764 = vst [vmem:[%s3 + $0x138] sm:$0xff] %v3583
  %3765 = vst [vmem:[%s3 + $0x140] sm:$0xff] %v3587
  %3766 = vst [vmem:[%s3 + $0x148] sm:$0xff] %v3589
  %3767 = vst [vmem:[%s3 + $0x150] sm:$0xff] %v3591
  %3768 = vst [vmem:[%s3 + $0x158] sm:$0xff] %v3593
  %3769 = vst [vmem:[%s3 + $0x160] sm:$0xff] %v3597
  %3770 = vst [vmem:[%s3 + $0x168] sm:$0xff] %v3599
  %3771 = vst [vmem:[%s3 + $0x170] sm:$0xff] %v3601
  %3772 = vst [vmem:[%s3 + $0x178] sm:$0xff] %v3603
  %3773 = vst [vmem:[%s3 + $0x180] sm:$0xff] %v3607
  %3774 = vst [vmem:[%s3 + $0x188] sm:$0xff] %v3609
  %3775 = vst [vmem:[%s3 + $0x190] sm:$0xff] %v3611
  %3776 = vst [vmem:[%s3 + $0x198] sm:$0xff] %v3613
  %3777 = vst [vmem:[%s3 + $0x1a0] sm:$0xff] %v3617
  %3778 = vst [vmem:[%s3 + $0x1a8] sm:$0xff] %v3619
  %3779 = vst [vmem:[%s3 + $0x1b0] sm:$0xff] %v3621
  %3780 = vst [vmem:[%s3 + $0x1b8] sm:$0xff] %v3623
  %3781 = vst [vmem:[%s3 + $0x1c0] sm:$0xff] %v3627
  %3782 = vst [vmem:[%s3 + $0x1c8] sm:$0xff] %v3629
  %3783 = vst [vmem:[%s3 + $0x1d0] sm:$0xff] %v3631
  %3784 = vst [vmem:[%s3 + $0x1d8] sm:$0xff] %v3633
  %3785 = vst [vmem:[%s3 + $0x1e0] sm:$0xff] %v3637
  %3786 = vst [vmem:[%s3 + $0x1e8] sm:$0xff] %v3639
  %3787 = vst [vmem:[%s3 + $0x1f0] sm:$0xff] %v3641
  %3788 = vst [vmem:[%s3 + $0x1f8] sm:$0xff] %v3643
  %3789 = vst [vmem:[%s3 + $0x200] sm:$0xff] %v3647
  %3790 = vst [vmem:[%s3 + $0x208] sm:$0xff] %v3649
  %3791 = vst [vmem:[%s3 + $0x210] sm:$0xff] %v3651
  %3792 = vst [vmem:[%s3 + $0x218] sm:$0xff] %v3653
  %3793 = vst [vmem:[%s3 + $0x220] sm:$0xff] %v3657
  %3794 = vst [vmem:[%s3 + $0x228] sm:$0xff] %v3659
  %3795 = vst [vmem:[%s3 + $0x230] sm:$0xff] %v3661
  %3796 = vst [vmem:[%s3 + $0x238] sm:$0xff] %v3663
  %3797 = vst [vmem:[%s3 + $0x240] sm:$0xff] %v3667
  %3798 = vst [vmem:[%s3 + $0x248] sm:$0xff] %v3669
  %3799 = vst [vmem:[%s3 + $0x250] sm:$0xff] %v3671
  %3800 = vst [vmem:[%s3 + $0x258] sm:$0xff] %v3673
  %3801 = vst [vmem:[%s3 + $0x260] sm:$0xff] %v3677
  %3802 = vst [vmem:[%s3 + $0x268] sm:$0xff] %v3679
  %3803 = vst [vmem:[%s3 + $0x270] sm:$0xff] %v3681
  %3804 = vst [vmem:[%s3 + $0x278] sm:$0xff] %v3683
  %3805 = vst [vmem:[%s3 + $0x280] sm:$0xff] %v3687
  %3806 = vst [vmem:[%s3 + $0x288] sm:$0xff] %v3689
  %3807 = vst [vmem:[%s3 + $0x290] sm:$0xff] %v3691
  %3808 = vst [vmem:[%s3 + $0x298] sm:$0xff] %v3693
  %3809 = vst [vmem:[%s3 + $0x2a0] sm:$0xff] %v3697
  %3810 = vst [vmem:[%s3 + $0x2a8] sm:$0xff] %v3699
  %3811 = vst [vmem:[%s3 + $0x2b0] sm:$0xff] %v3701
  %3812 = vst [vmem:[%s3 + $0x2b8] sm:$0xff] %v3703
  %3813 = vst [vmem:[%s3 + $0x2c0] sm:$0xff] %v3707
  %3814 = vst [vmem:[%s3 + $0x2c8] sm:$0xff] %v3709
  %3815 = vst [vmem:[%s3 + $0x2d0] sm:$0xff] %v3711
  %3816 = vst [vmem:[%s3 + $0x2d8] sm:$0xff] %v3713
  %3817 = vst [vmem:[%s3 + $0x2e0] sm:$0xff] %v3717
  %3818 = vst [vmem:[%s3 + $0x2e8] sm:$0xff] %v3719
  %3819 = vst [vmem:[%s3 + $0x2f0] sm:$0xff] %v3721
  %3820 = vst [vmem:[%s3 + $0x2f8] sm:$0xff] %v3723
  // Predicated region
  $region14: #{prenet_forward.1} parent=0 // pred_check
    _
  $region15: #{prenet_forward.1} parent=0 // pred_check_branch
    %3822 = sbr.rel (0) target = $region17
  $region16: #{prenet_forward.1} parent=0 // pred_region
    _
  $region17: #{prenet_forward.1} parent=0 // pred_fallthru
    _
  // Predicated region
  $region18: #{prenet_forward.1} parent=0 // pred_check
    _
  $region19: #{prenet_forward.1} parent=0 // pred_check_branch
    %3824 = sbr.rel (0) target = $region21
  $region20: #{prenet_forward.1} parent=0 // pred_region
    _
  $region21: #{prenet_forward.1} parent=0 // pred_fallthru
    _

</llo_original>
